<compile_context>
chip_gen: v7x
topology: tpu7x:2x2x1
jax: 0.10.0
libtpu: 0.0.40
codegen_flags: <defaults>
</compile_context>

<pallas_src>
import math

import jax
import jax.numpy as jnp
from jax import lax
from jax.experimental import pallas as pl
from jax.experimental.pallas import tpu as pltpu

# ---- model / problem sizes (small, consistent with the module) ----
B, S, D = 2, 8, 32          # batch, seq, d_model  (layer.size == D)
H = 4                       # attention heads
DK = D // H                 # per-head dim
DFF = 64                    # feed-forward hidden dim
NLAYERS = 2                 # N encoder layers
EPS = 1e-6                  # LayerNorm eps


def encoder_kernel(x_ref, mask_ref,
                   wqkv_ref, bqkv_ref, wo_ref, bo_ref,
                   ln1g_ref, ln1b_ref, ln2g_ref, ln2b_ref,
                   w1_ref, b1_ref, w2_ref, b2_ref,
                   lnfg_ref, lnfb_ref,
                   out_ref):
    """Whole encoder stack in ONE invocation (no grid); layers statically unrolled."""
    x2d = x_ref[...]                                     # (B*S, D) f32, lives in vregs

    # Additive attention bias, computed + broadcast ONCE (constant across layers and
    # heads).  masked key -> logit - 1e9; post-softmax this matches
    # masked_fill(-1e9): no query row is fully masked and exp(-1e9 + O(1))
    # underflows to exactly 0.
    bias = jnp.broadcast_to((1.0 - mask_ref[...]) * (-1e9), (B, S, S))   # hoisted

    def layer_norm(v, g, b):
        # Matches the PyTorch LayerNorm: torch.std -> unbiased (n-1) variance.
        mean = jnp.mean(v, axis=-1, keepdims=True)
        var = jnp.sum((v - mean) ** 2, axis=-1, keepdims=True) * (1.0 / (D - 1))
        return g * ((v - mean) * lax.rsqrt(var + EPS)) + b   # rsqrt -> EUP slot

    scale = 1.0 / math.sqrt(DK)

    for l in range(NLAYERS):                             # static unroll; static weight indexing
        # ---------------- sublayer 0: x + SelfAttn(LN(x)) ----------------
        xn = layer_norm(x2d, ln1g_ref[l], ln1b_ref[l])   # (B*S, D)
        # Fused Q|K|V projection: one (B*S,D) x (D,3D) MXU matmul instead of three.
        qkv = jnp.dot(xn, wqkv_ref[l],
                      preferred_element_type=jnp.float32) + bqkv_ref[l]   # (B*S, 3D)

        head_outs = []
        for h in range(H):                               # H=4 static unroll
            qh = qkv[:, h * DK:(h + 1) * DK].reshape(B, S, DK)
            kh = qkv[:, D + h * DK:D + (h + 1) * DK].reshape(B, S, DK)
            vh = qkv[:, 2 * D + h * DK:2 * D + (h + 1) * DK].reshape(B, S, DK)
            s = jnp.einsum('bqd,bkd->bqk', qh, kh,
                           preferred_element_type=jnp.float32) * scale    # (B, S, S)
            s = s + bias                                 # hoisted additive mask bias
            m = jnp.max(s, axis=-1, keepdims=True)
            p = jnp.exp(s - m)
            denom = jnp.sum(p, axis=-1, keepdims=True)
            # EUP approx reciprocal + one Newton step (keeps f32-accurate numerics)
            # instead of an elementwise divide of the full (B,S,S) block.
            inv = pl.reciprocal(denom, approx=True)
            inv = inv * (2.0 - denom * inv)
            p = p * inv
            head_outs.append(jnp.einsum('bqk,bkd->bqd', p, vh,
                                        preferred_element_type=jnp.float32))
        attn = jnp.concatenate(head_outs, axis=-1).reshape(B * S, D)
        attn = jnp.dot(attn, wo_ref[l],
                       preferred_element_type=jnp.float32) + bo_ref[l]
        x2d = x2d + attn

        # ---------------- sublayer 1: x + FFN(LN(x)) ----------------
        xn2 = layer_norm(x2d, ln2g_ref[l], ln2b_ref[l])
        h1 = jnp.maximum(jnp.dot(xn2, w1_ref[l],
                                 preferred_element_type=jnp.float32) + b1_ref[l], 0.0)
        x2d = x2d + jnp.dot(h1, w2_ref[l],
                            preferred_element_type=jnp.float32) + b2_ref[l]

    # Final LayerNorm (Encoder.norm), computed straight from registers; single store.
    out_ref[...] = layer_norm(x2d, lnfg_ref[...], lnfb_ref[...])


@jax.jit
def encoder_forward(x, mask, P):
    # Fuse Q|K|V weights/biases once in the wrapper (weight prep, not activation work).
    wqkv = jnp.concatenate([P["wq"], P["wk"], P["wv"]], axis=-1)   # (L, D, 3D)
    bqkv = jnp.concatenate([P["bq"], P["bk"], P["bv"]], axis=-1)   # (L, 1, 3D)

    x2d = x.reshape(B * S, D)    # 2D activations at the boundary; no in-kernel reshapes

    def vmem():
        return pl.BlockSpec(memory_space=pltpu.MemorySpace.VMEM)

    n_inputs = 16
    out2d = pl.pallas_call(
        encoder_kernel,
        out_shape=jax.ShapeDtypeStruct((B * S, D), jnp.float32),
        in_specs=[vmem() for _ in range(n_inputs)],
        out_specs=vmem(),
    )(x2d, mask, wqkv, bqkv, P["wo"], P["bo"],
      P["ln1g"], P["ln1b"], P["ln2g"], P["ln2b"],
      P["w1"], P["b1"], P["w2"], P["b2"],
      P["lnfg"], P["lnfb"])
    return out2d.reshape(B, S, D)


def ref_forward(x, mask, P):
    """Pure-JAX reference mirroring the PyTorch semantics."""
    def ln(v, g, b):
        m = v.mean(-1, keepdims=True)
        var = ((v - m) ** 2).sum(-1, keepdims=True) / (D - 1)
        return g * (v - m) / jnp.sqrt(var + EPS) + b

    for l in range(NLAYERS):
        xn = ln(x, P["ln1g"][l, 0], P["ln1b"][l, 0])
        q = xn @ P["wq"][l] + P["bq"][l, 0]
        k = xn @ P["wk"][l] + P["bk"][l, 0]
        v = xn @ P["wv"][l] + P["bv"][l, 0]
        qh = q.reshape(B, S, H, DK).transpose(0, 2, 1, 3)
        kh = k.reshape(B, S, H, DK).transpose(0, 2, 1, 3)
        vh = v.reshape(B, S, H, DK).transpose(0, 2, 1, 3)
        s = jnp.einsum("bhqd,bhkd->bhqk", qh, kh) / math.sqrt(DK)
        s = jnp.where(mask[:, None, :, :] == 0.0, -1e9, s)
        p = jax.nn.softmax(s, axis=-1)
        a = jnp.einsum("bhqk,bhkd->bhqd", p, vh).transpose(0, 2, 1, 3)
        a = a.reshape(B, S, D) @ P["wo"][l] + P["bo"][l, 0]
        x = x + a
        xn2 = ln(x, P["ln2g"][l, 0], P["ln2b"][l, 0])
        h1 = jax.nn.relu(xn2 @ P["w1"][l] + P["b1"][l, 0])
        x = x + h1 @ P["w2"][l] + P["b2"][l, 0]
    return ln(x, P["lnfg"][0], P["lnfb"][0])


def init_params(key):
    ks = jax.random.split(key, 8)
    scale = 0.1
    P = {
        "wq": scale * jax.random.normal(ks[0], (NLAYERS, D, D), jnp.float32),
        "wk": scale * jax.random.normal(ks[1], (NLAYERS, D, D), jnp.float32),
        "wv": scale * jax.random.normal(ks[2], (NLAYERS, D, D), jnp.float32),
        "wo": scale * jax.random.normal(ks[3], (NLAYERS, D, D), jnp.float32),
        "bq": scale * jax.random.normal(ks[4], (NLAYERS, 1, D), jnp.float32),
        "bk": jnp.zeros((NLAYERS, 1, D), jnp.float32),
        "bv": jnp.zeros((NLAYERS, 1, D), jnp.float32),
        "bo": jnp.zeros((NLAYERS, 1, D), jnp.float32),
        "ln1g": jnp.ones((NLAYERS, 1, D), jnp.float32),
        "ln1b": jnp.zeros((NLAYERS, 1, D), jnp.float32),
        "ln2g": jnp.ones((NLAYERS, 1, D), jnp.float32),
        "ln2b": jnp.zeros((NLAYERS, 1, D), jnp.float32),
        "w1": scale * jax.random.normal(ks[5], (NLAYERS, D, DFF), jnp.float32),
        "b1": scale * jax.random.normal(ks[6], (NLAYERS, 1, DFF), jnp.float32),
        "w2": scale * jax.random.normal(ks[7], (NLAYERS, DFF, D), jnp.float32),
        "b2": jnp.zeros((NLAYERS, 1, D), jnp.float32),
        "lnfg": jnp.ones((1, D), jnp.float32),
        "lnfb": jnp.zeros((1, D), jnp.float32),
    }
    return P


if __name__ == "__main__":
    key = jax.random.PRNGKey(0)
    kx, kp = jax.random.split(key)

    x = jax.random.normal(kx, (B, S, D), jnp.float32)
    # mask: sequence lengths [8, 6] -> (B, 1, S), 1.0 = keep
    lengths = jnp.array([8, 6], jnp.int32)
    mask = (jnp.arange(S)[None, :] < lengths[:, None]).astype(jnp.float32)
    mask = mask[:, None, :]                                     # (B, 1, S)

    params = init_params(kp)

    out = jax.block_until_ready(encoder_forward(x, mask, params))
    ref = jax.block_until_ready(ref_forward(x, mask, params))

    assert out.shape == (B, S, D)
    assert jnp.max(jnp.abs(out - ref)) < 2e-4, "mismatch vs pure-JAX reference"
    print("KERNEL_OK")
</pallas_src>

<mosaic_0001>
module attributes {stable_mosaic.version = 11 : i64} {
  func.func @encoder_kernel(%arg0: memref<16x32xf32, #tpu.memory_space<vmem>>, %arg1: memref<2x1x8xf32, #tpu.memory_space<vmem>>, %arg2: memref<2x32x96xf32, #tpu.memory_space<vmem>>, %arg3: memref<2x1x96xf32, #tpu.memory_space<vmem>>, %arg4: memref<2x32x32xf32, #tpu.memory_space<vmem>>, %arg5: memref<2x1x32xf32, #tpu.memory_space<vmem>>, %arg6: memref<2x1x32xf32, #tpu.memory_space<vmem>>, %arg7: memref<2x1x32xf32, #tpu.memory_space<vmem>>, %arg8: memref<2x1x32xf32, #tpu.memory_space<vmem>>, %arg9: memref<2x1x32xf32, #tpu.memory_space<vmem>>, %arg10: memref<2x32x64xf32, #tpu.memory_space<vmem>>, %arg11: memref<2x1x64xf32, #tpu.memory_space<vmem>>, %arg12: memref<2x64x32xf32, #tpu.memory_space<vmem>>, %arg13: memref<2x1x32xf32, #tpu.memory_space<vmem>>, %arg14: memref<1x32xf32, #tpu.memory_space<vmem>>, %arg15: memref<1x32xf32, #tpu.memory_space<vmem>>, %arg16: memref<16x32xf32, #tpu.memory_space<vmem>>) attributes {dimension_semantics = [], scalar_prefetch = 0 : i64, scratch_operands = 0 : i64, tpu.core_type = #tpu.core_type<tc>} {
    %c0 = arith.constant 0 : index
    %c0_0 = arith.constant 0 : index
    %0 = vector.load %arg0[%c0, %c0_0] : memref<16x32xf32, #tpu.memory_space<vmem>>, vector<16x32xf32>
    %c0_1 = arith.constant 0 : index
    %c0_2 = arith.constant 0 : index
    %c0_3 = arith.constant 0 : index
    %1 = vector.load %arg1[%c0_1, %c0_2, %c0_3] : memref<2x1x8xf32, #tpu.memory_space<vmem>>, vector<2x1x8xf32>
    %cst = arith.constant 1.000000e+00 : f32
    %2 = vector.broadcast %cst : f32 to vector<2x1x8xf32>
    %3 = arith.subf %2, %1 : vector<2x1x8xf32>
    %cst_4 = arith.constant -1.000000e+09 : f32
    %4 = vector.broadcast %cst_4 : f32 to vector<2x1x8xf32>
    %5 = arith.mulf %3, %4 : vector<2x1x8xf32>
    %6 = vector.shape_cast %5 : vector<2x1x8xf32> to vector<2x1x8xf32>
    %7 = vector.broadcast %6 : vector<2x1x8xf32> to vector<2x8x8xf32>
    %c0_5 = arith.constant 0 : index
    %c0_6 = arith.constant 0 : index
    %c0_7 = arith.constant 0 : index
    %8 = vector.load %arg6[%c0_5, %c0_6, %c0_7] : memref<2x1x32xf32, #tpu.memory_space<vmem>>, vector<1x1x32xf32>
    %9 = vector.shape_cast %8 : vector<1x1x32xf32> to vector<1x32xf32>
    %c0_8 = arith.constant 0 : index
    %c0_9 = arith.constant 0 : index
    %c0_10 = arith.constant 0 : index
    %10 = vector.load %arg7[%c0_8, %c0_9, %c0_10] : memref<2x1x32xf32, #tpu.memory_space<vmem>>, vector<1x1x32xf32>
    %11 = vector.shape_cast %10 : vector<1x1x32xf32> to vector<1x32xf32>
    %cst_11 = arith.constant dense<0.000000e+00> : vector<16xf32>
    %12 = vector.multi_reduction <add>, %0, %cst_11 [1] : vector<16x32xf32> to vector<16xf32>
    %13 = vector.shape_cast %12 : vector<16xf32> to vector<16x1xf32>
    %cst_12 = arith.constant 3.200000e+01 : f32
    %14 = vector.broadcast %cst_12 : f32 to vector<16x1xf32>
    %15 = arith.divf %13, %14 : vector<16x1xf32>
    %16 = vector.broadcast %15 : vector<16x1xf32> to vector<16x32xf32>
    %17 = arith.subf %0, %16 : vector<16x32xf32>
    %18 = arith.mulf %17, %17 : vector<16x32xf32>
    %cst_13 = arith.constant dense<0.000000e+00> : vector<16xf32>
    %19 = vector.multi_reduction <add>, %18, %cst_13 [1] : vector<16x32xf32> to vector<16xf32>
    %20 = vector.shape_cast %19 : vector<16xf32> to vector<16x1xf32>
    %cst_14 = arith.constant 0.0322580636 : f32
    %21 = vector.broadcast %cst_14 : f32 to vector<16x1xf32>
    %22 = arith.mulf %20, %21 : vector<16x1xf32>
    %23 = vector.broadcast %15 : vector<16x1xf32> to vector<16x32xf32>
    %24 = arith.subf %0, %23 : vector<16x32xf32>
    %cst_15 = arith.constant 9.99999997E-7 : f32
    %25 = vector.broadcast %cst_15 : f32 to vector<16x1xf32>
    %26 = arith.addf %22, %25 : vector<16x1xf32>
    %27 = math.rsqrt %26 : vector<16x1xf32>
    %28 = vector.broadcast %27 : vector<16x1xf32> to vector<16x32xf32>
    %29 = arith.mulf %24, %28 : vector<16x32xf32>
    %30 = vector.broadcast %9 : vector<1x32xf32> to vector<16x32xf32>
    %31 = arith.mulf %30, %29 : vector<16x32xf32>
    %32 = vector.broadcast %11 : vector<1x32xf32> to vector<16x32xf32>
    %33 = arith.addf %31, %32 : vector<16x32xf32>
    %c0_16 = arith.constant 0 : index
    %c0_17 = arith.constant 0 : index
    %c0_18 = arith.constant 0 : index
    %34 = vector.load %arg2[%c0_16, %c0_17, %c0_18] : memref<2x32x96xf32, #tpu.memory_space<vmem>>, vector<1x32x96xf32>
    %35 = vector.shape_cast %34 : vector<1x32x96xf32> to vector<32x96xf32>
    %cst_19 = arith.constant dense<0.000000e+00> : vector<16x96xf32>
    %36 = tpu.matmul %33, %35, %cst_19 {dimension_numbers = #tpu.dot_dimension_numbers<[1], [0], [0], [1], [0, 0, 1, 1], [], []>} : vector<16x32xf32>, vector<32x96xf32>, vector<16x96xf32> -> vector<16x96xf32>
    %c0_20 = arith.constant 0 : index
    %c0_21 = arith.constant 0 : index
    %c0_22 = arith.constant 0 : index
    %37 = vector.load %arg3[%c0_20, %c0_21, %c0_22] : memref<2x1x96xf32, #tpu.memory_space<vmem>>, vector<1x1x96xf32>
    %38 = vector.shape_cast %37 : vector<1x1x96xf32> to vector<1x96xf32>
    %39 = vector.broadcast %38 : vector<1x96xf32> to vector<16x96xf32>
    %40 = arith.addf %36, %39 : vector<16x96xf32>
    %41 = vector.extract_strided_slice %40 {offsets = [0, 0], sizes = [16, 8], strides = [1, 1]} : vector<16x96xf32> to vector<16x8xf32>
    %42 = vector.shape_cast %41 : vector<16x8xf32> to vector<2x8x8xf32>
    %43 = vector.extract_strided_slice %40 {offsets = [0, 32], sizes = [16, 8], strides = [1, 1]} : vector<16x96xf32> to vector<16x8xf32>
    %44 = vector.shape_cast %43 : vector<16x8xf32> to vector<2x8x8xf32>
    %45 = vector.extract_strided_slice %40 {offsets = [0, 64], sizes = [16, 8], strides = [1, 1]} : vector<16x96xf32> to vector<16x8xf32>
    %46 = vector.shape_cast %45 : vector<16x8xf32> to vector<2x8x8xf32>
    "tpu.trace_start"() <{level = 10 : i32, message = "bqd,bkd->bqk"}> : () -> ()
    %cst_23 = arith.constant dense<0.000000e+00> : vector<2x8x8xf32>
    %47 = tpu.matmul %42, %44, %cst_23 {dimension_numbers = #tpu.dot_dimension_numbers<[2], [2], [1], [1], [0, 0, 0, 1, 1, 1], [0], [0]>} : vector<2x8x8xf32>, vector<2x8x8xf32>, vector<2x8x8xf32> -> vector<2x8x8xf32>
    "tpu.trace_stop"() : () -> ()
    %cst_24 = arith.constant 0.353553385 : f32
    %48 = vector.broadcast %cst_24 : f32 to vector<2x8x8xf32>
    %49 = arith.mulf %47, %48 : vector<2x8x8xf32>
    %50 = arith.addf %49, %7 : vector<2x8x8xf32>
    %cst_25 = arith.constant dense<0xFF800000> : vector<2x8xf32>
    %51 = vector.multi_reduction <maximumf>, %50, %cst_25 [2] : vector<2x8x8xf32> to vector<2x8xf32>
    %52 = vector.shape_cast %51 : vector<2x8xf32> to vector<2x8x1xf32>
    %53 = vector.broadcast %52 : vector<2x8x1xf32> to vector<2x8x8xf32>
    %54 = arith.subf %50, %53 : vector<2x8x8xf32>
    %55 = math.exp %54 : vector<2x8x8xf32>
    %cst_26 = arith.constant dense<0.000000e+00> : vector<2x8xf32>
    %56 = vector.multi_reduction <add>, %55, %cst_26 [2] : vector<2x8x8xf32> to vector<2x8xf32>
    %57 = vector.shape_cast %56 : vector<2x8xf32> to vector<2x8x1xf32>
    %58 = tpu.reciprocal %57 {approx = true} : vector<2x8x1xf32> -> vector<2x8x1xf32>
    %59 = arith.mulf %57, %58 : vector<2x8x1xf32>
    %cst_27 = arith.constant 2.000000e+00 : f32
    %60 = vector.broadcast %cst_27 : f32 to vector<2x8x1xf32>
    %61 = arith.subf %60, %59 : vector<2x8x1xf32>
    %62 = arith.mulf %58, %61 : vector<2x8x1xf32>
    %63 = vector.broadcast %62 : vector<2x8x1xf32> to vector<2x8x8xf32>
    %64 = arith.mulf %55, %63 : vector<2x8x8xf32>
    "tpu.trace_start"() <{level = 10 : i32, message = "bqk,bkd->bqd"}> : () -> ()
    %cst_28 = arith.constant dense<0.000000e+00> : vector<2x8x8xf32>
    %65 = tpu.matmul %64, %46, %cst_28 {dimension_numbers = #tpu.dot_dimension_numbers<[2], [1], [1], [2], [0, 0, 0, 1, 1, 2], [0], [0]>} : vector<2x8x8xf32>, vector<2x8x8xf32>, vector<2x8x8xf32> -> vector<2x8x8xf32>
    "tpu.trace_stop"() : () -> ()
    %66 = vector.extract_strided_slice %40 {offsets = [0, 8], sizes = [16, 8], strides = [1, 1]} : vector<16x96xf32> to vector<16x8xf32>
    %67 = vector.shape_cast %66 : vector<16x8xf32> to vector<2x8x8xf32>
    %68 = vector.extract_strided_slice %40 {offsets = [0, 40], sizes = [16, 8], strides = [1, 1]} : vector<16x96xf32> to vector<16x8xf32>
    %69 = vector.shape_cast %68 : vector<16x8xf32> to vector<2x8x8xf32>
    %70 = vector.extract_strided_slice %40 {offsets = [0, 72], sizes = [16, 8], strides = [1, 1]} : vector<16x96xf32> to vector<16x8xf32>
    %71 = vector.shape_cast %70 : vector<16x8xf32> to vector<2x8x8xf32>
    "tpu.trace_start"() <{level = 10 : i32, message = "bqd,bkd->bqk"}> : () -> ()
    %cst_29 = arith.constant dense<0.000000e+00> : vector<2x8x8xf32>
    %72 = tpu.matmul %67, %69, %cst_29 {dimension_numbers = #tpu.dot_dimension_numbers<[2], [2], [1], [1], [0, 0, 0, 1, 1, 1], [0], [0]>} : vector<2x8x8xf32>, vector<2x8x8xf32>, vector<2x8x8xf32> -> vector<2x8x8xf32>
    "tpu.trace_stop"() : () -> ()
    %cst_30 = arith.constant 0.353553385 : f32
    %73 = vector.broadcast %cst_30 : f32 to vector<2x8x8xf32>
    %74 = arith.mulf %72, %73 : vector<2x8x8xf32>
    %75 = arith.addf %74, %7 : vector<2x8x8xf32>
    %cst_31 = arith.constant dense<0xFF800000> : vector<2x8xf32>
    %76 = vector.multi_reduction <maximumf>, %75, %cst_31 [2] : vector<2x8x8xf32> to vector<2x8xf32>
    %77 = vector.shape_cast %76 : vector<2x8xf32> to vector<2x8x1xf32>
    %78 = vector.broadcast %77 : vector<2x8x1xf32> to vector<2x8x8xf32>
    %79 = arith.subf %75, %78 : vector<2x8x8xf32>
    %80 = math.exp %79 : vector<2x8x8xf32>
    %cst_32 = arith.constant dense<0.000000e+00> : vector<2x8xf32>
    %81 = vector.multi_reduction <add>, %80, %cst_32 [2] : vector<2x8x8xf32> to vector<2x8xf32>
    %82 = vector.shape_cast %81 : vector<2x8xf32> to vector<2x8x1xf32>
    %83 = tpu.reciprocal %82 {approx = true} : vector<2x8x1xf32> -> vector<2x8x1xf32>
    %84 = arith.mulf %82, %83 : vector<2x8x1xf32>
    %cst_33 = arith.constant 2.000000e+00 : f32
    %85 = vector.broadcast %cst_33 : f32 to vector<2x8x1xf32>
    %86 = arith.subf %85, %84 : vector<2x8x1xf32>
    %87 = arith.mulf %83, %86 : vector<2x8x1xf32>
    %88 = vector.broadcast %87 : vector<2x8x1xf32> to vector<2x8x8xf32>
    %89 = arith.mulf %80, %88 : vector<2x8x8xf32>
    "tpu.trace_start"() <{level = 10 : i32, message = "bqk,bkd->bqd"}> : () -> ()
    %cst_34 = arith.constant dense<0.000000e+00> : vector<2x8x8xf32>
    %90 = tpu.matmul %89, %71, %cst_34 {dimension_numbers = #tpu.dot_dimension_numbers<[2], [1], [1], [2], [0, 0, 0, 1, 1, 2], [0], [0]>} : vector<2x8x8xf32>, vector<2x8x8xf32>, vector<2x8x8xf32> -> vector<2x8x8xf32>
    "tpu.trace_stop"() : () -> ()
    %91 = vector.extract_strided_slice %40 {offsets = [0, 16], sizes = [16, 8], strides = [1, 1]} : vector<16x96xf32> to vector<16x8xf32>
    %92 = vector.shape_cast %91 : vector<16x8xf32> to vector<2x8x8xf32>
    %93 = vector.extract_strided_slice %40 {offsets = [0, 48], sizes = [16, 8], strides = [1, 1]} : vector<16x96xf32> to vector<16x8xf32>
    %94 = vector.shape_cast %93 : vector<16x8xf32> to vector<2x8x8xf32>
    %95 = vector.extract_strided_slice %40 {offsets = [0, 80], sizes = [16, 8], strides = [1, 1]} : vector<16x96xf32> to vector<16x8xf32>
    %96 = vector.shape_cast %95 : vector<16x8xf32> to vector<2x8x8xf32>
    "tpu.trace_start"() <{level = 10 : i32, message = "bqd,bkd->bqk"}> : () -> ()
    %cst_35 = arith.constant dense<0.000000e+00> : vector<2x8x8xf32>
    %97 = tpu.matmul %92, %94, %cst_35 {dimension_numbers = #tpu.dot_dimension_numbers<[2], [2], [1], [1], [0, 0, 0, 1, 1, 1], [0], [0]>} : vector<2x8x8xf32>, vector<2x8x8xf32>, vector<2x8x8xf32> -> vector<2x8x8xf32>
    "tpu.trace_stop"() : () -> ()
    %cst_36 = arith.constant 0.353553385 : f32
    %98 = vector.broadcast %cst_36 : f32 to vector<2x8x8xf32>
    %99 = arith.mulf %97, %98 : vector<2x8x8xf32>
    %100 = arith.addf %99, %7 : vector<2x8x8xf32>
    %cst_37 = arith.constant dense<0xFF800000> : vector<2x8xf32>
    %101 = vector.multi_reduction <maximumf>, %100, %cst_37 [2] : vector<2x8x8xf32> to vector<2x8xf32>
    %102 = vector.shape_cast %101 : vector<2x8xf32> to vector<2x8x1xf32>
    %103 = vector.broadcast %102 : vector<2x8x1xf32> to vector<2x8x8xf32>
    %104 = arith.subf %100, %103 : vector<2x8x8xf32>
    %105 = math.exp %104 : vector<2x8x8xf32>
    %cst_38 = arith.constant dense<0.000000e+00> : vector<2x8xf32>
    %106 = vector.multi_reduction <add>, %105, %cst_38 [2] : vector<2x8x8xf32> to vector<2x8xf32>
    %107 = vector.shape_cast %106 : vector<2x8xf32> to vector<2x8x1xf32>
    %108 = tpu.reciprocal %107 {approx = true} : vector<2x8x1xf32> -> vector<2x8x1xf32>
    %109 = arith.mulf %107, %108 : vector<2x8x1xf32>
    %cst_39 = arith.constant 2.000000e+00 : f32
    %110 = vector.broadcast %cst_39 : f32 to vector<2x8x1xf32>
    %111 = arith.subf %110, %109 : vector<2x8x1xf32>
    %112 = arith.mulf %108, %111 : vector<2x8x1xf32>
    %113 = vector.broadcast %112 : vector<2x8x1xf32> to vector<2x8x8xf32>
    %114 = arith.mulf %105, %113 : vector<2x8x8xf32>
    "tpu.trace_start"() <{level = 10 : i32, message = "bqk,bkd->bqd"}> : () -> ()
    %cst_40 = arith.constant dense<0.000000e+00> : vector<2x8x8xf32>
    %115 = tpu.matmul %114, %96, %cst_40 {dimension_numbers = #tpu.dot_dimension_numbers<[2], [1], [1], [2], [0, 0, 0, 1, 1, 2], [0], [0]>} : vector<2x8x8xf32>, vector<2x8x8xf32>, vector<2x8x8xf32> -> vector<2x8x8xf32>
    "tpu.trace_stop"() : () -> ()
    %116 = vector.extract_strided_slice %40 {offsets = [0, 24], sizes = [16, 8], strides = [1, 1]} : vector<16x96xf32> to vector<16x8xf32>
    %117 = vector.shape_cast %116 : vector<16x8xf32> to vector<2x8x8xf32>
    %118 = vector.extract_strided_slice %40 {offsets = [0, 56], sizes = [16, 8], strides = [1, 1]} : vector<16x96xf32> to vector<16x8xf32>
    %119 = vector.shape_cast %118 : vector<16x8xf32> to vector<2x8x8xf32>
    %120 = vector.extract_strided_slice %40 {offsets = [0, 88], sizes = [16, 8], strides = [1, 1]} : vector<16x96xf32> to vector<16x8xf32>
    %121 = vector.shape_cast %120 : vector<16x8xf32> to vector<2x8x8xf32>
    "tpu.trace_start"() <{level = 10 : i32, message = "bqd,bkd->bqk"}> : () -> ()
    %cst_41 = arith.constant dense<0.000000e+00> : vector<2x8x8xf32>
    %122 = tpu.matmul %117, %119, %cst_41 {dimension_numbers = #tpu.dot_dimension_numbers<[2], [2], [1], [1], [0, 0, 0, 1, 1, 1], [0], [0]>} : vector<2x8x8xf32>, vector<2x8x8xf32>, vector<2x8x8xf32> -> vector<2x8x8xf32>
    "tpu.trace_stop"() : () -> ()
    %cst_42 = arith.constant 0.353553385 : f32
    %123 = vector.broadcast %cst_42 : f32 to vector<2x8x8xf32>
    %124 = arith.mulf %122, %123 : vector<2x8x8xf32>
    %125 = arith.addf %124, %7 : vector<2x8x8xf32>
    %cst_43 = arith.constant dense<0xFF800000> : vector<2x8xf32>
    %126 = vector.multi_reduction <maximumf>, %125, %cst_43 [2] : vector<2x8x8xf32> to vector<2x8xf32>
    %127 = vector.shape_cast %126 : vector<2x8xf32> to vector<2x8x1xf32>
    %128 = vector.broadcast %127 : vector<2x8x1xf32> to vector<2x8x8xf32>
    %129 = arith.subf %125, %128 : vector<2x8x8xf32>
    %130 = math.exp %129 : vector<2x8x8xf32>
    %cst_44 = arith.constant dense<0.000000e+00> : vector<2x8xf32>
    %131 = vector.multi_reduction <add>, %130, %cst_44 [2] : vector<2x8x8xf32> to vector<2x8xf32>
    %132 = vector.shape_cast %131 : vector<2x8xf32> to vector<2x8x1xf32>
    %133 = tpu.reciprocal %132 {approx = true} : vector<2x8x1xf32> -> vector<2x8x1xf32>
    %134 = arith.mulf %132, %133 : vector<2x8x1xf32>
    %cst_45 = arith.constant 2.000000e+00 : f32
    %135 = vector.broadcast %cst_45 : f32 to vector<2x8x1xf32>
    %136 = arith.subf %135, %134 : vector<2x8x1xf32>
    %137 = arith.mulf %133, %136 : vector<2x8x1xf32>
    %138 = vector.broadcast %137 : vector<2x8x1xf32> to vector<2x8x8xf32>
    %139 = arith.mulf %130, %138 : vector<2x8x8xf32>
    "tpu.trace_start"() <{level = 10 : i32, message = "bqk,bkd->bqd"}> : () -> ()
    %cst_46 = arith.constant dense<0.000000e+00> : vector<2x8x8xf32>
    %140 = tpu.matmul %139, %121, %cst_46 {dimension_numbers = #tpu.dot_dimension_numbers<[2], [1], [1], [2], [0, 0, 0, 1, 1, 2], [0], [0]>} : vector<2x8x8xf32>, vector<2x8x8xf32>, vector<2x8x8xf32> -> vector<2x8x8xf32>
    "tpu.trace_stop"() : () -> ()
    %141 = tpu.concatenate %65, %90, %115, %140 in 2 : vector<2x8x8xf32>, vector<2x8x8xf32>, vector<2x8x8xf32>, vector<2x8x8xf32> -> vector<2x8x32xf32>
    %142 = vector.shape_cast %141 : vector<2x8x32xf32> to vector<16x32xf32>
    %c0_47 = arith.constant 0 : index
    %c0_48 = arith.constant 0 : index
    %c0_49 = arith.constant 0 : index
    %143 = vector.load %arg4[%c0_47, %c0_48, %c0_49] : memref<2x32x32xf32, #tpu.memory_space<vmem>>, vector<1x32x32xf32>
    %144 = vector.shape_cast %143 : vector<1x32x32xf32> to vector<32x32xf32>
    %cst_50 = arith.constant dense<0.000000e+00> : vector<16x32xf32>
    %145 = tpu.matmul %142, %144, %cst_50 {dimension_numbers = #tpu.dot_dimension_numbers<[1], [0], [0], [1], [0, 0, 1, 1], [], []>} : vector<16x32xf32>, vector<32x32xf32>, vector<16x32xf32> -> vector<16x32xf32>
    %c0_51 = arith.constant 0 : index
    %c0_52 = arith.constant 0 : index
    %c0_53 = arith.constant 0 : index
    %146 = vector.load %arg5[%c0_51, %c0_52, %c0_53] : memref<2x1x32xf32, #tpu.memory_space<vmem>>, vector<1x1x32xf32>
    %147 = vector.shape_cast %146 : vector<1x1x32xf32> to vector<1x32xf32>
    %148 = vector.broadcast %147 : vector<1x32xf32> to vector<16x32xf32>
    %149 = arith.addf %145, %148 : vector<16x32xf32>
    %150 = arith.addf %0, %149 : vector<16x32xf32>
    %c0_54 = arith.constant 0 : index
    %c0_55 = arith.constant 0 : index
    %c0_56 = arith.constant 0 : index
    %151 = vector.load %arg8[%c0_54, %c0_55, %c0_56] : memref<2x1x32xf32, #tpu.memory_space<vmem>>, vector<1x1x32xf32>
    %152 = vector.shape_cast %151 : vector<1x1x32xf32> to vector<1x32xf32>
    %c0_57 = arith.constant 0 : index
    %c0_58 = arith.constant 0 : index
    %c0_59 = arith.constant 0 : index
    %153 = vector.load %arg9[%c0_57, %c0_58, %c0_59] : memref<2x1x32xf32, #tpu.memory_space<vmem>>, vector<1x1x32xf32>
    %154 = vector.shape_cast %153 : vector<1x1x32xf32> to vector<1x32xf32>
    %cst_60 = arith.constant dense<0.000000e+00> : vector<16xf32>
    %155 = vector.multi_reduction <add>, %150, %cst_60 [1] : vector<16x32xf32> to vector<16xf32>
    %156 = vector.shape_cast %155 : vector<16xf32> to vector<16x1xf32>
    %cst_61 = arith.constant 3.200000e+01 : f32
    %157 = vector.broadcast %cst_61 : f32 to vector<16x1xf32>
    %158 = arith.divf %156, %157 : vector<16x1xf32>
    %159 = vector.broadcast %158 : vector<16x1xf32> to vector<16x32xf32>
    %160 = arith.subf %150, %159 : vector<16x32xf32>
    %161 = arith.mulf %160, %160 : vector<16x32xf32>
    %cst_62 = arith.constant dense<0.000000e+00> : vector<16xf32>
    %162 = vector.multi_reduction <add>, %161, %cst_62 [1] : vector<16x32xf32> to vector<16xf32>
    %163 = vector.shape_cast %162 : vector<16xf32> to vector<16x1xf32>
    %cst_63 = arith.constant 0.0322580636 : f32
    %164 = vector.broadcast %cst_63 : f32 to vector<16x1xf32>
    %165 = arith.mulf %163, %164 : vector<16x1xf32>
    %166 = vector.broadcast %158 : vector<16x1xf32> to vector<16x32xf32>
    %167 = arith.subf %150, %166 : vector<16x32xf32>
    %cst_64 = arith.constant 9.99999997E-7 : f32
    %168 = vector.broadcast %cst_64 : f32 to vector<16x1xf32>
    %169 = arith.addf %165, %168 : vector<16x1xf32>
    %170 = math.rsqrt %169 : vector<16x1xf32>
    %171 = vector.broadcast %170 : vector<16x1xf32> to vector<16x32xf32>
    %172 = arith.mulf %167, %171 : vector<16x32xf32>
    %173 = vector.broadcast %152 : vector<1x32xf32> to vector<16x32xf32>
    %174 = arith.mulf %173, %172 : vector<16x32xf32>
    %175 = vector.broadcast %154 : vector<1x32xf32> to vector<16x32xf32>
    %176 = arith.addf %174, %175 : vector<16x32xf32>
    %c0_65 = arith.constant 0 : index
    %c0_66 = arith.constant 0 : index
    %c0_67 = arith.constant 0 : index
    %177 = vector.load %arg10[%c0_65, %c0_66, %c0_67] : memref<2x32x64xf32, #tpu.memory_space<vmem>>, vector<1x32x64xf32>
    %178 = vector.shape_cast %177 : vector<1x32x64xf32> to vector<32x64xf32>
    %cst_68 = arith.constant dense<0.000000e+00> : vector<16x64xf32>
    %179 = tpu.matmul %176, %178, %cst_68 {dimension_numbers = #tpu.dot_dimension_numbers<[1], [0], [0], [1], [0, 0, 1, 1], [], []>} : vector<16x32xf32>, vector<32x64xf32>, vector<16x64xf32> -> vector<16x64xf32>
    %c0_69 = arith.constant 0 : index
    %c0_70 = arith.constant 0 : index
    %c0_71 = arith.constant 0 : index
    %180 = vector.load %arg11[%c0_69, %c0_70, %c0_71] : memref<2x1x64xf32, #tpu.memory_space<vmem>>, vector<1x1x64xf32>
    %181 = vector.shape_cast %180 : vector<1x1x64xf32> to vector<1x64xf32>
    %182 = vector.broadcast %181 : vector<1x64xf32> to vector<16x64xf32>
    %183 = arith.addf %179, %182 : vector<16x64xf32>
    %cst_72 = arith.constant 0.000000e+00 : f32
    %184 = vector.broadcast %cst_72 : f32 to vector<16x64xf32>
    %185 = arith.maximumf %183, %184 : vector<16x64xf32>
    %c0_73 = arith.constant 0 : index
    %c0_74 = arith.constant 0 : index
    %c0_75 = arith.constant 0 : index
    %186 = vector.load %arg12[%c0_73, %c0_74, %c0_75] : memref<2x64x32xf32, #tpu.memory_space<vmem>>, vector<1x64x32xf32>
    %187 = vector.shape_cast %186 : vector<1x64x32xf32> to vector<64x32xf32>
    %cst_76 = arith.constant dense<0.000000e+00> : vector<16x32xf32>
    %188 = tpu.matmul %185, %187, %cst_76 {dimension_numbers = #tpu.dot_dimension_numbers<[1], [0], [0], [1], [0, 0, 1, 1], [], []>} : vector<16x64xf32>, vector<64x32xf32>, vector<16x32xf32> -> vector<16x32xf32>
    %189 = arith.addf %150, %188 : vector<16x32xf32>
    %c0_77 = arith.constant 0 : index
    %c0_78 = arith.constant 0 : index
    %c0_79 = arith.constant 0 : index
    %190 = vector.load %arg13[%c0_77, %c0_78, %c0_79] : memref<2x1x32xf32, #tpu.memory_space<vmem>>, vector<1x1x32xf32>
    %191 = vector.shape_cast %190 : vector<1x1x32xf32> to vector<1x32xf32>
    %192 = vector.broadcast %191 : vector<1x32xf32> to vector<16x32xf32>
    %193 = arith.addf %189, %192 : vector<16x32xf32>
    %c1 = arith.constant 1 : index
    %c0_80 = arith.constant 0 : index
    %c0_81 = arith.constant 0 : index
    %194 = vector.load %arg6[%c1, %c0_80, %c0_81] : memref<2x1x32xf32, #tpu.memory_space<vmem>>, vector<1x1x32xf32>
    %195 = vector.shape_cast %194 : vector<1x1x32xf32> to vector<1x32xf32>
    %c1_82 = arith.constant 1 : index
    %c0_83 = arith.constant 0 : index
    %c0_84 = arith.constant 0 : index
    %196 = vector.load %arg7[%c1_82, %c0_83, %c0_84] : memref<2x1x32xf32, #tpu.memory_space<vmem>>, vector<1x1x32xf32>
    %197 = vector.shape_cast %196 : vector<1x1x32xf32> to vector<1x32xf32>
    %cst_85 = arith.constant dense<0.000000e+00> : vector<16xf32>
    %198 = vector.multi_reduction <add>, %193, %cst_85 [1] : vector<16x32xf32> to vector<16xf32>
    %199 = vector.shape_cast %198 : vector<16xf32> to vector<16x1xf32>
    %cst_86 = arith.constant 3.200000e+01 : f32
    %200 = vector.broadcast %cst_86 : f32 to vector<16x1xf32>
    %201 = arith.divf %199, %200 : vector<16x1xf32>
    %202 = vector.broadcast %201 : vector<16x1xf32> to vector<16x32xf32>
    %203 = arith.subf %193, %202 : vector<16x32xf32>
    %204 = arith.mulf %203, %203 : vector<16x32xf32>
    %cst_87 = arith.constant dense<0.000000e+00> : vector<16xf32>
    %205 = vector.multi_reduction <add>, %204, %cst_87 [1] : vector<16x32xf32> to vector<16xf32>
    %206 = vector.shape_cast %205 : vector<16xf32> to vector<16x1xf32>
    %cst_88 = arith.constant 0.0322580636 : f32
    %207 = vector.broadcast %cst_88 : f32 to vector<16x1xf32>
    %208 = arith.mulf %206, %207 : vector<16x1xf32>
    %209 = vector.broadcast %201 : vector<16x1xf32> to vector<16x32xf32>
    %210 = arith.subf %193, %209 : vector<16x32xf32>
    %cst_89 = arith.constant 9.99999997E-7 : f32
    %211 = vector.broadcast %cst_89 : f32 to vector<16x1xf32>
    %212 = arith.addf %208, %211 : vector<16x1xf32>
    %213 = math.rsqrt %212 : vector<16x1xf32>
    %214 = vector.broadcast %213 : vector<16x1xf32> to vector<16x32xf32>
    %215 = arith.mulf %210, %214 : vector<16x32xf32>
    %216 = vector.broadcast %195 : vector<1x32xf32> to vector<16x32xf32>
    %217 = arith.mulf %216, %215 : vector<16x32xf32>
    %218 = vector.broadcast %197 : vector<1x32xf32> to vector<16x32xf32>
    %219 = arith.addf %217, %218 : vector<16x32xf32>
    %c1_90 = arith.constant 1 : index
    %c0_91 = arith.constant 0 : index
    %c0_92 = arith.constant 0 : index
    %220 = vector.load %arg2[%c1_90, %c0_91, %c0_92] : memref<2x32x96xf32, #tpu.memory_space<vmem>>, vector<1x32x96xf32>
    %221 = vector.shape_cast %220 : vector<1x32x96xf32> to vector<32x96xf32>
    %cst_93 = arith.constant dense<0.000000e+00> : vector<16x96xf32>
    %222 = tpu.matmul %219, %221, %cst_93 {dimension_numbers = #tpu.dot_dimension_numbers<[1], [0], [0], [1], [0, 0, 1, 1], [], []>} : vector<16x32xf32>, vector<32x96xf32>, vector<16x96xf32> -> vector<16x96xf32>
    %c1_94 = arith.constant 1 : index
    %c0_95 = arith.constant 0 : index
    %c0_96 = arith.constant 0 : index
    %223 = vector.load %arg3[%c1_94, %c0_95, %c0_96] : memref<2x1x96xf32, #tpu.memory_space<vmem>>, vector<1x1x96xf32>
    %224 = vector.shape_cast %223 : vector<1x1x96xf32> to vector<1x96xf32>
    %225 = vector.broadcast %224 : vector<1x96xf32> to vector<16x96xf32>
    %226 = arith.addf %222, %225 : vector<16x96xf32>
    %227 = vector.extract_strided_slice %226 {offsets = [0, 0], sizes = [16, 8], strides = [1, 1]} : vector<16x96xf32> to vector<16x8xf32>
    %228 = vector.shape_cast %227 : vector<16x8xf32> to vector<2x8x8xf32>
    %229 = vector.extract_strided_slice %226 {offsets = [0, 32], sizes = [16, 8], strides = [1, 1]} : vector<16x96xf32> to vector<16x8xf32>
    %230 = vector.shape_cast %229 : vector<16x8xf32> to vector<2x8x8xf32>
    %231 = vector.extract_strided_slice %226 {offsets = [0, 64], sizes = [16, 8], strides = [1, 1]} : vector<16x96xf32> to vector<16x8xf32>
    %232 = vector.shape_cast %231 : vector<16x8xf32> to vector<2x8x8xf32>
    "tpu.trace_start"() <{level = 10 : i32, message = "bqd,bkd->bqk"}> : () -> ()
    %cst_97 = arith.constant dense<0.000000e+00> : vector<2x8x8xf32>
    %233 = tpu.matmul %228, %230, %cst_97 {dimension_numbers = #tpu.dot_dimension_numbers<[2], [2], [1], [1], [0, 0, 0, 1, 1, 1], [0], [0]>} : vector<2x8x8xf32>, vector<2x8x8xf32>, vector<2x8x8xf32> -> vector<2x8x8xf32>
    "tpu.trace_stop"() : () -> ()
    %cst_98 = arith.constant 0.353553385 : f32
    %234 = vector.broadcast %cst_98 : f32 to vector<2x8x8xf32>
    %235 = arith.mulf %233, %234 : vector<2x8x8xf32>
    %236 = arith.addf %235, %7 : vector<2x8x8xf32>
    %cst_99 = arith.constant dense<0xFF800000> : vector<2x8xf32>
    %237 = vector.multi_reduction <maximumf>, %236, %cst_99 [2] : vector<2x8x8xf32> to vector<2x8xf32>
    %238 = vector.shape_cast %237 : vector<2x8xf32> to vector<2x8x1xf32>
    %239 = vector.broadcast %238 : vector<2x8x1xf32> to vector<2x8x8xf32>
    %240 = arith.subf %236, %239 : vector<2x8x8xf32>
    %241 = math.exp %240 : vector<2x8x8xf32>
    %cst_100 = arith.constant dense<0.000000e+00> : vector<2x8xf32>
    %242 = vector.multi_reduction <add>, %241, %cst_100 [2] : vector<2x8x8xf32> to vector<2x8xf32>
    %243 = vector.shape_cast %242 : vector<2x8xf32> to vector<2x8x1xf32>
    %244 = tpu.reciprocal %243 {approx = true} : vector<2x8x1xf32> -> vector<2x8x1xf32>
    %245 = arith.mulf %243, %244 : vector<2x8x1xf32>
    %cst_101 = arith.constant 2.000000e+00 : f32
    %246 = vector.broadcast %cst_101 : f32 to vector<2x8x1xf32>
    %247 = arith.subf %246, %245 : vector<2x8x1xf32>
    %248 = arith.mulf %244, %247 : vector<2x8x1xf32>
    %249 = vector.broadcast %248 : vector<2x8x1xf32> to vector<2x8x8xf32>
    %250 = arith.mulf %241, %249 : vector<2x8x8xf32>
    "tpu.trace_start"() <{level = 10 : i32, message = "bqk,bkd->bqd"}> : () -> ()
    %cst_102 = arith.constant dense<0.000000e+00> : vector<2x8x8xf32>
    %251 = tpu.matmul %250, %232, %cst_102 {dimension_numbers = #tpu.dot_dimension_numbers<[2], [1], [1], [2], [0, 0, 0, 1, 1, 2], [0], [0]>} : vector<2x8x8xf32>, vector<2x8x8xf32>, vector<2x8x8xf32> -> vector<2x8x8xf32>
    "tpu.trace_stop"() : () -> ()
    %252 = vector.extract_strided_slice %226 {offsets = [0, 8], sizes = [16, 8], strides = [1, 1]} : vector<16x96xf32> to vector<16x8xf32>
    %253 = vector.shape_cast %252 : vector<16x8xf32> to vector<2x8x8xf32>
    %254 = vector.extract_strided_slice %226 {offsets = [0, 40], sizes = [16, 8], strides = [1, 1]} : vector<16x96xf32> to vector<16x8xf32>
    %255 = vector.shape_cast %254 : vector<16x8xf32> to vector<2x8x8xf32>
    %256 = vector.extract_strided_slice %226 {offsets = [0, 72], sizes = [16, 8], strides = [1, 1]} : vector<16x96xf32> to vector<16x8xf32>
    %257 = vector.shape_cast %256 : vector<16x8xf32> to vector<2x8x8xf32>
    "tpu.trace_start"() <{level = 10 : i32, message = "bqd,bkd->bqk"}> : () -> ()
    %cst_103 = arith.constant dense<0.000000e+00> : vector<2x8x8xf32>
    %258 = tpu.matmul %253, %255, %cst_103 {dimension_numbers = #tpu.dot_dimension_numbers<[2], [2], [1], [1], [0, 0, 0, 1, 1, 1], [0], [0]>} : vector<2x8x8xf32>, vector<2x8x8xf32>, vector<2x8x8xf32> -> vector<2x8x8xf32>
    "tpu.trace_stop"() : () -> ()
    %cst_104 = arith.constant 0.353553385 : f32
    %259 = vector.broadcast %cst_104 : f32 to vector<2x8x8xf32>
    %260 = arith.mulf %258, %259 : vector<2x8x8xf32>
    %261 = arith.addf %260, %7 : vector<2x8x8xf32>
    %cst_105 = arith.constant dense<0xFF800000> : vector<2x8xf32>
    %262 = vector.multi_reduction <maximumf>, %261, %cst_105 [2] : vector<2x8x8xf32> to vector<2x8xf32>
    %263 = vector.shape_cast %262 : vector<2x8xf32> to vector<2x8x1xf32>
    %264 = vector.broadcast %263 : vector<2x8x1xf32> to vector<2x8x8xf32>
    %265 = arith.subf %261, %264 : vector<2x8x8xf32>
    %266 = math.exp %265 : vector<2x8x8xf32>
    %cst_106 = arith.constant dense<0.000000e+00> : vector<2x8xf32>
    %267 = vector.multi_reduction <add>, %266, %cst_106 [2] : vector<2x8x8xf32> to vector<2x8xf32>
    %268 = vector.shape_cast %267 : vector<2x8xf32> to vector<2x8x1xf32>
    %269 = tpu.reciprocal %268 {approx = true} : vector<2x8x1xf32> -> vector<2x8x1xf32>
    %270 = arith.mulf %268, %269 : vector<2x8x1xf32>
    %cst_107 = arith.constant 2.000000e+00 : f32
    %271 = vector.broadcast %cst_107 : f32 to vector<2x8x1xf32>
    %272 = arith.subf %271, %270 : vector<2x8x1xf32>
    %273 = arith.mulf %269, %272 : vector<2x8x1xf32>
    %274 = vector.broadcast %273 : vector<2x8x1xf32> to vector<2x8x8xf32>
    %275 = arith.mulf %266, %274 : vector<2x8x8xf32>
    "tpu.trace_start"() <{level = 10 : i32, message = "bqk,bkd->bqd"}> : () -> ()
    %cst_108 = arith.constant dense<0.000000e+00> : vector<2x8x8xf32>
    %276 = tpu.matmul %275, %257, %cst_108 {dimension_numbers = #tpu.dot_dimension_numbers<[2], [1], [1], [2], [0, 0, 0, 1, 1, 2], [0], [0]>} : vector<2x8x8xf32>, vector<2x8x8xf32>, vector<2x8x8xf32> -> vector<2x8x8xf32>
    "tpu.trace_stop"() : () -> ()
    %277 = vector.extract_strided_slice %226 {offsets = [0, 16], sizes = [16, 8], strides = [1, 1]} : vector<16x96xf32> to vector<16x8xf32>
    %278 = vector.shape_cast %277 : vector<16x8xf32> to vector<2x8x8xf32>
    %279 = vector.extract_strided_slice %226 {offsets = [0, 48], sizes = [16, 8], strides = [1, 1]} : vector<16x96xf32> to vector<16x8xf32>
    %280 = vector.shape_cast %279 : vector<16x8xf32> to vector<2x8x8xf32>
    %281 = vector.extract_strided_slice %226 {offsets = [0, 80], sizes = [16, 8], strides = [1, 1]} : vector<16x96xf32> to vector<16x8xf32>
    %282 = vector.shape_cast %281 : vector<16x8xf32> to vector<2x8x8xf32>
    "tpu.trace_start"() <{level = 10 : i32, message = "bqd,bkd->bqk"}> : () -> ()
    %cst_109 = arith.constant dense<0.000000e+00> : vector<2x8x8xf32>
    %283 = tpu.matmul %278, %280, %cst_109 {dimension_numbers = #tpu.dot_dimension_numbers<[2], [2], [1], [1], [0, 0, 0, 1, 1, 1], [0], [0]>} : vector<2x8x8xf32>, vector<2x8x8xf32>, vector<2x8x8xf32> -> vector<2x8x8xf32>
    "tpu.trace_stop"() : () -> ()
    %cst_110 = arith.constant 0.353553385 : f32
    %284 = vector.broadcast %cst_110 : f32 to vector<2x8x8xf32>
    %285 = arith.mulf %283, %284 : vector<2x8x8xf32>
    %286 = arith.addf %285, %7 : vector<2x8x8xf32>
    %cst_111 = arith.constant dense<0xFF800000> : vector<2x8xf32>
    %287 = vector.multi_reduction <maximumf>, %286, %cst_111 [2] : vector<2x8x8xf32> to vector<2x8xf32>
    %288 = vector.shape_cast %287 : vector<2x8xf32> to vector<2x8x1xf32>
    %289 = vector.broadcast %288 : vector<2x8x1xf32> to vector<2x8x8xf32>
    %290 = arith.subf %286, %289 : vector<2x8x8xf32>
    %291 = math.exp %290 : vector<2x8x8xf32>
    %cst_112 = arith.constant dense<0.000000e+00> : vector<2x8xf32>
    %292 = vector.multi_reduction <add>, %291, %cst_112 [2] : vector<2x8x8xf32> to vector<2x8xf32>
    %293 = vector.shape_cast %292 : vector<2x8xf32> to vector<2x8x1xf32>
    %294 = tpu.reciprocal %293 {approx = true} : vector<2x8x1xf32> -> vector<2x8x1xf32>
    %295 = arith.mulf %293, %294 : vector<2x8x1xf32>
    %cst_113 = arith.constant 2.000000e+00 : f32
    %296 = vector.broadcast %cst_113 : f32 to vector<2x8x1xf32>
    %297 = arith.subf %296, %295 : vector<2x8x1xf32>
    %298 = arith.mulf %294, %297 : vector<2x8x1xf32>
    %299 = vector.broadcast %298 : vector<2x8x1xf32> to vector<2x8x8xf32>
    %300 = arith.mulf %291, %299 : vector<2x8x8xf32>
    "tpu.trace_start"() <{level = 10 : i32, message = "bqk,bkd->bqd"}> : () -> ()
    %cst_114 = arith.constant dense<0.000000e+00> : vector<2x8x8xf32>
    %301 = tpu.matmul %300, %282, %cst_114 {dimension_numbers = #tpu.dot_dimension_numbers<[2], [1], [1], [2], [0, 0, 0, 1, 1, 2], [0], [0]>} : vector<2x8x8xf32>, vector<2x8x8xf32>, vector<2x8x8xf32> -> vector<2x8x8xf32>
    "tpu.trace_stop"() : () -> ()
    %302 = vector.extract_strided_slice %226 {offsets = [0, 24], sizes = [16, 8], strides = [1, 1]} : vector<16x96xf32> to vector<16x8xf32>
    %303 = vector.shape_cast %302 : vector<16x8xf32> to vector<2x8x8xf32>
    %304 = vector.extract_strided_slice %226 {offsets = [0, 56], sizes = [16, 8], strides = [1, 1]} : vector<16x96xf32> to vector<16x8xf32>
    %305 = vector.shape_cast %304 : vector<16x8xf32> to vector<2x8x8xf32>
    %306 = vector.extract_strided_slice %226 {offsets = [0, 88], sizes = [16, 8], strides = [1, 1]} : vector<16x96xf32> to vector<16x8xf32>
    %307 = vector.shape_cast %306 : vector<16x8xf32> to vector<2x8x8xf32>
    "tpu.trace_start"() <{level = 10 : i32, message = "bqd,bkd->bqk"}> : () -> ()
    %cst_115 = arith.constant dense<0.000000e+00> : vector<2x8x8xf32>
    %308 = tpu.matmul %303, %305, %cst_115 {dimension_numbers = #tpu.dot_dimension_numbers<[2], [2], [1], [1], [0, 0, 0, 1, 1, 1], [0], [0]>} : vector<2x8x8xf32>, vector<2x8x8xf32>, vector<2x8x8xf32> -> vector<2x8x8xf32>
    "tpu.trace_stop"() : () -> ()
    %cst_116 = arith.constant 0.353553385 : f32
    %309 = vector.broadcast %cst_116 : f32 to vector<2x8x8xf32>
    %310 = arith.mulf %308, %309 : vector<2x8x8xf32>
    %311 = arith.addf %310, %7 : vector<2x8x8xf32>
    %cst_117 = arith.constant dense<0xFF800000> : vector<2x8xf32>
    %312 = vector.multi_reduction <maximumf>, %311, %cst_117 [2] : vector<2x8x8xf32> to vector<2x8xf32>
    %313 = vector.shape_cast %312 : vector<2x8xf32> to vector<2x8x1xf32>
    %314 = vector.broadcast %313 : vector<2x8x1xf32> to vector<2x8x8xf32>
    %315 = arith.subf %311, %314 : vector<2x8x8xf32>
    %316 = math.exp %315 : vector<2x8x8xf32>
    %cst_118 = arith.constant dense<0.000000e+00> : vector<2x8xf32>
    %317 = vector.multi_reduction <add>, %316, %cst_118 [2] : vector<2x8x8xf32> to vector<2x8xf32>
    %318 = vector.shape_cast %317 : vector<2x8xf32> to vector<2x8x1xf32>
    %319 = tpu.reciprocal %318 {approx = true} : vector<2x8x1xf32> -> vector<2x8x1xf32>
    %320 = arith.mulf %318, %319 : vector<2x8x1xf32>
    %cst_119 = arith.constant 2.000000e+00 : f32
    %321 = vector.broadcast %cst_119 : f32 to vector<2x8x1xf32>
    %322 = arith.subf %321, %320 : vector<2x8x1xf32>
    %323 = arith.mulf %319, %322 : vector<2x8x1xf32>
    %324 = vector.broadcast %323 : vector<2x8x1xf32> to vector<2x8x8xf32>
    %325 = arith.mulf %316, %324 : vector<2x8x8xf32>
    "tpu.trace_start"() <{level = 10 : i32, message = "bqk,bkd->bqd"}> : () -> ()
    %cst_120 = arith.constant dense<0.000000e+00> : vector<2x8x8xf32>
    %326 = tpu.matmul %325, %307, %cst_120 {dimension_numbers = #tpu.dot_dimension_numbers<[2], [1], [1], [2], [0, 0, 0, 1, 1, 2], [0], [0]>} : vector<2x8x8xf32>, vector<2x8x8xf32>, vector<2x8x8xf32> -> vector<2x8x8xf32>
    "tpu.trace_stop"() : () -> ()
    %327 = tpu.concatenate %251, %276, %301, %326 in 2 : vector<2x8x8xf32>, vector<2x8x8xf32>, vector<2x8x8xf32>, vector<2x8x8xf32> -> vector<2x8x32xf32>
    %328 = vector.shape_cast %327 : vector<2x8x32xf32> to vector<16x32xf32>
    %c1_121 = arith.constant 1 : index
    %c0_122 = arith.constant 0 : index
    %c0_123 = arith.constant 0 : index
    %329 = vector.load %arg4[%c1_121, %c0_122, %c0_123] : memref<2x32x32xf32, #tpu.memory_space<vmem>>, vector<1x32x32xf32>
    %330 = vector.shape_cast %329 : vector<1x32x32xf32> to vector<32x32xf32>
    %cst_124 = arith.constant dense<0.000000e+00> : vector<16x32xf32>
    %331 = tpu.matmul %328, %330, %cst_124 {dimension_numbers = #tpu.dot_dimension_numbers<[1], [0], [0], [1], [0, 0, 1, 1], [], []>} : vector<16x32xf32>, vector<32x32xf32>, vector<16x32xf32> -> vector<16x32xf32>
    %c1_125 = arith.constant 1 : index
    %c0_126 = arith.constant 0 : index
    %c0_127 = arith.constant 0 : index
    %332 = vector.load %arg5[%c1_125, %c0_126, %c0_127] : memref<2x1x32xf32, #tpu.memory_space<vmem>>, vector<1x1x32xf32>
    %333 = vector.shape_cast %332 : vector<1x1x32xf32> to vector<1x32xf32>
    %334 = vector.broadcast %333 : vector<1x32xf32> to vector<16x32xf32>
    %335 = arith.addf %331, %334 : vector<16x32xf32>
    %336 = arith.addf %193, %335 : vector<16x32xf32>
    %c1_128 = arith.constant 1 : index
    %c0_129 = arith.constant 0 : index
    %c0_130 = arith.constant 0 : index
    %337 = vector.load %arg8[%c1_128, %c0_129, %c0_130] : memref<2x1x32xf32, #tpu.memory_space<vmem>>, vector<1x1x32xf32>
    %338 = vector.shape_cast %337 : vector<1x1x32xf32> to vector<1x32xf32>
    %c1_131 = arith.constant 1 : index
    %c0_132 = arith.constant 0 : index
    %c0_133 = arith.constant 0 : index
    %339 = vector.load %arg9[%c1_131, %c0_132, %c0_133] : memref<2x1x32xf32, #tpu.memory_space<vmem>>, vector<1x1x32xf32>
    %340 = vector.shape_cast %339 : vector<1x1x32xf32> to vector<1x32xf32>
    %cst_134 = arith.constant dense<0.000000e+00> : vector<16xf32>
    %341 = vector.multi_reduction <add>, %336, %cst_134 [1] : vector<16x32xf32> to vector<16xf32>
    %342 = vector.shape_cast %341 : vector<16xf32> to vector<16x1xf32>
    %cst_135 = arith.constant 3.200000e+01 : f32
    %343 = vector.broadcast %cst_135 : f32 to vector<16x1xf32>
    %344 = arith.divf %342, %343 : vector<16x1xf32>
    %345 = vector.broadcast %344 : vector<16x1xf32> to vector<16x32xf32>
    %346 = arith.subf %336, %345 : vector<16x32xf32>
    %347 = arith.mulf %346, %346 : vector<16x32xf32>
    %cst_136 = arith.constant dense<0.000000e+00> : vector<16xf32>
    %348 = vector.multi_reduction <add>, %347, %cst_136 [1] : vector<16x32xf32> to vector<16xf32>
    %349 = vector.shape_cast %348 : vector<16xf32> to vector<16x1xf32>
    %cst_137 = arith.constant 0.0322580636 : f32
    %350 = vector.broadcast %cst_137 : f32 to vector<16x1xf32>
    %351 = arith.mulf %349, %350 : vector<16x1xf32>
    %352 = vector.broadcast %344 : vector<16x1xf32> to vector<16x32xf32>
    %353 = arith.subf %336, %352 : vector<16x32xf32>
    %cst_138 = arith.constant 9.99999997E-7 : f32
    %354 = vector.broadcast %cst_138 : f32 to vector<16x1xf32>
    %355 = arith.addf %351, %354 : vector<16x1xf32>
    %356 = math.rsqrt %355 : vector<16x1xf32>
    %357 = vector.broadcast %356 : vector<16x1xf32> to vector<16x32xf32>
    %358 = arith.mulf %353, %357 : vector<16x32xf32>
    %359 = vector.broadcast %338 : vector<1x32xf32> to vector<16x32xf32>
    %360 = arith.mulf %359, %358 : vector<16x32xf32>
    %361 = vector.broadcast %340 : vector<1x32xf32> to vector<16x32xf32>
    %362 = arith.addf %360, %361 : vector<16x32xf32>
    %c1_139 = arith.constant 1 : index
    %c0_140 = arith.constant 0 : index
    %c0_141 = arith.constant 0 : index
    %363 = vector.load %arg10[%c1_139, %c0_140, %c0_141] : memref<2x32x64xf32, #tpu.memory_space<vmem>>, vector<1x32x64xf32>
    %364 = vector.shape_cast %363 : vector<1x32x64xf32> to vector<32x64xf32>
    %cst_142 = arith.constant dense<0.000000e+00> : vector<16x64xf32>
    %365 = tpu.matmul %362, %364, %cst_142 {dimension_numbers = #tpu.dot_dimension_numbers<[1], [0], [0], [1], [0, 0, 1, 1], [], []>} : vector<16x32xf32>, vector<32x64xf32>, vector<16x64xf32> -> vector<16x64xf32>
    %c1_143 = arith.constant 1 : index
    %c0_144 = arith.constant 0 : index
    %c0_145 = arith.constant 0 : index
    %366 = vector.load %arg11[%c1_143, %c0_144, %c0_145] : memref<2x1x64xf32, #tpu.memory_space<vmem>>, vector<1x1x64xf32>
    %367 = vector.shape_cast %366 : vector<1x1x64xf32> to vector<1x64xf32>
    %368 = vector.broadcast %367 : vector<1x64xf32> to vector<16x64xf32>
    %369 = arith.addf %365, %368 : vector<16x64xf32>
    %cst_146 = arith.constant 0.000000e+00 : f32
    %370 = vector.broadcast %cst_146 : f32 to vector<16x64xf32>
    %371 = arith.maximumf %369, %370 : vector<16x64xf32>
    %c1_147 = arith.constant 1 : index
    %c0_148 = arith.constant 0 : index
    %c0_149 = arith.constant 0 : index
    %372 = vector.load %arg12[%c1_147, %c0_148, %c0_149] : memref<2x64x32xf32, #tpu.memory_space<vmem>>, vector<1x64x32xf32>
    %373 = vector.shape_cast %372 : vector<1x64x32xf32> to vector<64x32xf32>
    %cst_150 = arith.constant dense<0.000000e+00> : vector<16x32xf32>
    %374 = tpu.matmul %371, %373, %cst_150 {dimension_numbers = #tpu.dot_dimension_numbers<[1], [0], [0], [1], [0, 0, 1, 1], [], []>} : vector<16x64xf32>, vector<64x32xf32>, vector<16x32xf32> -> vector<16x32xf32>
    %375 = arith.addf %336, %374 : vector<16x32xf32>
    %c1_151 = arith.constant 1 : index
    %c0_152 = arith.constant 0 : index
    %c0_153 = arith.constant 0 : index
    %376 = vector.load %arg13[%c1_151, %c0_152, %c0_153] : memref<2x1x32xf32, #tpu.memory_space<vmem>>, vector<1x1x32xf32>
    %377 = vector.shape_cast %376 : vector<1x1x32xf32> to vector<1x32xf32>
    %378 = vector.broadcast %377 : vector<1x32xf32> to vector<16x32xf32>
    %379 = arith.addf %375, %378 : vector<16x32xf32>
    %c0_154 = arith.constant 0 : index
    %c0_155 = arith.constant 0 : index
    %380 = vector.load %arg14[%c0_154, %c0_155] : memref<1x32xf32, #tpu.memory_space<vmem>>, vector<1x32xf32>
    %c0_156 = arith.constant 0 : index
    %c0_157 = arith.constant 0 : index
    %381 = vector.load %arg15[%c0_156, %c0_157] : memref<1x32xf32, #tpu.memory_space<vmem>>, vector<1x32xf32>
    %cst_158 = arith.constant dense<0.000000e+00> : vector<16xf32>
    %382 = vector.multi_reduction <add>, %379, %cst_158 [1] : vector<16x32xf32> to vector<16xf32>
    %383 = vector.shape_cast %382 : vector<16xf32> to vector<16x1xf32>
    %cst_159 = arith.constant 3.200000e+01 : f32
    %384 = vector.broadcast %cst_159 : f32 to vector<16x1xf32>
    %385 = arith.divf %383, %384 : vector<16x1xf32>
    %386 = vector.broadcast %385 : vector<16x1xf32> to vector<16x32xf32>
    %387 = arith.subf %379, %386 : vector<16x32xf32>
    %388 = arith.mulf %387, %387 : vector<16x32xf32>
    %cst_160 = arith.constant dense<0.000000e+00> : vector<16xf32>
    %389 = vector.multi_reduction <add>, %388, %cst_160 [1] : vector<16x32xf32> to vector<16xf32>
    %390 = vector.shape_cast %389 : vector<16xf32> to vector<16x1xf32>
    %cst_161 = arith.constant 0.0322580636 : f32
    %391 = vector.broadcast %cst_161 : f32 to vector<16x1xf32>
    %392 = arith.mulf %390, %391 : vector<16x1xf32>
    %393 = vector.broadcast %385 : vector<16x1xf32> to vector<16x32xf32>
    %394 = arith.subf %379, %393 : vector<16x32xf32>
    %cst_162 = arith.constant 9.99999997E-7 : f32
    %395 = vector.broadcast %cst_162 : f32 to vector<16x1xf32>
    %396 = arith.addf %392, %395 : vector<16x1xf32>
    %397 = math.rsqrt %396 : vector<16x1xf32>
    %398 = vector.broadcast %397 : vector<16x1xf32> to vector<16x32xf32>
    %399 = arith.mulf %394, %398 : vector<16x32xf32>
    %400 = vector.broadcast %380 : vector<1x32xf32> to vector<16x32xf32>
    %401 = arith.mulf %400, %399 : vector<16x32xf32>
    %402 = vector.broadcast %381 : vector<1x32xf32> to vector<16x32xf32>
    %403 = arith.addf %401, %402 : vector<16x32xf32>
    %c0_163 = arith.constant 0 : index
    %c0_164 = arith.constant 0 : index
    %404 = vector.load %arg16[%c0_163, %c0_164] : memref<16x32xf32, #tpu.memory_space<vmem>>, vector<16x32xf32>
    tpu.vector_store %arg16[%c0_163, %c0_164], %403 {strides = array<i32>} : memref<16x32xf32, #tpu.memory_space<vmem>>, vector<16x32xf32>,
    return
  }
}

</mosaic_0001>

<llo_original>
// kernel: encoder_forward.1
$region0: #{encoder_forward.1}
  #allocation0 [shape = 'u32[]', space=smem, size = 0x4, offset = 0x4, fixed_abs, tag = 'smem constant byte address 0x4 - core index']
  #allocation1 [shape = 'u32[144,128]{1,0:T(1,128)}', space=vmem, size = 0x12000, scoped, tag = 'internal scratch']
  %s0 = inlined_call_operand.vmem [shape: f32[16,32], index: 0, kind: input, shape index: {}]
  %s1 = inlined_call_operand.vmem [shape: f32[2,1,8], index: 1, kind: input, shape index: {}]
  %s2 = inlined_call_operand.vmem [shape: f32[2,32,96], index: 2, kind: input, shape index: {}]
  %s3 = inlined_call_operand.vmem [shape: f32[2,1,96], index: 3, kind: input, shape index: {}]
  %s4 = inlined_call_operand.vmem [shape: f32[2,32,32], index: 4, kind: input, shape index: {}]
  %s5 = inlined_call_operand.vmem [shape: f32[2,1,32], index: 5, kind: input, shape index: {}]
  %s6 = inlined_call_operand.vmem [shape: f32[2,1,32], index: 6, kind: input, shape index: {}]
  %s7 = inlined_call_operand.vmem [shape: f32[2,1,32], index: 7, kind: input, shape index: {}]
  %s8 = inlined_call_operand.vmem [shape: f32[2,1,32], index: 8, kind: input, shape index: {}]
  %s9 = inlined_call_operand.vmem [shape: f32[2,1,32], index: 9, kind: input, shape index: {}]
  %s10 = inlined_call_operand.vmem [shape: f32[2,32,64], index: 10, kind: input, shape index: {}]
  %s11 = inlined_call_operand.vmem [shape: f32[2,1,64], index: 11, kind: input, shape index: {}]
  %s12 = inlined_call_operand.vmem [shape: f32[2,64,32], index: 12, kind: input, shape index: {}]
  %s13 = inlined_call_operand.vmem [shape: f32[2,1,32], index: 13, kind: input, shape index: {}]
  %s14 = inlined_call_operand.vmem [shape: f32[1,32], index: 14, kind: input, shape index: {}]
  %s15 = inlined_call_operand.vmem [shape: f32[1,32], index: 15, kind: input, shape index: {}]
  %s16 = inlined_call_operand.hbm [shape: f32[16,32], index: 16, kind: output, shape index: {}]
  %s17 = sld [smem:[#allocation0]]
  $region74: #{encoder_forward.1} parent=0
    _
  %s19 = ssub.s32 1, %s17
  %s20 = scalar_select 0, %s19, %s17
  $region1: #{encoder_forward.1} parent=0
    #allocation2 [shape = 'u8[8192]{0}', space=vmem, size = 0x2000, scoped, tag = 'output window, operand 0, single buffered']
    #allocation3 [shape = 's32[1]{0}', space=sflag, size = 0x4, scoped, tag = 'scoped memory for encoder_forward.1']
    %21 = vsyncpa [#allocation3], 0
    // Predicated region
    $region2: #{encoder_forward.1} parent=1 // pred_check
      _
    $region3: #{encoder_forward.1} parent=1 // pred_check_branch
      %23 = sbr.rel (0) target = $region5
    $region4: #{encoder_forward.1} parent=1 // pred_region
      _
    $region5: #{encoder_forward.1} parent=1 // pred_fallthru
      _
    // Predicated region
    $region6: #{encoder_forward.1} parent=1 // pred_check
      _
    $region7: #{encoder_forward.1} parent=1 // pred_check_branch
      %25 = sbr.rel (0) target = $region9
    $region8: #{encoder_forward.1} parent=1 // pred_region
      _
    $region9: #{encoder_forward.1} parent=1 // pred_fallthru
      _
    // Predicated region
    $region10: #{encoder_forward.1} parent=1 // pred_check
      _
    $region11: #{encoder_forward.1} parent=1 // pred_check_branch
      %27 = sbr.rel (0) target = $region13
    $region12: #{encoder_forward.1} parent=1 // pred_region
      _
    $region13: #{encoder_forward.1} parent=1 // pred_fallthru
      _
    // Predicated region
    $region14: #{encoder_forward.1} parent=1 // pred_check
      _
    $region15: #{encoder_forward.1} parent=1 // pred_check_branch
      %29 = sbr.rel (0) target = $region17
    $region16: #{encoder_forward.1} parent=1 // pred_region
      _
    $region17: #{encoder_forward.1} parent=1 // pred_fallthru
      _
    // Predicated region
    $region18: #{encoder_forward.1} parent=1 // pred_check
      _
    $region19: #{encoder_forward.1} parent=1 // pred_check_branch
      %31 = sbr.rel (0) target = $region21
    $region20: #{encoder_forward.1} parent=1 // pred_region
      _
    $region21: #{encoder_forward.1} parent=1 // pred_fallthru
      _
    // Predicated region
    $region22: #{encoder_forward.1} parent=1 // pred_check
      _
    $region23: #{encoder_forward.1} parent=1 // pred_check_branch
      %33 = sbr.rel (0) target = $region25
    $region24: #{encoder_forward.1} parent=1 // pred_region
      _
    $region25: #{encoder_forward.1} parent=1 // pred_fallthru
      _
    // Predicated region
    $region26: #{encoder_forward.1} parent=1 // pred_check
      _
    $region27: #{encoder_forward.1} parent=1 // pred_check_branch
      %35 = sbr.rel (0) target = $region29
    $region28: #{encoder_forward.1} parent=1 // pred_region
      _
    $region29: #{encoder_forward.1} parent=1 // pred_fallthru
      _
    // Predicated region
    $region30: #{encoder_forward.1} parent=1 // pred_check
      _
    $region31: #{encoder_forward.1} parent=1 // pred_check_branch
      %37 = sbr.rel (0) target = $region33
    $region32: #{encoder_forward.1} parent=1 // pred_region
      _
    $region33: #{encoder_forward.1} parent=1 // pred_fallthru
      _
    // Predicated region
    $region34: #{encoder_forward.1} parent=1 // pred_check
      _
    $region35: #{encoder_forward.1} parent=1 // pred_check_branch
      %39 = sbr.rel (0) target = $region37
    $region36: #{encoder_forward.1} parent=1 // pred_region
      _
    $region37: #{encoder_forward.1} parent=1 // pred_fallthru
      _
    // Predicated region
    $region38: #{encoder_forward.1} parent=1 // pred_check
      _
    $region39: #{encoder_forward.1} parent=1 // pred_check_branch
      %41 = sbr.rel (0) target = $region41
    $region40: #{encoder_forward.1} parent=1 // pred_region
      _
    $region41: #{encoder_forward.1} parent=1 // pred_fallthru
      _
    // Predicated region
    $region42: #{encoder_forward.1} parent=1 // pred_check
      _
    $region43: #{encoder_forward.1} parent=1 // pred_check_branch
      %43 = sbr.rel (0) target = $region45
    $region44: #{encoder_forward.1} parent=1 // pred_region
      _
    $region45: #{encoder_forward.1} parent=1 // pred_fallthru
      _
    // Predicated region
    $region46: #{encoder_forward.1} parent=1 // pred_check
      _
    $region47: #{encoder_forward.1} parent=1 // pred_check_branch
      %45 = sbr.rel (0) target = $region49
    $region48: #{encoder_forward.1} parent=1 // pred_region
      _
    $region49: #{encoder_forward.1} parent=1 // pred_fallthru
      _
    // Predicated region
    $region50: #{encoder_forward.1} parent=1 // pred_check
      _
    $region51: #{encoder_forward.1} parent=1 // pred_check_branch
      %47 = sbr.rel (0) target = $region53
    $region52: #{encoder_forward.1} parent=1 // pred_region
      _
    $region53: #{encoder_forward.1} parent=1 // pred_fallthru
      _
    // Predicated region
    $region54: #{encoder_forward.1} parent=1 // pred_check
      _
    $region55: #{encoder_forward.1} parent=1 // pred_check_branch
      %49 = sbr.rel (0) target = $region57
    $region56: #{encoder_forward.1} parent=1 // pred_region
      _
    $region57: #{encoder_forward.1} parent=1 // pred_fallthru
      _
    // Predicated region
    $region58: #{encoder_forward.1} parent=1 // pred_check
      _
    $region59: #{encoder_forward.1} parent=1 // pred_check_branch
      %51 = sbr.rel (0) target = $region61
    $region60: #{encoder_forward.1} parent=1 // pred_region
      _
    $region61: #{encoder_forward.1} parent=1 // pred_fallthru
      _
    // Predicated region
    $region62: #{encoder_forward.1} parent=1 // pred_check
      _
    $region63: #{encoder_forward.1} parent=1 // pred_check_branch
      %53 = sbr.rel (0) target = $region65
    $region64: #{encoder_forward.1} parent=1 // pred_region
      _
    $region65: #{encoder_forward.1} parent=1 // pred_fallthru
      _
    %v54 = vld [vmem:[%s0] sm:$0xff]
    %v55 = vld [vmem:[%s0 + $0x8] sm:$0xff]
    %v56 = vld [vmem:[%s1] sm:$0x1]
    %v57 = vld [vmem:[%s1 + $0x1] sm:$0x1]
    %v58 = vsub.f32 1.0, %v56
    %v59 = vsub.f32 1.0, %v57
    %v60 = vmul.f32 %v58, -1e+09
    %v61 = vmul.f32 %v59, -1e+09
    %v64 = vlaneseq
    %v65 = vshrl.u32 %v64, 7
    %v66 = vsub.s32 0, %v65
    %v67 = vrot.slane %v60, %v66
    %v68 = vlaneseq
    %v69 = vshrl.u32 %v68, 7
    %v70 = vsub.s32 0, %v69
    %v71 = vrot.slane %v61, %v70
    %v74 = vld [vmem:[%s6] sm:$0x1]
    %v75 = vld [vmem:[%s7] sm:$0x1]
    %vm76 = vcmask 261120
    %v77 = vsel %vm76, %v54, 0.0
    %78 = vadd.xlane.f32.xlu0 %v77
    %v79 = vpop.xlane.xlu0 %78
    %v80 = vsel %vm76, %v55, 0.0
    %81 = vadd.xlane.f32.xlu0 %v80
    %v82 = vpop.xlane.xlu0 %81
    %v83 = vrcp.pop 32.0
    %v84 = vmul.f32 %v79, %v83
    %v85 = vmul.f32 %v82, %v83
    %v86 = vsub.f32 %v54, %v84
    %v87 = vsub.f32 %v55, %v85
    %v88 = vmul.f32 %v86, %v86
    %v89 = vmul.f32 %v87, %v87
    %v90 = vsel %vm76, %v88, 0.0
    %91 = vadd.xlane.f32.xlu0 %v90
    %v92 = vpop.xlane.xlu0 %91
    %v93 = vsel %vm76, %v89, 0.0
    %94 = vadd.xlane.f32.xlu0 %v93
    %v95 = vpop.xlane.xlu0 %94
    %v96 = vmul.f32 %v92, 0.032258064
    %v97 = vmul.f32 %v95, 0.032258064
    %v98 = vadd.f32 %v96, 1e-06
    %v99 = vadd.f32 %v97, 1e-06
    %v100 = vrsqrt.pop %v98
    %v101 = vrsqrt.pop %v99
    %v102 = vmul.f32 %v86, %v100
    %v103 = vmul.f32 %v87, %v101
    %v105 = vlaneseq
    %v106 = vshrl.u32 %v105, 7
    %v107 = vsub.s32 0, %v106
    %v108 = vrot.slane %v74, %v107
    %v110 = vmul.f32 %v108, %v102
    %v111 = vmul.f32 %v108, %v103
    %v113 = vlaneseq
    %v114 = vshrl.u32 %v113, 7
    %v115 = vsub.s32 0, %v114
    %v116 = vrot.slane %v75, %v115
    %v118 = vadd.f32 %v110, %v116
    %v119 = vadd.f32 %v111, %v116
    %v120 = vld [vmem:[%s2] sm:$0xff]
    %v121 = vld [vmem:[%s2 + $0x8] sm:$0xff]
    %v122 = vld [vmem:[%s2 + $0x10] sm:$0xff]
    %v123 = vld [vmem:[%s2 + $0x18] sm:$0xff]
    %v124 = vld [vmem:[%s3] sm:$0x1]
    %v126 = vlaneseq
    %v127 = vshrl.u32 %v126, 7
    %v128 = vsub.s32 0, %v127
    %v129 = vrot.slane %v124, %v128
    %v132 = vsel %vm76, %v118, 0
    %v135 = vsel %vm76, %v119, 0
    %137 = vmatprep.subr.mxu0 0.0
    %138 = vmatpush1.msra.mxu0 %v120
    %139 = vmatprep.subr.mxu0 0.0
    %140 = vmatpush1.msra.mxu0 %v121
    %141 = vmatprep.subr.mxu0 0.0
    %142 = vmatpush1.msra.mxu0 %v122
    %143 = vmatprep.subr.mxu0 0.0
    %144 = vmatpush1.msra.mxu0 %v123
    %145 = vmatprep.subr.mxu0 0.0
    %146 = vmatpush1.msra.mxu0 0.0
    %147 = vmatprep.subr.mxu0 0.0
    %148 = vmatpush1.msra.mxu0 0.0
    %149 = vmatprep.subr.mxu0 0.0
    %150 = vmatpush1.msra.mxu0 0.0
    %151 = vmatprep.subr.mxu0 0.0
    %152 = vmatpush1.msra.mxu0 0.0
    %153 = vmatprep.subr.mxu0 0.0
    %154 = vmatpush1.msra.mxu0 0.0
    %155 = vmatprep.subr.mxu0 0.0
    %156 = vmatpush1.msra.mxu0 0.0
    %157 = vmatprep.subr.mxu0 0.0
    %158 = vmatpush1.msra.mxu0 0.0
    %159 = vmatprep.subr.mxu0 0.0
    %160 = vmatpush1.msra.mxu0 0.0
    %161 = vmatprep.subr.mxu0 0.0
    %162 = vmatpush1.msra.mxu0 0.0
    %163 = vmatprep.subr.mxu0 0.0
    %164 = vmatpush1.msra.mxu0 0.0
    %165 = vmatprep.subr.mxu0 0.0
    %166 = vmatpush1.msra.mxu0 0.0
    %167 = vmatprep.subr.mxu0 0.0
    %168 = vmatpush1.msra.mxu0 0.0
    %169 = vmatprep.subr.mxu0 0.0
    %170 = vmatpush1.msra.mxu0 0.0
    %171 = vmatprep.subr.mxu0 0.0
    %172 = vmatpush1.msra.mxu0 0.0
    %173 = vmatprep.subr.mxu0 0.0
    %174 = vmatpush1.msra.mxu0 0.0
    %175 = vmatprep.subr.mxu0 0.0
    %176 = vmatpush1.msra.mxu0 0.0
    %177 = vmatprep.subr.mxu0 0.0
    %178 = vmatpush1.msra.mxu0 0.0
    %179 = vmatprep.subr.mxu0 0.0
    %180 = vmatpush1.msra.mxu0 0.0
    %181 = vmatprep.subr.mxu0 0.0
    %182 = vmatpush1.msra.mxu0 0.0
    %183 = vmatprep.subr.mxu0 0.0
    %184 = vmatpush1.msra.mxu0 0.0
    %185 = vmatprep.subr.mxu0 0.0
    %186 = vmatpush1.msra.mxu0 0.0
    %187 = vmatprep.subr.mxu0 0.0
    %188 = vmatpush1.msra.mxu0 0.0
    %189 = vmatprep.subr.mxu0 0.0
    %190 = vmatpush1.msra.mxu0 0.0
    %191 = vmatprep.subr.mxu0 0.0
    %192 = vmatpush1.msra.mxu0 0.0
    %193 = vmatprep.subr.mxu0 0.0
    %194 = vmatpush1.msra.mxu0 0.0
    %195 = vmatprep.subr.mxu0 0.0
    %196 = vmatpush1.msra.mxu0 0.0
    %197 = vmatprep.subr.mxu0 0.0
    %198 = vmatpush1.msra.mxu0 0.0
    %199 = vmatprep.subr.mxu0 0.0
    %200 = vmatpush1.msra.mxu0 0.0
    %201 = vmatprep.mubr.f32.mxu0 0.0
    %202 = vmatmul.mubr.f32.gmra.mrb[0].mxu0 %v132
    %v203 = vpop.f32.mrb[0].mxu0
    %v204 = vadd.f32 %v129, %v203
    %v205 = vpop.f32.mrb[0].mxu0
    %206 = vmatprep.mubr.f32.mxu0 0.0
    %207 = vmatmul.mubr.f32.gmra.mrb[0].mxu0 %v135
    %v208 = vpop.f32.mrb[0].mxu0
    %v209 = vadd.f32 %v129, %v208
    %v210 = vpop.f32.mrb[0].mxu0
    %211 = vdwg.mxu0
    %213 = vrot.lane.b32.xlu0 %v204, 96
    %v214 = vpop.permute.xlu0 %213
    %vm215 = vcmask 64512
    %v216 = vsel %vm215, %v204, 0
    %v218 = vsel %vm215, %v214, 0
    %220 = vmatprep.subr.mxu0 0.0
    %221 = vmatpush1.xpose.msra.mxu0 %v218
    %222 = vmatprep.subr.mxu0 0.0
    %223 = vmatpush1.xpose.msra.mxu0 0.0
    %224 = vmatprep.subr.mxu0 0.0
    %225 = vmatpush1.xpose.msra.mxu0 0.0
    %226 = vmatprep.subr.mxu0 0.0
    %227 = vmatpush1.xpose.msra.mxu0 0.0
    %228 = vmatprep.subr.mxu0 0.0
    %229 = vmatpush1.xpose.msra.mxu0 0.0
    %230 = vmatprep.subr.mxu0 0.0
    %231 = vmatpush1.xpose.msra.mxu0 0.0
    %232 = vmatprep.subr.mxu0 0.0
    %233 = vmatpush1.xpose.msra.mxu0 0.0
    %234 = vmatprep.subr.mxu0 0.0
    %235 = vmatpush1.xpose.msra.mxu0 0.0
    %236 = vmatprep.subr.mxu0 0.0
    %237 = vmatpush1.xpose.msra.mxu0 0.0
    %238 = vmatprep.subr.mxu0 0.0
    %239 = vmatpush1.xpose.msra.mxu0 0.0
    %240 = vmatprep.subr.mxu0 0.0
    %241 = vmatpush1.xpose.msra.mxu0 0.0
    %242 = vmatprep.subr.mxu0 0.0
    %243 = vmatpush1.xpose.msra.mxu0 0.0
    %244 = vmatprep.subr.mxu0 0.0
    %245 = vmatpush1.xpose.msra.mxu0 0.0
    %246 = vmatprep.subr.mxu0 0.0
    %247 = vmatpush1.xpose.msra.mxu0 0.0
    %248 = vmatprep.subr.mxu0 0.0
    %249 = vmatpush1.xpose.msra.mxu0 0.0
    %250 = vmatprep.subr.mxu0 0.0
    %251 = vmatpush1.xpose.msra.mxu0 0.0
    %252 = vmatprep.subr.mxu0 0.0
    %253 = vmatpush1.xpose.msra.mxu0 0.0
    %254 = vmatprep.subr.mxu0 0.0
    %255 = vmatpush1.xpose.msra.mxu0 0.0
    %256 = vmatprep.subr.mxu0 0.0
    %257 = vmatpush1.xpose.msra.mxu0 0.0
    %258 = vmatprep.subr.mxu0 0.0
    %259 = vmatpush1.xpose.msra.mxu0 0.0
    %260 = vmatprep.subr.mxu0 0.0
    %261 = vmatpush1.xpose.msra.mxu0 0.0
    %262 = vmatprep.subr.mxu0 0.0
    %263 = vmatpush1.xpose.msra.mxu0 0.0
    %264 = vmatprep.subr.mxu0 0.0
    %265 = vmatpush1.xpose.msra.mxu0 0.0
    %266 = vmatprep.subr.mxu0 0.0
    %267 = vmatpush1.xpose.msra.mxu0 0.0
    %268 = vmatprep.subr.mxu0 0.0
    %269 = vmatpush1.xpose.msra.mxu0 0.0
    %270 = vmatprep.subr.mxu0 0.0
    %271 = vmatpush1.xpose.msra.mxu0 0.0
    %272 = vmatprep.subr.mxu0 0.0
    %273 = vmatpush1.xpose.msra.mxu0 0.0
    %274 = vmatprep.subr.mxu0 0.0
    %275 = vmatpush1.xpose.msra.mxu0 0.0
    %276 = vmatprep.subr.mxu0 0.0
    %277 = vmatpush1.xpose.msra.mxu0 0.0
    %278 = vmatprep.subr.mxu0 0.0
    %279 = vmatpush1.xpose.msra.mxu0 0.0
    %280 = vmatprep.subr.mxu0 0.0
    %281 = vmatpush1.xpose.msra.mxu0 0.0
    %282 = vmatprep.subr.mxu0 0.0
    %283 = vmatpush1.xpose.msra.mxu0 0.0
    %284 = vmatprep.mubr.f32.mxu0 0.0
    %285 = vmatmul.mubr.f32.gmra.mrb[0].mxu0 %v216
    %v286 = vpop.f32.mrb[0].mxu0
    %v287 = vadd.f32 0.0, %v286
    %v288 = vpop.f32.mrb[0].mxu0
    %289 = vdwg.mxu0
    %291 = vrot.lane.b32.xlu0 %v209, 96
    %v292 = vpop.permute.xlu0 %291
    %v293 = vsel %vm215, %v209, 0
    %v295 = vsel %vm215, %v292, 0
    %297 = vmatprep.subr.mxu0 0.0
    %298 = vmatpush1.xpose.msra.mxu0 %v295
    %299 = vmatprep.subr.mxu0 0.0
    %300 = vmatpush1.xpose.msra.mxu0 0.0
    %301 = vmatprep.subr.mxu0 0.0
    %302 = vmatpush1.xpose.msra.mxu0 0.0
    %303 = vmatprep.subr.mxu0 0.0
    %304 = vmatpush1.xpose.msra.mxu0 0.0
    %305 = vmatprep.subr.mxu0 0.0
    %306 = vmatpush1.xpose.msra.mxu0 0.0
    %307 = vmatprep.subr.mxu0 0.0
    %308 = vmatpush1.xpose.msra.mxu0 0.0
    %309 = vmatprep.subr.mxu0 0.0
    %310 = vmatpush1.xpose.msra.mxu0 0.0
    %311 = vmatprep.subr.mxu0 0.0
    %312 = vmatpush1.xpose.msra.mxu0 0.0
    %313 = vmatprep.subr.mxu0 0.0
    %314 = vmatpush1.xpose.msra.mxu0 0.0
    %315 = vmatprep.subr.mxu0 0.0
    %316 = vmatpush1.xpose.msra.mxu0 0.0
    %317 = vmatprep.subr.mxu0 0.0
    %318 = vmatpush1.xpose.msra.mxu0 0.0
    %319 = vmatprep.subr.mxu0 0.0
    %320 = vmatpush1.xpose.msra.mxu0 0.0
    %321 = vmatprep.subr.mxu0 0.0
    %322 = vmatpush1.xpose.msra.mxu0 0.0
    %323 = vmatprep.subr.mxu0 0.0
    %324 = vmatpush1.xpose.msra.mxu0 0.0
    %325 = vmatprep.subr.mxu0 0.0
    %326 = vmatpush1.xpose.msra.mxu0 0.0
    %327 = vmatprep.subr.mxu0 0.0
    %328 = vmatpush1.xpose.msra.mxu0 0.0
    %329 = vmatprep.subr.mxu0 0.0
    %330 = vmatpush1.xpose.msra.mxu0 0.0
    %331 = vmatprep.subr.mxu0 0.0
    %332 = vmatpush1.xpose.msra.mxu0 0.0
    %333 = vmatprep.subr.mxu0 0.0
    %334 = vmatpush1.xpose.msra.mxu0 0.0
    %335 = vmatprep.subr.mxu0 0.0
    %336 = vmatpush1.xpose.msra.mxu0 0.0
    %337 = vmatprep.subr.mxu0 0.0
    %338 = vmatpush1.xpose.msra.mxu0 0.0
    %339 = vmatprep.subr.mxu0 0.0
    %340 = vmatpush1.xpose.msra.mxu0 0.0
    %341 = vmatprep.subr.mxu0 0.0
    %342 = vmatpush1.xpose.msra.mxu0 0.0
    %343 = vmatprep.subr.mxu0 0.0
    %344 = vmatpush1.xpose.msra.mxu0 0.0
    %345 = vmatprep.subr.mxu0 0.0
    %346 = vmatpush1.xpose.msra.mxu0 0.0
    %347 = vmatprep.subr.mxu0 0.0
    %348 = vmatpush1.xpose.msra.mxu0 0.0
    %349 = vmatprep.subr.mxu0 0.0
    %350 = vmatpush1.xpose.msra.mxu0 0.0
    %351 = vmatprep.subr.mxu0 0.0
    %352 = vmatpush1.xpose.msra.mxu0 0.0
    %353 = vmatprep.subr.mxu0 0.0
    %354 = vmatpush1.xpose.msra.mxu0 0.0
    %355 = vmatprep.subr.mxu0 0.0
    %356 = vmatpush1.xpose.msra.mxu0 0.0
    %357 = vmatprep.subr.mxu0 0.0
    %358 = vmatpush1.xpose.msra.mxu0 0.0
    %359 = vmatprep.subr.mxu0 0.0
    %360 = vmatpush1.xpose.msra.mxu0 0.0
    %361 = vmatprep.mubr.f32.mxu0 0.0
    %362 = vmatmul.mubr.f32.gmra.mrb[0].mxu0 %v293
    %v363 = vpop.f32.mrb[0].mxu0
    %v364 = vadd.f32 0.0, %v363
    %v365 = vpop.f32.mrb[0].mxu0
    %366 = vdwg.mxu0
    %v367 = vmul.f32 %v287, 0.35355338
    %v368 = vmul.f32 %v364, 0.35355338
    %v369 = vadd.f32 %v367, %v67
    %v370 = vadd.f32 %v368, %v71
    %v371 = vsel %vm215, %v369, -inf
    %372 = vmax.xlane.f32.xlu0 %v371
    %v373 = vpop.xlane.xlu0 %372
    %v374 = vsel %vm215, %v370, -inf
    %375 = vmax.xlane.f32.xlu0 %v374
    %v376 = vpop.xlane.xlu0 %375
    %v377 = vsub.f32 %v369, %v373
    %v378 = vsub.f32 %v370, %v376
    %v379 = vmul.f32 %v377, 1.442695
    %v380 = vpow.pop %v379
    %v381 = vmul.f32 %v378, 1.442695
    %v382 = vpow.pop %v381
    %v383 = vsel %vm215, %v380, 0.0
    %384 = vadd.xlane.f32.xlu0 %v383
    %v385 = vpop.xlane.xlu0 %384
    %v386 = vsel %vm215, %v382, 0.0
    %387 = vadd.xlane.f32.xlu0 %v386
    %v388 = vpop.xlane.xlu0 %387
    %v389 = vrcp.pop %v385
    %v390 = vrcp.pop %v388
    %v391 = vmul.f32 %v385, %v389
    %v392 = vmul.f32 %v388, %v390
    %v393 = vsub.f32 2.0, %v391
    %v394 = vsub.f32 2.0, %v392
    %v395 = vmul.f32 %v389, %v393
    %v396 = vmul.f32 %v390, %v394
    %v397 = vmul.f32 %v380, %v395
    %v398 = vmul.f32 %v382, %v396
    %399 = vrot.lane.b32.xlu0 %v204, 64
    %v400 = vpop.permute.xlu0 %399
    %v403 = vsel %vm215, %v397, 0
    %405 = vmatprep.subr.mxu0 0.0
    %406 = vmatpush1.msra.mxu0 %v400
    %407 = vmatprep.subr.mxu0 0.0
    %408 = vmatpush1.msra.mxu0 0.0
    %409 = vmatprep.subr.mxu0 0.0
    %410 = vmatpush1.msra.mxu0 0.0
    %411 = vmatprep.subr.mxu0 0.0
    %412 = vmatpush1.msra.mxu0 0.0
    %413 = vmatprep.subr.mxu0 0.0
    %414 = vmatpush1.msra.mxu0 0.0
    %415 = vmatprep.subr.mxu0 0.0
    %416 = vmatpush1.msra.mxu0 0.0
    %417 = vmatprep.subr.mxu0 0.0
    %418 = vmatpush1.msra.mxu0 0.0
    %419 = vmatprep.subr.mxu0 0.0
    %420 = vmatpush1.msra.mxu0 0.0
    %421 = vmatprep.subr.mxu0 0.0
    %422 = vmatpush1.msra.mxu0 0.0
    %423 = vmatprep.subr.mxu0 0.0
    %424 = vmatpush1.msra.mxu0 0.0
    %425 = vmatprep.subr.mxu0 0.0
    %426 = vmatpush1.msra.mxu0 0.0
    %427 = vmatprep.subr.mxu0 0.0
    %428 = vmatpush1.msra.mxu0 0.0
    %429 = vmatprep.subr.mxu0 0.0
    %430 = vmatpush1.msra.mxu0 0.0
    %431 = vmatprep.subr.mxu0 0.0
    %432 = vmatpush1.msra.mxu0 0.0
    %433 = vmatprep.subr.mxu0 0.0
    %434 = vmatpush1.msra.mxu0 0.0
    %435 = vmatprep.subr.mxu0 0.0
    %436 = vmatpush1.msra.mxu0 0.0
    %437 = vmatprep.subr.mxu0 0.0
    %438 = vmatpush1.msra.mxu0 0.0
    %439 = vmatprep.subr.mxu0 0.0
    %440 = vmatpush1.msra.mxu0 0.0
    %441 = vmatprep.subr.mxu0 0.0
    %442 = vmatpush1.msra.mxu0 0.0
    %443 = vmatprep.subr.mxu0 0.0
    %444 = vmatpush1.msra.mxu0 0.0
    %445 = vmatprep.subr.mxu0 0.0
    %446 = vmatpush1.msra.mxu0 0.0
    %447 = vmatprep.subr.mxu0 0.0
    %448 = vmatpush1.msra.mxu0 0.0
    %449 = vmatprep.subr.mxu0 0.0
    %450 = vmatpush1.msra.mxu0 0.0
    %451 = vmatprep.subr.mxu0 0.0
    %452 = vmatpush1.msra.mxu0 0.0
    %453 = vmatprep.subr.mxu0 0.0
    %454 = vmatpush1.msra.mxu0 0.0
    %455 = vmatprep.subr.mxu0 0.0
    %456 = vmatpush1.msra.mxu0 0.0
    %457 = vmatprep.subr.mxu0 0.0
    %458 = vmatpush1.msra.mxu0 0.0
    %459 = vmatprep.subr.mxu0 0.0
    %460 = vmatpush1.msra.mxu0 0.0
    %461 = vmatprep.subr.mxu0 0.0
    %462 = vmatpush1.msra.mxu0 0.0
    %463 = vmatprep.subr.mxu0 0.0
    %464 = vmatpush1.msra.mxu0 0.0
    %465 = vmatprep.subr.mxu0 0.0
    %466 = vmatpush1.msra.mxu0 0.0
    %467 = vmatprep.subr.mxu0 0.0
    %468 = vmatpush1.msra.mxu0 0.0
    %469 = vmatprep.mubr.f32.mxu0 0.0
    %470 = vmatmul.mubr.f32.gmra.mrb[0].mxu0 %v403
    %v471 = vpop.f32.mrb[0].mxu0
    %v472 = vadd.f32 0.0, %v471
    %v473 = vpop.f32.mrb[0].mxu0
    %474 = vdwg.mxu0
    %475 = vrot.lane.b32.xlu0 %v209, 64
    %v476 = vpop.permute.xlu0 %475
    %v479 = vsel %vm215, %v398, 0
    %481 = vmatprep.subr.mxu0 0.0
    %482 = vmatpush1.msra.mxu0 %v476
    %483 = vmatprep.subr.mxu0 0.0
    %484 = vmatpush1.msra.mxu0 0.0
    %485 = vmatprep.subr.mxu0 0.0
    %486 = vmatpush1.msra.mxu0 0.0
    %487 = vmatprep.subr.mxu0 0.0
    %488 = vmatpush1.msra.mxu0 0.0
    %489 = vmatprep.subr.mxu0 0.0
    %490 = vmatpush1.msra.mxu0 0.0
    %491 = vmatprep.subr.mxu0 0.0
    %492 = vmatpush1.msra.mxu0 0.0
    %493 = vmatprep.subr.mxu0 0.0
    %494 = vmatpush1.msra.mxu0 0.0
    %495 = vmatprep.subr.mxu0 0.0
    %496 = vmatpush1.msra.mxu0 0.0
    %497 = vmatprep.subr.mxu0 0.0
    %498 = vmatpush1.msra.mxu0 0.0
    %499 = vmatprep.subr.mxu0 0.0
    %500 = vmatpush1.msra.mxu0 0.0
    %501 = vmatprep.subr.mxu0 0.0
    %502 = vmatpush1.msra.mxu0 0.0
    %503 = vmatprep.subr.mxu0 0.0
    %504 = vmatpush1.msra.mxu0 0.0
    %505 = vmatprep.subr.mxu0 0.0
    %506 = vmatpush1.msra.mxu0 0.0
    %507 = vmatprep.subr.mxu0 0.0
    %508 = vmatpush1.msra.mxu0 0.0
    %509 = vmatprep.subr.mxu0 0.0
    %510 = vmatpush1.msra.mxu0 0.0
    %511 = vmatprep.subr.mxu0 0.0
    %512 = vmatpush1.msra.mxu0 0.0
    %513 = vmatprep.subr.mxu0 0.0
    %514 = vmatpush1.msra.mxu0 0.0
    %515 = vmatprep.subr.mxu0 0.0
    %516 = vmatpush1.msra.mxu0 0.0
    %517 = vmatprep.subr.mxu0 0.0
    %518 = vmatpush1.msra.mxu0 0.0
    %519 = vmatprep.subr.mxu0 0.0
    %520 = vmatpush1.msra.mxu0 0.0
    %521 = vmatprep.subr.mxu0 0.0
    %522 = vmatpush1.msra.mxu0 0.0
    %523 = vmatprep.subr.mxu0 0.0
    %524 = vmatpush1.msra.mxu0 0.0
    %525 = vmatprep.subr.mxu0 0.0
    %526 = vmatpush1.msra.mxu0 0.0
    %527 = vmatprep.subr.mxu0 0.0
    %528 = vmatpush1.msra.mxu0 0.0
    %529 = vmatprep.subr.mxu0 0.0
    %530 = vmatpush1.msra.mxu0 0.0
    %531 = vmatprep.subr.mxu0 0.0
    %532 = vmatpush1.msra.mxu0 0.0
    %533 = vmatprep.subr.mxu0 0.0
    %534 = vmatpush1.msra.mxu0 0.0
    %535 = vmatprep.subr.mxu0 0.0
    %536 = vmatpush1.msra.mxu0 0.0
    %537 = vmatprep.subr.mxu0 0.0
    %538 = vmatpush1.msra.mxu0 0.0
    %539 = vmatprep.subr.mxu0 0.0
    %540 = vmatpush1.msra.mxu0 0.0
    %541 = vmatprep.subr.mxu0 0.0
    %542 = vmatpush1.msra.mxu0 0.0
    %543 = vmatprep.subr.mxu0 0.0
    %544 = vmatpush1.msra.mxu0 0.0
    %545 = vmatprep.mubr.f32.mxu0 0.0
    %546 = vmatmul.mubr.f32.gmra.mrb[0].mxu0 %v479
    %v547 = vpop.f32.mrb[0].mxu0
    %v548 = vadd.f32 0.0, %v547
    %v549 = vpop.f32.mrb[0].mxu0
    %550 = vdwg.mxu0
    %551 = vrot.lane.b32.xlu0 %v204, 120
    %v552 = vpop.permute.xlu0 %551
    %553 = vrot.lane.b32.xlu0 %v204, 88
    %v554 = vpop.permute.xlu0 %553
    %v555 = vsel %vm215, %v552, 0
    %v557 = vsel %vm215, %v554, 0
    %559 = vmatprep.subr.mxu0 0.0
    %560 = vmatpush1.xpose.msra.mxu0 %v557
    %561 = vmatprep.subr.mxu0 0.0
    %562 = vmatpush1.xpose.msra.mxu0 0.0
    %563 = vmatprep.subr.mxu0 0.0
    %564 = vmatpush1.xpose.msra.mxu0 0.0
    %565 = vmatprep.subr.mxu0 0.0
    %566 = vmatpush1.xpose.msra.mxu0 0.0
    %567 = vmatprep.subr.mxu0 0.0
    %568 = vmatpush1.xpose.msra.mxu0 0.0
    %569 = vmatprep.subr.mxu0 0.0
    %570 = vmatpush1.xpose.msra.mxu0 0.0
    %571 = vmatprep.subr.mxu0 0.0
    %572 = vmatpush1.xpose.msra.mxu0 0.0
    %573 = vmatprep.subr.mxu0 0.0
    %574 = vmatpush1.xpose.msra.mxu0 0.0
    %575 = vmatprep.subr.mxu0 0.0
    %576 = vmatpush1.xpose.msra.mxu0 0.0
    %577 = vmatprep.subr.mxu0 0.0
    %578 = vmatpush1.xpose.msra.mxu0 0.0
    %579 = vmatprep.subr.mxu0 0.0
    %580 = vmatpush1.xpose.msra.mxu0 0.0
    %581 = vmatprep.subr.mxu0 0.0
    %582 = vmatpush1.xpose.msra.mxu0 0.0
    %583 = vmatprep.subr.mxu0 0.0
    %584 = vmatpush1.xpose.msra.mxu0 0.0
    %585 = vmatprep.subr.mxu0 0.0
    %586 = vmatpush1.xpose.msra.mxu0 0.0
    %587 = vmatprep.subr.mxu0 0.0
    %588 = vmatpush1.xpose.msra.mxu0 0.0
    %589 = vmatprep.subr.mxu0 0.0
    %590 = vmatpush1.xpose.msra.mxu0 0.0
    %591 = vmatprep.subr.mxu0 0.0
    %592 = vmatpush1.xpose.msra.mxu0 0.0
    %593 = vmatprep.subr.mxu0 0.0
    %594 = vmatpush1.xpose.msra.mxu0 0.0
    %595 = vmatprep.subr.mxu0 0.0
    %596 = vmatpush1.xpose.msra.mxu0 0.0
    %597 = vmatprep.subr.mxu0 0.0
    %598 = vmatpush1.xpose.msra.mxu0 0.0
    %599 = vmatprep.subr.mxu0 0.0
    %600 = vmatpush1.xpose.msra.mxu0 0.0
    %601 = vmatprep.subr.mxu0 0.0
    %602 = vmatpush1.xpose.msra.mxu0 0.0
    %603 = vmatprep.subr.mxu0 0.0
    %604 = vmatpush1.xpose.msra.mxu0 0.0
    %605 = vmatprep.subr.mxu0 0.0
    %606 = vmatpush1.xpose.msra.mxu0 0.0
    %607 = vmatprep.subr.mxu0 0.0
    %608 = vmatpush1.xpose.msra.mxu0 0.0
    %609 = vmatprep.subr.mxu0 0.0
    %610 = vmatpush1.xpose.msra.mxu0 0.0
    %611 = vmatprep.subr.mxu0 0.0
    %612 = vmatpush1.xpose.msra.mxu0 0.0
    %613 = vmatprep.subr.mxu0 0.0
    %614 = vmatpush1.xpose.msra.mxu0 0.0
    %615 = vmatprep.subr.mxu0 0.0
    %616 = vmatpush1.xpose.msra.mxu0 0.0
    %617 = vmatprep.subr.mxu0 0.0
    %618 = vmatpush1.xpose.msra.mxu0 0.0
    %619 = vmatprep.subr.mxu0 0.0
    %620 = vmatpush1.xpose.msra.mxu0 0.0
    %621 = vmatprep.subr.mxu0 0.0
    %622 = vmatpush1.xpose.msra.mxu0 0.0
    %623 = vmatprep.mubr.f32.mxu0 0.0
    %624 = vmatmul.mubr.f32.gmra.mrb[0].mxu0 %v555
    %v625 = vpop.f32.mrb[0].mxu0
    %v626 = vadd.f32 0.0, %v625
    %v627 = vpop.f32.mrb[0].mxu0
    %628 = vdwg.mxu0
    %629 = vrot.lane.b32.xlu0 %v209, 120
    %v630 = vpop.permute.xlu0 %629
    %631 = vrot.lane.b32.xlu0 %v209, 88
    %v632 = vpop.permute.xlu0 %631
    %v633 = vsel %vm215, %v630, 0
    %v635 = vsel %vm215, %v632, 0
    %637 = vmatprep.subr.mxu0 0.0
    %638 = vmatpush1.xpose.msra.mxu0 %v635
    %639 = vmatprep.subr.mxu0 0.0
    %640 = vmatpush1.xpose.msra.mxu0 0.0
    %641 = vmatprep.subr.mxu0 0.0
    %642 = vmatpush1.xpose.msra.mxu0 0.0
    %643 = vmatprep.subr.mxu0 0.0
    %644 = vmatpush1.xpose.msra.mxu0 0.0
    %645 = vmatprep.subr.mxu0 0.0
    %646 = vmatpush1.xpose.msra.mxu0 0.0
    %647 = vmatprep.subr.mxu0 0.0
    %648 = vmatpush1.xpose.msra.mxu0 0.0
    %649 = vmatprep.subr.mxu0 0.0
    %650 = vmatpush1.xpose.msra.mxu0 0.0
    %651 = vmatprep.subr.mxu0 0.0
    %652 = vmatpush1.xpose.msra.mxu0 0.0
    %653 = vmatprep.subr.mxu0 0.0
    %654 = vmatpush1.xpose.msra.mxu0 0.0
    %655 = vmatprep.subr.mxu0 0.0
    %656 = vmatpush1.xpose.msra.mxu0 0.0
    %657 = vmatprep.subr.mxu0 0.0
    %658 = vmatpush1.xpose.msra.mxu0 0.0
    %659 = vmatprep.subr.mxu0 0.0
    %660 = vmatpush1.xpose.msra.mxu0 0.0
    %661 = vmatprep.subr.mxu0 0.0
    %662 = vmatpush1.xpose.msra.mxu0 0.0
    %663 = vmatprep.subr.mxu0 0.0
    %664 = vmatpush1.xpose.msra.mxu0 0.0
    %665 = vmatprep.subr.mxu0 0.0
    %666 = vmatpush1.xpose.msra.mxu0 0.0
    %667 = vmatprep.subr.mxu0 0.0
    %668 = vmatpush1.xpose.msra.mxu0 0.0
    %669 = vmatprep.subr.mxu0 0.0
    %670 = vmatpush1.xpose.msra.mxu0 0.0
    %671 = vmatprep.subr.mxu0 0.0
    %672 = vmatpush1.xpose.msra.mxu0 0.0
    %673 = vmatprep.subr.mxu0 0.0
    %674 = vmatpush1.xpose.msra.mxu0 0.0
    %675 = vmatprep.subr.mxu0 0.0
    %676 = vmatpush1.xpose.msra.mxu0 0.0
    %677 = vmatprep.subr.mxu0 0.0
    %678 = vmatpush1.xpose.msra.mxu0 0.0
    %679 = vmatprep.subr.mxu0 0.0
    %680 = vmatpush1.xpose.msra.mxu0 0.0
    %681 = vmatprep.subr.mxu0 0.0
    %682 = vmatpush1.xpose.msra.mxu0 0.0
    %683 = vmatprep.subr.mxu0 0.0
    %684 = vmatpush1.xpose.msra.mxu0 0.0
    %685 = vmatprep.subr.mxu0 0.0
    %686 = vmatpush1.xpose.msra.mxu0 0.0
    %687 = vmatprep.subr.mxu0 0.0
    %688 = vmatpush1.xpose.msra.mxu0 0.0
    %689 = vmatprep.subr.mxu0 0.0
    %690 = vmatpush1.xpose.msra.mxu0 0.0
    %691 = vmatprep.subr.mxu0 0.0
    %692 = vmatpush1.xpose.msra.mxu0 0.0
    %693 = vmatprep.subr.mxu0 0.0
    %694 = vmatpush1.xpose.msra.mxu0 0.0
    %695 = vmatprep.subr.mxu0 0.0
    %696 = vmatpush1.xpose.msra.mxu0 0.0
    %697 = vmatprep.subr.mxu0 0.0
    %698 = vmatpush1.xpose.msra.mxu0 0.0
    %699 = vmatprep.subr.mxu0 0.0
    %700 = vmatpush1.xpose.msra.mxu0 0.0
    %701 = vmatprep.mubr.f32.mxu0 0.0
    %702 = vmatmul.mubr.f32.gmra.mrb[0].mxu0 %v633
    %v703 = vpop.f32.mrb[0].mxu0
    %v704 = vadd.f32 0.0, %v703
    %v705 = vpop.f32.mrb[0].mxu0
    %706 = vdwg.mxu0
    %v707 = vmul.f32 %v626, 0.35355338
    %v708 = vmul.f32 %v704, 0.35355338
    %v709 = vadd.f32 %v707, %v67
    %v710 = vadd.f32 %v708, %v71
    %v711 = vsel %vm215, %v709, -inf
    %712 = vmax.xlane.f32.xlu0 %v711
    %v713 = vpop.xlane.xlu0 %712
    %v714 = vsel %vm215, %v710, -inf
    %715 = vmax.xlane.f32.xlu0 %v714
    %v716 = vpop.xlane.xlu0 %715
    %v717 = vsub.f32 %v709, %v713
    %v718 = vsub.f32 %v710, %v716
    %v719 = vmul.f32 %v717, 1.442695
    %v720 = vpow.pop %v719
    %v721 = vmul.f32 %v718, 1.442695
    %v722 = vpow.pop %v721
    %v723 = vsel %vm215, %v720, 0.0
    %724 = vadd.xlane.f32.xlu0 %v723
    %v725 = vpop.xlane.xlu0 %724
    %v726 = vsel %vm215, %v722, 0.0
    %727 = vadd.xlane.f32.xlu0 %v726
    %v728 = vpop.xlane.xlu0 %727
    %v729 = vrcp.pop %v725
    %v730 = vrcp.pop %v728
    %v731 = vmul.f32 %v725, %v729
    %v732 = vmul.f32 %v728, %v730
    %v733 = vsub.f32 2.0, %v731
    %v734 = vsub.f32 2.0, %v732
    %v735 = vmul.f32 %v729, %v733
    %v736 = vmul.f32 %v730, %v734
    %v737 = vmul.f32 %v720, %v735
    %v738 = vmul.f32 %v722, %v736
    %739 = vrot.lane.b32.xlu0 %v204, 56
    %v740 = vpop.permute.xlu0 %739
    %v743 = vsel %vm215, %v737, 0
    %745 = vmatprep.subr.mxu0 0.0
    %746 = vmatpush1.msra.mxu0 %v740
    %747 = vmatprep.subr.mxu0 0.0
    %748 = vmatpush1.msra.mxu0 0.0
    %749 = vmatprep.subr.mxu0 0.0
    %750 = vmatpush1.msra.mxu0 0.0
    %751 = vmatprep.subr.mxu0 0.0
    %752 = vmatpush1.msra.mxu0 0.0
    %753 = vmatprep.subr.mxu0 0.0
    %754 = vmatpush1.msra.mxu0 0.0
    %755 = vmatprep.subr.mxu0 0.0
    %756 = vmatpush1.msra.mxu0 0.0
    %757 = vmatprep.subr.mxu0 0.0
    %758 = vmatpush1.msra.mxu0 0.0
    %759 = vmatprep.subr.mxu0 0.0
    %760 = vmatpush1.msra.mxu0 0.0
    %761 = vmatprep.subr.mxu0 0.0
    %762 = vmatpush1.msra.mxu0 0.0
    %763 = vmatprep.subr.mxu0 0.0
    %764 = vmatpush1.msra.mxu0 0.0
    %765 = vmatprep.subr.mxu0 0.0
    %766 = vmatpush1.msra.mxu0 0.0
    %767 = vmatprep.subr.mxu0 0.0
    %768 = vmatpush1.msra.mxu0 0.0
    %769 = vmatprep.subr.mxu0 0.0
    %770 = vmatpush1.msra.mxu0 0.0
    %771 = vmatprep.subr.mxu0 0.0
    %772 = vmatpush1.msra.mxu0 0.0
    %773 = vmatprep.subr.mxu0 0.0
    %774 = vmatpush1.msra.mxu0 0.0
    %775 = vmatprep.subr.mxu0 0.0
    %776 = vmatpush1.msra.mxu0 0.0
    %777 = vmatprep.subr.mxu0 0.0
    %778 = vmatpush1.msra.mxu0 0.0
    %779 = vmatprep.subr.mxu0 0.0
    %780 = vmatpush1.msra.mxu0 0.0
    %781 = vmatprep.subr.mxu0 0.0
    %782 = vmatpush1.msra.mxu0 0.0
    %783 = vmatprep.subr.mxu0 0.0
    %784 = vmatpush1.msra.mxu0 0.0
    %785 = vmatprep.subr.mxu0 0.0
    %786 = vmatpush1.msra.mxu0 0.0
    %787 = vmatprep.subr.mxu0 0.0
    %788 = vmatpush1.msra.mxu0 0.0
    %789 = vmatprep.subr.mxu0 0.0
    %790 = vmatpush1.msra.mxu0 0.0
    %791 = vmatprep.subr.mxu0 0.0
    %792 = vmatpush1.msra.mxu0 0.0
    %793 = vmatprep.subr.mxu0 0.0
    %794 = vmatpush1.msra.mxu0 0.0
    %795 = vmatprep.subr.mxu0 0.0
    %796 = vmatpush1.msra.mxu0 0.0
    %797 = vmatprep.subr.mxu0 0.0
    %798 = vmatpush1.msra.mxu0 0.0
    %799 = vmatprep.subr.mxu0 0.0
    %800 = vmatpush1.msra.mxu0 0.0
    %801 = vmatprep.subr.mxu0 0.0
    %802 = vmatpush1.msra.mxu0 0.0
    %803 = vmatprep.subr.mxu0 0.0
    %804 = vmatpush1.msra.mxu0 0.0
    %805 = vmatprep.subr.mxu0 0.0
    %806 = vmatpush1.msra.mxu0 0.0
    %807 = vmatprep.subr.mxu0 0.0
    %808 = vmatpush1.msra.mxu0 0.0
    %809 = vmatprep.mubr.f32.mxu0 0.0
    %810 = vmatmul.mubr.f32.gmra.mrb[0].mxu0 %v743
    %v811 = vpop.f32.mrb[0].mxu0
    %v812 = vadd.f32 0.0, %v811
    %v813 = vpop.f32.mrb[0].mxu0
    %814 = vdwg.mxu0
    %815 = vrot.lane.b32.xlu0 %v209, 56
    %v816 = vpop.permute.xlu0 %815
    %v819 = vsel %vm215, %v738, 0
    %821 = vmatprep.subr.mxu0 0.0
    %822 = vmatpush1.msra.mxu0 %v816
    %823 = vmatprep.subr.mxu0 0.0
    %824 = vmatpush1.msra.mxu0 0.0
    %825 = vmatprep.subr.mxu0 0.0
    %826 = vmatpush1.msra.mxu0 0.0
    %827 = vmatprep.subr.mxu0 0.0
    %828 = vmatpush1.msra.mxu0 0.0
    %829 = vmatprep.subr.mxu0 0.0
    %830 = vmatpush1.msra.mxu0 0.0
    %831 = vmatprep.subr.mxu0 0.0
    %832 = vmatpush1.msra.mxu0 0.0
    %833 = vmatprep.subr.mxu0 0.0
    %834 = vmatpush1.msra.mxu0 0.0
    %835 = vmatprep.subr.mxu0 0.0
    %836 = vmatpush1.msra.mxu0 0.0
    %837 = vmatprep.subr.mxu0 0.0
    %838 = vmatpush1.msra.mxu0 0.0
    %839 = vmatprep.subr.mxu0 0.0
    %840 = vmatpush1.msra.mxu0 0.0
    %841 = vmatprep.subr.mxu0 0.0
    %842 = vmatpush1.msra.mxu0 0.0
    %843 = vmatprep.subr.mxu0 0.0
    %844 = vmatpush1.msra.mxu0 0.0
    %845 = vmatprep.subr.mxu0 0.0
    %846 = vmatpush1.msra.mxu0 0.0
    %847 = vmatprep.subr.mxu0 0.0
    %848 = vmatpush1.msra.mxu0 0.0
    %849 = vmatprep.subr.mxu0 0.0
    %850 = vmatpush1.msra.mxu0 0.0
    %851 = vmatprep.subr.mxu0 0.0
    %852 = vmatpush1.msra.mxu0 0.0
    %853 = vmatprep.subr.mxu0 0.0
    %854 = vmatpush1.msra.mxu0 0.0
    %855 = vmatprep.subr.mxu0 0.0
    %856 = vmatpush1.msra.mxu0 0.0
    %857 = vmatprep.subr.mxu0 0.0
    %858 = vmatpush1.msra.mxu0 0.0
    %859 = vmatprep.subr.mxu0 0.0
    %860 = vmatpush1.msra.mxu0 0.0
    %861 = vmatprep.subr.mxu0 0.0
    %862 = vmatpush1.msra.mxu0 0.0
    %863 = vmatprep.subr.mxu0 0.0
    %864 = vmatpush1.msra.mxu0 0.0
    %865 = vmatprep.subr.mxu0 0.0
    %866 = vmatpush1.msra.mxu0 0.0
    %867 = vmatprep.subr.mxu0 0.0
    %868 = vmatpush1.msra.mxu0 0.0
    %869 = vmatprep.subr.mxu0 0.0
    %870 = vmatpush1.msra.mxu0 0.0
    %871 = vmatprep.subr.mxu0 0.0
    %872 = vmatpush1.msra.mxu0 0.0
    %873 = vmatprep.subr.mxu0 0.0
    %874 = vmatpush1.msra.mxu0 0.0
    %875 = vmatprep.subr.mxu0 0.0
    %876 = vmatpush1.msra.mxu0 0.0
    %877 = vmatprep.subr.mxu0 0.0
    %878 = vmatpush1.msra.mxu0 0.0
    %879 = vmatprep.subr.mxu0 0.0
    %880 = vmatpush1.msra.mxu0 0.0
    %881 = vmatprep.subr.mxu0 0.0
    %882 = vmatpush1.msra.mxu0 0.0
    %883 = vmatprep.subr.mxu0 0.0
    %884 = vmatpush1.msra.mxu0 0.0
    %885 = vmatprep.mubr.f32.mxu0 0.0
    %886 = vmatmul.mubr.f32.gmra.mrb[0].mxu0 %v819
    %v887 = vpop.f32.mrb[0].mxu0
    %v888 = vadd.f32 0.0, %v887
    %v889 = vpop.f32.mrb[0].mxu0
    %890 = vdwg.mxu0
    %891 = vrot.lane.b32.xlu0 %v204, 112
    %v892 = vpop.permute.xlu0 %891
    %893 = vrot.lane.b32.xlu0 %v204, 80
    %v894 = vpop.permute.xlu0 %893
    %v895 = vsel %vm215, %v892, 0
    %v897 = vsel %vm215, %v894, 0
    %899 = vmatprep.subr.mxu0 0.0
    %900 = vmatpush1.xpose.msra.mxu0 %v897
    %901 = vmatprep.subr.mxu0 0.0
    %902 = vmatpush1.xpose.msra.mxu0 0.0
    %903 = vmatprep.subr.mxu0 0.0
    %904 = vmatpush1.xpose.msra.mxu0 0.0
    %905 = vmatprep.subr.mxu0 0.0
    %906 = vmatpush1.xpose.msra.mxu0 0.0
    %907 = vmatprep.subr.mxu0 0.0
    %908 = vmatpush1.xpose.msra.mxu0 0.0
    %909 = vmatprep.subr.mxu0 0.0
    %910 = vmatpush1.xpose.msra.mxu0 0.0
    %911 = vmatprep.subr.mxu0 0.0
    %912 = vmatpush1.xpose.msra.mxu0 0.0
    %913 = vmatprep.subr.mxu0 0.0
    %914 = vmatpush1.xpose.msra.mxu0 0.0
    %915 = vmatprep.subr.mxu0 0.0
    %916 = vmatpush1.xpose.msra.mxu0 0.0
    %917 = vmatprep.subr.mxu0 0.0
    %918 = vmatpush1.xpose.msra.mxu0 0.0
    %919 = vmatprep.subr.mxu0 0.0
    %920 = vmatpush1.xpose.msra.mxu0 0.0
    %921 = vmatprep.subr.mxu0 0.0
    %922 = vmatpush1.xpose.msra.mxu0 0.0
    %923 = vmatprep.subr.mxu0 0.0
    %924 = vmatpush1.xpose.msra.mxu0 0.0
    %925 = vmatprep.subr.mxu0 0.0
    %926 = vmatpush1.xpose.msra.mxu0 0.0
    %927 = vmatprep.subr.mxu0 0.0
    %928 = vmatpush1.xpose.msra.mxu0 0.0
    %929 = vmatprep.subr.mxu0 0.0
    %930 = vmatpush1.xpose.msra.mxu0 0.0
    %931 = vmatprep.subr.mxu0 0.0
    %932 = vmatpush1.xpose.msra.mxu0 0.0
    %933 = vmatprep.subr.mxu0 0.0
    %934 = vmatpush1.xpose.msra.mxu0 0.0
    %935 = vmatprep.subr.mxu0 0.0
    %936 = vmatpush1.xpose.msra.mxu0 0.0
    %937 = vmatprep.subr.mxu0 0.0
    %938 = vmatpush1.xpose.msra.mxu0 0.0
    %939 = vmatprep.subr.mxu0 0.0
    %940 = vmatpush1.xpose.msra.mxu0 0.0
    %941 = vmatprep.subr.mxu0 0.0
    %942 = vmatpush1.xpose.msra.mxu0 0.0
    %943 = vmatprep.subr.mxu0 0.0
    %944 = vmatpush1.xpose.msra.mxu0 0.0
    %945 = vmatprep.subr.mxu0 0.0
    %946 = vmatpush1.xpose.msra.mxu0 0.0
    %947 = vmatprep.subr.mxu0 0.0
    %948 = vmatpush1.xpose.msra.mxu0 0.0
    %949 = vmatprep.subr.mxu0 0.0
    %950 = vmatpush1.xpose.msra.mxu0 0.0
    %951 = vmatprep.subr.mxu0 0.0
    %952 = vmatpush1.xpose.msra.mxu0 0.0
    %953 = vmatprep.subr.mxu0 0.0
    %954 = vmatpush1.xpose.msra.mxu0 0.0
    %955 = vmatprep.subr.mxu0 0.0
    %956 = vmatpush1.xpose.msra.mxu0 0.0
    %957 = vmatprep.subr.mxu0 0.0
    %958 = vmatpush1.xpose.msra.mxu0 0.0
    %959 = vmatprep.subr.mxu0 0.0
    %960 = vmatpush1.xpose.msra.mxu0 0.0
    %961 = vmatprep.subr.mxu0 0.0
    %962 = vmatpush1.xpose.msra.mxu0 0.0
    %963 = vmatprep.mubr.f32.mxu0 0.0
    %964 = vmatmul.mubr.f32.gmra.mrb[0].mxu0 %v895
    %v965 = vpop.f32.mrb[0].mxu0
    %v966 = vadd.f32 0.0, %v965
    %v967 = vpop.f32.mrb[0].mxu0
    %968 = vdwg.mxu0
    %969 = vrot.lane.b32.xlu0 %v209, 112
    %v970 = vpop.permute.xlu0 %969
    %971 = vrot.lane.b32.xlu0 %v209, 80
    %v972 = vpop.permute.xlu0 %971
    %v973 = vsel %vm215, %v970, 0
    %v975 = vsel %vm215, %v972, 0
    %977 = vmatprep.subr.mxu0 0.0
    %978 = vmatpush1.xpose.msra.mxu0 %v975
    %979 = vmatprep.subr.mxu0 0.0
    %980 = vmatpush1.xpose.msra.mxu0 0.0
    %981 = vmatprep.subr.mxu0 0.0
    %982 = vmatpush1.xpose.msra.mxu0 0.0
    %983 = vmatprep.subr.mxu0 0.0
    %984 = vmatpush1.xpose.msra.mxu0 0.0
    %985 = vmatprep.subr.mxu0 0.0
    %986 = vmatpush1.xpose.msra.mxu0 0.0
    %987 = vmatprep.subr.mxu0 0.0
    %988 = vmatpush1.xpose.msra.mxu0 0.0
    %989 = vmatprep.subr.mxu0 0.0
    %990 = vmatpush1.xpose.msra.mxu0 0.0
    %991 = vmatprep.subr.mxu0 0.0
    %992 = vmatpush1.xpose.msra.mxu0 0.0
    %993 = vmatprep.subr.mxu0 0.0
    %994 = vmatpush1.xpose.msra.mxu0 0.0
    %995 = vmatprep.subr.mxu0 0.0
    %996 = vmatpush1.xpose.msra.mxu0 0.0
    %997 = vmatprep.subr.mxu0 0.0
    %998 = vmatpush1.xpose.msra.mxu0 0.0
    %999 = vmatprep.subr.mxu0 0.0
    %1000 = vmatpush1.xpose.msra.mxu0 0.0
    %1001 = vmatprep.subr.mxu0 0.0
    %1002 = vmatpush1.xpose.msra.mxu0 0.0
    %1003 = vmatprep.subr.mxu0 0.0
    %1004 = vmatpush1.xpose.msra.mxu0 0.0
    %1005 = vmatprep.subr.mxu0 0.0
    %1006 = vmatpush1.xpose.msra.mxu0 0.0
    %1007 = vmatprep.subr.mxu0 0.0
    %1008 = vmatpush1.xpose.msra.mxu0 0.0
    %1009 = vmatprep.subr.mxu0 0.0
    %1010 = vmatpush1.xpose.msra.mxu0 0.0
    %1011 = vmatprep.subr.mxu0 0.0
    %1012 = vmatpush1.xpose.msra.mxu0 0.0
    %1013 = vmatprep.subr.mxu0 0.0
    %1014 = vmatpush1.xpose.msra.mxu0 0.0
    %1015 = vmatprep.subr.mxu0 0.0
    %1016 = vmatpush1.xpose.msra.mxu0 0.0
    %1017 = vmatprep.subr.mxu0 0.0
    %1018 = vmatpush1.xpose.msra.mxu0 0.0
    %1019 = vmatprep.subr.mxu0 0.0
    %1020 = vmatpush1.xpose.msra.mxu0 0.0
    %1021 = vmatprep.subr.mxu0 0.0
    %1022 = vmatpush1.xpose.msra.mxu0 0.0
    %1023 = vmatprep.subr.mxu0 0.0
    %1024 = vmatpush1.xpose.msra.mxu0 0.0
    %1025 = vmatprep.subr.mxu0 0.0
    %1026 = vmatpush1.xpose.msra.mxu0 0.0
    %1027 = vmatprep.subr.mxu0 0.0
    %1028 = vmatpush1.xpose.msra.mxu0 0.0
    %1029 = vmatprep.subr.mxu0 0.0
    %1030 = vmatpush1.xpose.msra.mxu0 0.0
    %1031 = vmatprep.subr.mxu0 0.0
    %1032 = vmatpush1.xpose.msra.mxu0 0.0
    %1033 = vmatprep.subr.mxu0 0.0
    %1034 = vmatpush1.xpose.msra.mxu0 0.0
    %1035 = vmatprep.subr.mxu0 0.0
    %1036 = vmatpush1.xpose.msra.mxu0 0.0
    %1037 = vmatprep.subr.mxu0 0.0
    %1038 = vmatpush1.xpose.msra.mxu0 0.0
    %1039 = vmatprep.subr.mxu0 0.0
    %1040 = vmatpush1.xpose.msra.mxu0 0.0
    %1041 = vmatprep.mubr.f32.mxu0 0.0
    %1042 = vmatmul.mubr.f32.gmra.mrb[0].mxu0 %v973
    %v1043 = vpop.f32.mrb[0].mxu0
    %v1044 = vadd.f32 0.0, %v1043
    %v1045 = vpop.f32.mrb[0].mxu0
    %1046 = vdwg.mxu0
    %v1047 = vmul.f32 %v966, 0.35355338
    %v1048 = vmul.f32 %v1044, 0.35355338
    %v1049 = vadd.f32 %v1047, %v67
    %v1050 = vadd.f32 %v1048, %v71
    %v1051 = vsel %vm215, %v1049, -inf
    %1052 = vmax.xlane.f32.xlu0 %v1051
    %v1053 = vpop.xlane.xlu0 %1052
    %v1054 = vsel %vm215, %v1050, -inf
    %1055 = vmax.xlane.f32.xlu0 %v1054
    %v1056 = vpop.xlane.xlu0 %1055
    %v1057 = vsub.f32 %v1049, %v1053
    %v1058 = vsub.f32 %v1050, %v1056
    %v1059 = vmul.f32 %v1057, 1.442695
    %v1060 = vpow.pop %v1059
    %v1061 = vmul.f32 %v1058, 1.442695
    %v1062 = vpow.pop %v1061
    %v1063 = vsel %vm215, %v1060, 0.0
    %1064 = vadd.xlane.f32.xlu0 %v1063
    %v1065 = vpop.xlane.xlu0 %1064
    %v1066 = vsel %vm215, %v1062, 0.0
    %1067 = vadd.xlane.f32.xlu0 %v1066
    %v1068 = vpop.xlane.xlu0 %1067
    %v1069 = vrcp.pop %v1065
    %v1070 = vrcp.pop %v1068
    %v1071 = vmul.f32 %v1065, %v1069
    %v1072 = vmul.f32 %v1068, %v1070
    %v1073 = vsub.f32 2.0, %v1071
    %v1074 = vsub.f32 2.0, %v1072
    %v1075 = vmul.f32 %v1069, %v1073
    %v1076 = vmul.f32 %v1070, %v1074
    %v1077 = vmul.f32 %v1060, %v1075
    %v1078 = vmul.f32 %v1062, %v1076
    %1079 = vrot.lane.b32.xlu0 %v204, 48
    %v1080 = vpop.permute.xlu0 %1079
    %v1083 = vsel %vm215, %v1077, 0
    %1085 = vmatprep.subr.mxu0 0.0
    %1086 = vmatpush1.msra.mxu0 %v1080
    %1087 = vmatprep.subr.mxu0 0.0
    %1088 = vmatpush1.msra.mxu0 0.0
    %1089 = vmatprep.subr.mxu0 0.0
    %1090 = vmatpush1.msra.mxu0 0.0
    %1091 = vmatprep.subr.mxu0 0.0
    %1092 = vmatpush1.msra.mxu0 0.0
    %1093 = vmatprep.subr.mxu0 0.0
    %1094 = vmatpush1.msra.mxu0 0.0
    %1095 = vmatprep.subr.mxu0 0.0
    %1096 = vmatpush1.msra.mxu0 0.0
    %1097 = vmatprep.subr.mxu0 0.0
    %1098 = vmatpush1.msra.mxu0 0.0
    %1099 = vmatprep.subr.mxu0 0.0
    %1100 = vmatpush1.msra.mxu0 0.0
    %1101 = vmatprep.subr.mxu0 0.0
    %1102 = vmatpush1.msra.mxu0 0.0
    %1103 = vmatprep.subr.mxu0 0.0
    %1104 = vmatpush1.msra.mxu0 0.0
    %1105 = vmatprep.subr.mxu0 0.0
    %1106 = vmatpush1.msra.mxu0 0.0
    %1107 = vmatprep.subr.mxu0 0.0
    %1108 = vmatpush1.msra.mxu0 0.0
    %1109 = vmatprep.subr.mxu0 0.0
    %1110 = vmatpush1.msra.mxu0 0.0
    %1111 = vmatprep.subr.mxu0 0.0
    %1112 = vmatpush1.msra.mxu0 0.0
    %1113 = vmatprep.subr.mxu0 0.0
    %1114 = vmatpush1.msra.mxu0 0.0
    %1115 = vmatprep.subr.mxu0 0.0
    %1116 = vmatpush1.msra.mxu0 0.0
    %1117 = vmatprep.subr.mxu0 0.0
    %1118 = vmatpush1.msra.mxu0 0.0
    %1119 = vmatprep.subr.mxu0 0.0
    %1120 = vmatpush1.msra.mxu0 0.0
    %1121 = vmatprep.subr.mxu0 0.0
    %1122 = vmatpush1.msra.mxu0 0.0
    %1123 = vmatprep.subr.mxu0 0.0
    %1124 = vmatpush1.msra.mxu0 0.0
    %1125 = vmatprep.subr.mxu0 0.0
    %1126 = vmatpush1.msra.mxu0 0.0
    %1127 = vmatprep.subr.mxu0 0.0
    %1128 = vmatpush1.msra.mxu0 0.0
    %1129 = vmatprep.subr.mxu0 0.0
    %1130 = vmatpush1.msra.mxu0 0.0
    %1131 = vmatprep.subr.mxu0 0.0
    %1132 = vmatpush1.msra.mxu0 0.0
    %1133 = vmatprep.subr.mxu0 0.0
    %1134 = vmatpush1.msra.mxu0 0.0
    %1135 = vmatprep.subr.mxu0 0.0
    %1136 = vmatpush1.msra.mxu0 0.0
    %1137 = vmatprep.subr.mxu0 0.0
    %1138 = vmatpush1.msra.mxu0 0.0
    %1139 = vmatprep.subr.mxu0 0.0
    %1140 = vmatpush1.msra.mxu0 0.0
    %1141 = vmatprep.subr.mxu0 0.0
    %1142 = vmatpush1.msra.mxu0 0.0
    %1143 = vmatprep.subr.mxu0 0.0
    %1144 = vmatpush1.msra.mxu0 0.0
    %1145 = vmatprep.subr.mxu0 0.0
    %1146 = vmatpush1.msra.mxu0 0.0
    %1147 = vmatprep.subr.mxu0 0.0
    %1148 = vmatpush1.msra.mxu0 0.0
    %1149 = vmatprep.mubr.f32.mxu0 0.0
    %1150 = vmatmul.mubr.f32.gmra.mrb[0].mxu0 %v1083
    %v1151 = vpop.f32.mrb[0].mxu0
    %v1152 = vadd.f32 0.0, %v1151
    %v1153 = vpop.f32.mrb[0].mxu0
    %1154 = vdwg.mxu0
    %1155 = vrot.lane.b32.xlu0 %v209, 48
    %v1156 = vpop.permute.xlu0 %1155
    %v1159 = vsel %vm215, %v1078, 0
    %1161 = vmatprep.subr.mxu0 0.0
    %1162 = vmatpush1.msra.mxu0 %v1156
    %1163 = vmatprep.subr.mxu0 0.0
    %1164 = vmatpush1.msra.mxu0 0.0
    %1165 = vmatprep.subr.mxu0 0.0
    %1166 = vmatpush1.msra.mxu0 0.0
    %1167 = vmatprep.subr.mxu0 0.0
    %1168 = vmatpush1.msra.mxu0 0.0
    %1169 = vmatprep.subr.mxu0 0.0
    %1170 = vmatpush1.msra.mxu0 0.0
    %1171 = vmatprep.subr.mxu0 0.0
    %1172 = vmatpush1.msra.mxu0 0.0
    %1173 = vmatprep.subr.mxu0 0.0
    %1174 = vmatpush1.msra.mxu0 0.0
    %1175 = vmatprep.subr.mxu0 0.0
    %1176 = vmatpush1.msra.mxu0 0.0
    %1177 = vmatprep.subr.mxu0 0.0
    %1178 = vmatpush1.msra.mxu0 0.0
    %1179 = vmatprep.subr.mxu0 0.0
    %1180 = vmatpush1.msra.mxu0 0.0
    %1181 = vmatprep.subr.mxu0 0.0
    %1182 = vmatpush1.msra.mxu0 0.0
    %1183 = vmatprep.subr.mxu0 0.0
    %1184 = vmatpush1.msra.mxu0 0.0
    %1185 = vmatprep.subr.mxu0 0.0
    %1186 = vmatpush1.msra.mxu0 0.0
    %1187 = vmatprep.subr.mxu0 0.0
    %1188 = vmatpush1.msra.mxu0 0.0
    %1189 = vmatprep.subr.mxu0 0.0
    %1190 = vmatpush1.msra.mxu0 0.0
    %1191 = vmatprep.subr.mxu0 0.0
    %1192 = vmatpush1.msra.mxu0 0.0
    %1193 = vmatprep.subr.mxu0 0.0
    %1194 = vmatpush1.msra.mxu0 0.0
    %1195 = vmatprep.subr.mxu0 0.0
    %1196 = vmatpush1.msra.mxu0 0.0
    %1197 = vmatprep.subr.mxu0 0.0
    %1198 = vmatpush1.msra.mxu0 0.0
    %1199 = vmatprep.subr.mxu0 0.0
    %1200 = vmatpush1.msra.mxu0 0.0
    %1201 = vmatprep.subr.mxu0 0.0
    %1202 = vmatpush1.msra.mxu0 0.0
    %1203 = vmatprep.subr.mxu0 0.0
    %1204 = vmatpush1.msra.mxu0 0.0
    %1205 = vmatprep.subr.mxu0 0.0
    %1206 = vmatpush1.msra.mxu0 0.0
    %1207 = vmatprep.subr.mxu0 0.0
    %1208 = vmatpush1.msra.mxu0 0.0
    %1209 = vmatprep.subr.mxu0 0.0
    %1210 = vmatpush1.msra.mxu0 0.0
    %1211 = vmatprep.subr.mxu0 0.0
    %1212 = vmatpush1.msra.mxu0 0.0
    %1213 = vmatprep.subr.mxu0 0.0
    %1214 = vmatpush1.msra.mxu0 0.0
    %1215 = vmatprep.subr.mxu0 0.0
    %1216 = vmatpush1.msra.mxu0 0.0
    %1217 = vmatprep.subr.mxu0 0.0
    %1218 = vmatpush1.msra.mxu0 0.0
    %1219 = vmatprep.subr.mxu0 0.0
    %1220 = vmatpush1.msra.mxu0 0.0
    %1221 = vmatprep.subr.mxu0 0.0
    %1222 = vmatpush1.msra.mxu0 0.0
    %1223 = vmatprep.subr.mxu0 0.0
    %1224 = vmatpush1.msra.mxu0 0.0
    %1225 = vmatprep.mubr.f32.mxu0 0.0
    %1226 = vmatmul.mubr.f32.gmra.mrb[0].mxu0 %v1159
    %v1227 = vpop.f32.mrb[0].mxu0
    %v1228 = vadd.f32 0.0, %v1227
    %v1229 = vpop.f32.mrb[0].mxu0
    %1230 = vdwg.mxu0
    %1231 = vrot.lane.b32.xlu0 %v204, 104
    %v1232 = vpop.permute.xlu0 %1231
    %1233 = vrot.lane.b32.xlu0 %v204, 72
    %v1234 = vpop.permute.xlu0 %1233
    %v1235 = vsel %vm215, %v1232, 0
    %v1237 = vsel %vm215, %v1234, 0
    %1239 = vmatprep.subr.mxu0 0.0
    %1240 = vmatpush1.xpose.msra.mxu0 %v1237
    %1241 = vmatprep.subr.mxu0 0.0
    %1242 = vmatpush1.xpose.msra.mxu0 0.0
    %1243 = vmatprep.subr.mxu0 0.0
    %1244 = vmatpush1.xpose.msra.mxu0 0.0
    %1245 = vmatprep.subr.mxu0 0.0
    %1246 = vmatpush1.xpose.msra.mxu0 0.0
    %1247 = vmatprep.subr.mxu0 0.0
    %1248 = vmatpush1.xpose.msra.mxu0 0.0
    %1249 = vmatprep.subr.mxu0 0.0
    %1250 = vmatpush1.xpose.msra.mxu0 0.0
    %1251 = vmatprep.subr.mxu0 0.0
    %1252 = vmatpush1.xpose.msra.mxu0 0.0
    %1253 = vmatprep.subr.mxu0 0.0
    %1254 = vmatpush1.xpose.msra.mxu0 0.0
    %1255 = vmatprep.subr.mxu0 0.0
    %1256 = vmatpush1.xpose.msra.mxu0 0.0
    %1257 = vmatprep.subr.mxu0 0.0
    %1258 = vmatpush1.xpose.msra.mxu0 0.0
    %1259 = vmatprep.subr.mxu0 0.0
    %1260 = vmatpush1.xpose.msra.mxu0 0.0
    %1261 = vmatprep.subr.mxu0 0.0
    %1262 = vmatpush1.xpose.msra.mxu0 0.0
    %1263 = vmatprep.subr.mxu0 0.0
    %1264 = vmatpush1.xpose.msra.mxu0 0.0
    %1265 = vmatprep.subr.mxu0 0.0
    %1266 = vmatpush1.xpose.msra.mxu0 0.0
    %1267 = vmatprep.subr.mxu0 0.0
    %1268 = vmatpush1.xpose.msra.mxu0 0.0
    %1269 = vmatprep.subr.mxu0 0.0
    %1270 = vmatpush1.xpose.msra.mxu0 0.0
    %1271 = vmatprep.subr.mxu0 0.0
    %1272 = vmatpush1.xpose.msra.mxu0 0.0
    %1273 = vmatprep.subr.mxu0 0.0
    %1274 = vmatpush1.xpose.msra.mxu0 0.0
    %1275 = vmatprep.subr.mxu0 0.0
    %1276 = vmatpush1.xpose.msra.mxu0 0.0
    %1277 = vmatprep.subr.mxu0 0.0
    %1278 = vmatpush1.xpose.msra.mxu0 0.0
    %1279 = vmatprep.subr.mxu0 0.0
    %1280 = vmatpush1.xpose.msra.mxu0 0.0
    %1281 = vmatprep.subr.mxu0 0.0
    %1282 = vmatpush1.xpose.msra.mxu0 0.0
    %1283 = vmatprep.subr.mxu0 0.0
    %1284 = vmatpush1.xpose.msra.mxu0 0.0
    %1285 = vmatprep.subr.mxu0 0.0
    %1286 = vmatpush1.xpose.msra.mxu0 0.0
    %1287 = vmatprep.subr.mxu0 0.0
    %1288 = vmatpush1.xpose.msra.mxu0 0.0
    %1289 = vmatprep.subr.mxu0 0.0
    %1290 = vmatpush1.xpose.msra.mxu0 0.0
    %1291 = vmatprep.subr.mxu0 0.0
    %1292 = vmatpush1.xpose.msra.mxu0 0.0
    %1293 = vmatprep.subr.mxu0 0.0
    %1294 = vmatpush1.xpose.msra.mxu0 0.0
    %1295 = vmatprep.subr.mxu0 0.0
    %1296 = vmatpush1.xpose.msra.mxu0 0.0
    %1297 = vmatprep.subr.mxu0 0.0
    %1298 = vmatpush1.xpose.msra.mxu0 0.0
    %1299 = vmatprep.subr.mxu0 0.0
    %1300 = vmatpush1.xpose.msra.mxu0 0.0
    %1301 = vmatprep.subr.mxu0 0.0
    %1302 = vmatpush1.xpose.msra.mxu0 0.0
    %1303 = vmatprep.mubr.f32.mxu0 0.0
    %1304 = vmatmul.mubr.f32.gmra.mrb[0].mxu0 %v1235
    %v1305 = vpop.f32.mrb[0].mxu0
    %v1306 = vadd.f32 0.0, %v1305
    %v1307 = vpop.f32.mrb[0].mxu0
    %1308 = vdwg.mxu0
    %1309 = vrot.lane.b32.xlu0 %v209, 104
    %v1310 = vpop.permute.xlu0 %1309
    %1311 = vrot.lane.b32.xlu0 %v209, 72
    %v1312 = vpop.permute.xlu0 %1311
    %v1313 = vsel %vm215, %v1310, 0
    %v1315 = vsel %vm215, %v1312, 0
    %1317 = vmatprep.subr.mxu0 0.0
    %1318 = vmatpush1.xpose.msra.mxu0 %v1315
    %1319 = vmatprep.subr.mxu0 0.0
    %1320 = vmatpush1.xpose.msra.mxu0 0.0
    %1321 = vmatprep.subr.mxu0 0.0
    %1322 = vmatpush1.xpose.msra.mxu0 0.0
    %1323 = vmatprep.subr.mxu0 0.0
    %1324 = vmatpush1.xpose.msra.mxu0 0.0
    %1325 = vmatprep.subr.mxu0 0.0
    %1326 = vmatpush1.xpose.msra.mxu0 0.0
    %1327 = vmatprep.subr.mxu0 0.0
    %1328 = vmatpush1.xpose.msra.mxu0 0.0
    %1329 = vmatprep.subr.mxu0 0.0
    %1330 = vmatpush1.xpose.msra.mxu0 0.0
    %1331 = vmatprep.subr.mxu0 0.0
    %1332 = vmatpush1.xpose.msra.mxu0 0.0
    %1333 = vmatprep.subr.mxu0 0.0
    %1334 = vmatpush1.xpose.msra.mxu0 0.0
    %1335 = vmatprep.subr.mxu0 0.0
    %1336 = vmatpush1.xpose.msra.mxu0 0.0
    %1337 = vmatprep.subr.mxu0 0.0
    %1338 = vmatpush1.xpose.msra.mxu0 0.0
    %1339 = vmatprep.subr.mxu0 0.0
    %1340 = vmatpush1.xpose.msra.mxu0 0.0
    %1341 = vmatprep.subr.mxu0 0.0
    %1342 = vmatpush1.xpose.msra.mxu0 0.0
    %1343 = vmatprep.subr.mxu0 0.0
    %1344 = vmatpush1.xpose.msra.mxu0 0.0
    %1345 = vmatprep.subr.mxu0 0.0
    %1346 = vmatpush1.xpose.msra.mxu0 0.0
    %1347 = vmatprep.subr.mxu0 0.0
    %1348 = vmatpush1.xpose.msra.mxu0 0.0
    %1349 = vmatprep.subr.mxu0 0.0
    %1350 = vmatpush1.xpose.msra.mxu0 0.0
    %1351 = vmatprep.subr.mxu0 0.0
    %1352 = vmatpush1.xpose.msra.mxu0 0.0
    %1353 = vmatprep.subr.mxu0 0.0
    %1354 = vmatpush1.xpose.msra.mxu0 0.0
    %1355 = vmatprep.subr.mxu0 0.0
    %1356 = vmatpush1.xpose.msra.mxu0 0.0
    %1357 = vmatprep.subr.mxu0 0.0
    %1358 = vmatpush1.xpose.msra.mxu0 0.0
    %1359 = vmatprep.subr.mxu0 0.0
    %1360 = vmatpush1.xpose.msra.mxu0 0.0
    %1361 = vmatprep.subr.mxu0 0.0
    %1362 = vmatpush1.xpose.msra.mxu0 0.0
    %1363 = vmatprep.subr.mxu0 0.0
    %1364 = vmatpush1.xpose.msra.mxu0 0.0
    %1365 = vmatprep.subr.mxu0 0.0
    %1366 = vmatpush1.xpose.msra.mxu0 0.0
    %1367 = vmatprep.subr.mxu0 0.0
    %1368 = vmatpush1.xpose.msra.mxu0 0.0
    %1369 = vmatprep.subr.mxu0 0.0
    %1370 = vmatpush1.xpose.msra.mxu0 0.0
    %1371 = vmatprep.subr.mxu0 0.0
    %1372 = vmatpush1.xpose.msra.mxu0 0.0
    %1373 = vmatprep.subr.mxu0 0.0
    %1374 = vmatpush1.xpose.msra.mxu0 0.0
    %1375 = vmatprep.subr.mxu0 0.0
    %1376 = vmatpush1.xpose.msra.mxu0 0.0
    %1377 = vmatprep.subr.mxu0 0.0
    %1378 = vmatpush1.xpose.msra.mxu0 0.0
    %1379 = vmatprep.subr.mxu0 0.0
    %1380 = vmatpush1.xpose.msra.mxu0 0.0
    %1381 = vmatprep.mubr.f32.mxu0 0.0
    %1382 = vmatmul.mubr.f32.gmra.mrb[0].mxu0 %v1313
    %v1383 = vpop.f32.mrb[0].mxu0
    %v1384 = vadd.f32 0.0, %v1383
    %v1385 = vpop.f32.mrb[0].mxu0
    %1386 = vdwg.mxu0
    %v1387 = vmul.f32 %v1306, 0.35355338
    %v1388 = vmul.f32 %v1384, 0.35355338
    %v1389 = vadd.f32 %v1387, %v67
    %v1390 = vadd.f32 %v1388, %v71
    %v1391 = vsel %vm215, %v1389, -inf
    %1392 = vmax.xlane.f32.xlu0 %v1391
    %v1393 = vpop.xlane.xlu0 %1392
    %v1394 = vsel %vm215, %v1390, -inf
    %1395 = vmax.xlane.f32.xlu0 %v1394
    %v1396 = vpop.xlane.xlu0 %1395
    %v1397 = vsub.f32 %v1389, %v1393
    %v1398 = vsub.f32 %v1390, %v1396
    %v1399 = vmul.f32 %v1397, 1.442695
    %v1400 = vpow.pop %v1399
    %v1401 = vmul.f32 %v1398, 1.442695
    %v1402 = vpow.pop %v1401
    %v1403 = vsel %vm215, %v1400, 0.0
    %1404 = vadd.xlane.f32.xlu0 %v1403
    %v1405 = vpop.xlane.xlu0 %1404
    %v1406 = vsel %vm215, %v1402, 0.0
    %1407 = vadd.xlane.f32.xlu0 %v1406
    %v1408 = vpop.xlane.xlu0 %1407
    %v1409 = vrcp.pop %v1405
    %v1410 = vrcp.pop %v1408
    %v1411 = vmul.f32 %v1405, %v1409
    %v1412 = vmul.f32 %v1408, %v1410
    %v1413 = vsub.f32 2.0, %v1411
    %v1414 = vsub.f32 2.0, %v1412
    %v1415 = vmul.f32 %v1409, %v1413
    %v1416 = vmul.f32 %v1410, %v1414
    %v1417 = vmul.f32 %v1400, %v1415
    %v1418 = vmul.f32 %v1402, %v1416
    %1419 = vrot.lane.b32.xlu0 %v204, 40
    %v1420 = vpop.permute.xlu0 %1419
    %v1423 = vsel %vm215, %v1417, 0
    %1425 = vmatprep.subr.mxu0 0.0
    %1426 = vmatpush1.msra.mxu0 %v1420
    %1427 = vmatprep.subr.mxu0 0.0
    %1428 = vmatpush1.msra.mxu0 0.0
    %1429 = vmatprep.subr.mxu0 0.0
    %1430 = vmatpush1.msra.mxu0 0.0
    %1431 = vmatprep.subr.mxu0 0.0
    %1432 = vmatpush1.msra.mxu0 0.0
    %1433 = vmatprep.subr.mxu0 0.0
    %1434 = vmatpush1.msra.mxu0 0.0
    %1435 = vmatprep.subr.mxu0 0.0
    %1436 = vmatpush1.msra.mxu0 0.0
    %1437 = vmatprep.subr.mxu0 0.0
    %1438 = vmatpush1.msra.mxu0 0.0
    %1439 = vmatprep.subr.mxu0 0.0
    %1440 = vmatpush1.msra.mxu0 0.0
    %1441 = vmatprep.subr.mxu0 0.0
    %1442 = vmatpush1.msra.mxu0 0.0
    %1443 = vmatprep.subr.mxu0 0.0
    %1444 = vmatpush1.msra.mxu0 0.0
    %1445 = vmatprep.subr.mxu0 0.0
    %1446 = vmatpush1.msra.mxu0 0.0
    %1447 = vmatprep.subr.mxu0 0.0
    %1448 = vmatpush1.msra.mxu0 0.0
    %1449 = vmatprep.subr.mxu0 0.0
    %1450 = vmatpush1.msra.mxu0 0.0
    %1451 = vmatprep.subr.mxu0 0.0
    %1452 = vmatpush1.msra.mxu0 0.0
    %1453 = vmatprep.subr.mxu0 0.0
    %1454 = vmatpush1.msra.mxu0 0.0
    %1455 = vmatprep.subr.mxu0 0.0
    %1456 = vmatpush1.msra.mxu0 0.0
    %1457 = vmatprep.subr.mxu0 0.0
    %1458 = vmatpush1.msra.mxu0 0.0
    %1459 = vmatprep.subr.mxu0 0.0
    %1460 = vmatpush1.msra.mxu0 0.0
    %1461 = vmatprep.subr.mxu0 0.0
    %1462 = vmatpush1.msra.mxu0 0.0
    %1463 = vmatprep.subr.mxu0 0.0
    %1464 = vmatpush1.msra.mxu0 0.0
    %1465 = vmatprep.subr.mxu0 0.0
    %1466 = vmatpush1.msra.mxu0 0.0
    %1467 = vmatprep.subr.mxu0 0.0
    %1468 = vmatpush1.msra.mxu0 0.0
    %1469 = vmatprep.subr.mxu0 0.0
    %1470 = vmatpush1.msra.mxu0 0.0
    %1471 = vmatprep.subr.mxu0 0.0
    %1472 = vmatpush1.msra.mxu0 0.0
    %1473 = vmatprep.subr.mxu0 0.0
    %1474 = vmatpush1.msra.mxu0 0.0
    %1475 = vmatprep.subr.mxu0 0.0
    %1476 = vmatpush1.msra.mxu0 0.0
    %1477 = vmatprep.subr.mxu0 0.0
    %1478 = vmatpush1.msra.mxu0 0.0
    %1479 = vmatprep.subr.mxu0 0.0
    %1480 = vmatpush1.msra.mxu0 0.0
    %1481 = vmatprep.subr.mxu0 0.0
    %1482 = vmatpush1.msra.mxu0 0.0
    %1483 = vmatprep.subr.mxu0 0.0
    %1484 = vmatpush1.msra.mxu0 0.0
    %1485 = vmatprep.subr.mxu0 0.0
    %1486 = vmatpush1.msra.mxu0 0.0
    %1487 = vmatprep.subr.mxu0 0.0
    %1488 = vmatpush1.msra.mxu0 0.0
    %1489 = vmatprep.mubr.f32.mxu0 0.0
    %1490 = vmatmul.mubr.f32.gmra.mrb[0].mxu0 %v1423
    %v1491 = vpop.f32.mrb[0].mxu0
    %v1492 = vadd.f32 0.0, %v1491
    %v1493 = vpop.f32.mrb[0].mxu0
    %1494 = vdwg.mxu0
    %1495 = vrot.lane.b32.xlu0 %v209, 40
    %v1496 = vpop.permute.xlu0 %1495
    %v1499 = vsel %vm215, %v1418, 0
    %1501 = vmatprep.subr.mxu0 0.0
    %1502 = vmatpush1.msra.mxu0 %v1496
    %1503 = vmatprep.subr.mxu0 0.0
    %1504 = vmatpush1.msra.mxu0 0.0
    %1505 = vmatprep.subr.mxu0 0.0
    %1506 = vmatpush1.msra.mxu0 0.0
    %1507 = vmatprep.subr.mxu0 0.0
    %1508 = vmatpush1.msra.mxu0 0.0
    %1509 = vmatprep.subr.mxu0 0.0
    %1510 = vmatpush1.msra.mxu0 0.0
    %1511 = vmatprep.subr.mxu0 0.0
    %1512 = vmatpush1.msra.mxu0 0.0
    %1513 = vmatprep.subr.mxu0 0.0
    %1514 = vmatpush1.msra.mxu0 0.0
    %1515 = vmatprep.subr.mxu0 0.0
    %1516 = vmatpush1.msra.mxu0 0.0
    %1517 = vmatprep.subr.mxu0 0.0
    %1518 = vmatpush1.msra.mxu0 0.0
    %1519 = vmatprep.subr.mxu0 0.0
    %1520 = vmatpush1.msra.mxu0 0.0
    %1521 = vmatprep.subr.mxu0 0.0
    %1522 = vmatpush1.msra.mxu0 0.0
    %1523 = vmatprep.subr.mxu0 0.0
    %1524 = vmatpush1.msra.mxu0 0.0
    %1525 = vmatprep.subr.mxu0 0.0
    %1526 = vmatpush1.msra.mxu0 0.0
    %1527 = vmatprep.subr.mxu0 0.0
    %1528 = vmatpush1.msra.mxu0 0.0
    %1529 = vmatprep.subr.mxu0 0.0
    %1530 = vmatpush1.msra.mxu0 0.0
    %1531 = vmatprep.subr.mxu0 0.0
    %1532 = vmatpush1.msra.mxu0 0.0
    %1533 = vmatprep.subr.mxu0 0.0
    %1534 = vmatpush1.msra.mxu0 0.0
    %1535 = vmatprep.subr.mxu0 0.0
    %1536 = vmatpush1.msra.mxu0 0.0
    %1537 = vmatprep.subr.mxu0 0.0
    %1538 = vmatpush1.msra.mxu0 0.0
    %1539 = vmatprep.subr.mxu0 0.0
    %1540 = vmatpush1.msra.mxu0 0.0
    %1541 = vmatprep.subr.mxu0 0.0
    %1542 = vmatpush1.msra.mxu0 0.0
    %1543 = vmatprep.subr.mxu0 0.0
    %1544 = vmatpush1.msra.mxu0 0.0
    %1545 = vmatprep.subr.mxu0 0.0
    %1546 = vmatpush1.msra.mxu0 0.0
    %1547 = vmatprep.subr.mxu0 0.0
    %1548 = vmatpush1.msra.mxu0 0.0
    %1549 = vmatprep.subr.mxu0 0.0
    %1550 = vmatpush1.msra.mxu0 0.0
    %1551 = vmatprep.subr.mxu0 0.0
    %1552 = vmatpush1.msra.mxu0 0.0
    %1553 = vmatprep.subr.mxu0 0.0
    %1554 = vmatpush1.msra.mxu0 0.0
    %1555 = vmatprep.subr.mxu0 0.0
    %1556 = vmatpush1.msra.mxu0 0.0
    %1557 = vmatprep.subr.mxu0 0.0
    %1558 = vmatpush1.msra.mxu0 0.0
    %1559 = vmatprep.subr.mxu0 0.0
    %1560 = vmatpush1.msra.mxu0 0.0
    %1561 = vmatprep.subr.mxu0 0.0
    %1562 = vmatpush1.msra.mxu0 0.0
    %1563 = vmatprep.subr.mxu0 0.0
    %1564 = vmatpush1.msra.mxu0 0.0
    %1565 = vmatprep.mubr.f32.mxu0 0.0
    %1566 = vmatmul.mubr.f32.gmra.mrb[0].mxu0 %v1499
    %v1567 = vpop.f32.mrb[0].mxu0
    %v1568 = vadd.f32 0.0, %v1567
    %v1569 = vpop.f32.mrb[0].mxu0
    %1570 = vdwg.mxu0
    %1573 = vrot.lane.b32.xlu0 %v812, 8
    %v1574 = vpop.permute.xlu0 %1573
    %1575 = vrot.lane.b32.xlu0 %v888, 8
    %v1576 = vpop.permute.xlu0 %1575
    %1581 = vrot.lane.b32.xlu0 %v1152, 16
    %v1582 = vpop.permute.xlu0 %1581
    %1583 = vrot.lane.b32.xlu0 %v1228, 16
    %v1584 = vpop.permute.xlu0 %1583
    %1589 = vrot.lane.b32.xlu0 %v1492, 24
    %v1590 = vpop.permute.xlu0 %1589
    %1591 = vrot.lane.b32.xlu0 %v1568, 24
    %v1592 = vpop.permute.xlu0 %1591
    %v1595 = vsel %vm215, %v472, %v1574
    %v1596 = vsel %vm215, %v548, %v1576
    %vm1597 = vcmask 130048
    %v1598 = vsel %vm1597, %v1595, %v1582
    %v1599 = vsel %vm1597, %v1596, %v1584
    %vm1600 = vcmask 195584
    %v1601 = vsel %vm1600, %v1598, %v1590
    %v1602 = vsel %vm1600, %v1599, %v1592
    %v1603 = vld [vmem:[%s4] sm:$0xff]
    %v1604 = vld [vmem:[%s4 + $0x8] sm:$0xff]
    %v1605 = vld [vmem:[%s4 + $0x10] sm:$0xff]
    %v1606 = vld [vmem:[%s4 + $0x18] sm:$0xff]
    %v1607 = vld [vmem:[%s5] sm:$0x1]
    %v1609 = vlaneseq
    %v1610 = vshrl.u32 %v1609, 7
    %v1611 = vsub.s32 0, %v1610
    %v1612 = vrot.slane %v1607, %v1611
    %v1615 = vsel %vm76, %v1601, 0
    %v1618 = vsel %vm76, %v1602, 0
    %1620 = vmatprep.subr.mxu0 0.0
    %1621 = vmatpush1.msra.mxu0 %v1603
    %1622 = vmatprep.subr.mxu0 0.0
    %1623 = vmatpush1.msra.mxu0 %v1604
    %1624 = vmatprep.subr.mxu0 0.0
    %1625 = vmatpush1.msra.mxu0 %v1605
    %1626 = vmatprep.subr.mxu0 0.0
    %1627 = vmatpush1.msra.mxu0 %v1606
    %1628 = vmatprep.subr.mxu0 0.0
    %1629 = vmatpush1.msra.mxu0 0.0
    %1630 = vmatprep.subr.mxu0 0.0
    %1631 = vmatpush1.msra.mxu0 0.0
    %1632 = vmatprep.subr.mxu0 0.0
    %1633 = vmatpush1.msra.mxu0 0.0
    %1634 = vmatprep.subr.mxu0 0.0
    %1635 = vmatpush1.msra.mxu0 0.0
    %1636 = vmatprep.subr.mxu0 0.0
    %1637 = vmatpush1.msra.mxu0 0.0
    %1638 = vmatprep.subr.mxu0 0.0
    %1639 = vmatpush1.msra.mxu0 0.0
    %1640 = vmatprep.subr.mxu0 0.0
    %1641 = vmatpush1.msra.mxu0 0.0
    %1642 = vmatprep.subr.mxu0 0.0
    %1643 = vmatpush1.msra.mxu0 0.0
    %1644 = vmatprep.subr.mxu0 0.0
    %1645 = vmatpush1.msra.mxu0 0.0
    %1646 = vmatprep.subr.mxu0 0.0
    %1647 = vmatpush1.msra.mxu0 0.0
    %1648 = vmatprep.subr.mxu0 0.0
    %1649 = vmatpush1.msra.mxu0 0.0
    %1650 = vmatprep.subr.mxu0 0.0
    %1651 = vmatpush1.msra.mxu0 0.0
    %1652 = vmatprep.subr.mxu0 0.0
    %1653 = vmatpush1.msra.mxu0 0.0
    %1654 = vmatprep.subr.mxu0 0.0
    %1655 = vmatpush1.msra.mxu0 0.0
    %1656 = vmatprep.subr.mxu0 0.0
    %1657 = vmatpush1.msra.mxu0 0.0
    %1658 = vmatprep.subr.mxu0 0.0
    %1659 = vmatpush1.msra.mxu0 0.0
    %1660 = vmatprep.subr.mxu0 0.0
    %1661 = vmatpush1.msra.mxu0 0.0
    %1662 = vmatprep.subr.mxu0 0.0
    %1663 = vmatpush1.msra.mxu0 0.0
    %1664 = vmatprep.subr.mxu0 0.0
    %1665 = vmatpush1.msra.mxu0 0.0
    %1666 = vmatprep.subr.mxu0 0.0
    %1667 = vmatpush1.msra.mxu0 0.0
    %1668 = vmatprep.subr.mxu0 0.0
    %1669 = vmatpush1.msra.mxu0 0.0
    %1670 = vmatprep.subr.mxu0 0.0
    %1671 = vmatpush1.msra.mxu0 0.0
    %1672 = vmatprep.subr.mxu0 0.0
    %1673 = vmatpush1.msra.mxu0 0.0
    %1674 = vmatprep.subr.mxu0 0.0
    %1675 = vmatpush1.msra.mxu0 0.0
    %1676 = vmatprep.subr.mxu0 0.0
    %1677 = vmatpush1.msra.mxu0 0.0
    %1678 = vmatprep.subr.mxu0 0.0
    %1679 = vmatpush1.msra.mxu0 0.0
    %1680 = vmatprep.subr.mxu0 0.0
    %1681 = vmatpush1.msra.mxu0 0.0
    %1682 = vmatprep.subr.mxu0 0.0
    %1683 = vmatpush1.msra.mxu0 0.0
    %1684 = vmatprep.mubr.f32.mxu0 0.0
    %1685 = vmatmul.mubr.f32.gmra.mrb[0].mxu0 %v1615
    %v1686 = vpop.f32.mrb[0].mxu0
    %v1687 = vadd.f32 %v1612, %v1686
    %v1688 = vpop.f32.mrb[0].mxu0
    %1689 = vmatprep.mubr.f32.mxu0 0.0
    %1690 = vmatmul.mubr.f32.gmra.mrb[0].mxu0 %v1618
    %v1691 = vpop.f32.mrb[0].mxu0
    %v1692 = vadd.f32 %v1612, %v1691
    %v1693 = vpop.f32.mrb[0].mxu0
    %1694 = vdwg.mxu0
    %v1695 = vadd.f32 %v54, %v1687
    %v1696 = vadd.f32 %v55, %v1692
    %v1697 = vld [vmem:[%s8] sm:$0x1]
    %v1698 = vld [vmem:[%s9] sm:$0x1]
    %v1699 = vsel %vm76, %v1695, 0.0
    %1700 = vadd.xlane.f32.xlu0 %v1699
    %v1701 = vpop.xlane.xlu0 %1700
    %v1702 = vsel %vm76, %v1696, 0.0
    %1703 = vadd.xlane.f32.xlu0 %v1702
    %v1704 = vpop.xlane.xlu0 %1703
    %v1705 = vmul.f32 %v1701, %v83
    %v1706 = vmul.f32 %v1704, %v83
    %v1707 = vsub.f32 %v1695, %v1705
    %v1708 = vsub.f32 %v1696, %v1706
    %v1709 = vmul.f32 %v1707, %v1707
    %v1710 = vmul.f32 %v1708, %v1708
    %v1711 = vsel %vm76, %v1709, 0.0
    %1712 = vadd.xlane.f32.xlu0 %v1711
    %v1713 = vpop.xlane.xlu0 %1712
    %v1714 = vsel %vm76, %v1710, 0.0
    %1715 = vadd.xlane.f32.xlu0 %v1714
    %v1716 = vpop.xlane.xlu0 %1715
    %v1717 = vmul.f32 %v1713, 0.032258064
    %v1718 = vmul.f32 %v1716, 0.032258064
    %v1719 = vadd.f32 %v1717, 1e-06
    %v1720 = vadd.f32 %v1718, 1e-06
    %v1721 = vrsqrt.pop %v1719
    %v1722 = vrsqrt.pop %v1720
    %v1723 = vmul.f32 %v1707, %v1721
    %v1724 = vmul.f32 %v1708, %v1722
    %v1726 = vlaneseq
    %v1727 = vshrl.u32 %v1726, 7
    %v1728 = vsub.s32 0, %v1727
    %v1729 = vrot.slane %v1697, %v1728
    %v1731 = vmul.f32 %v1729, %v1723
    %v1732 = vmul.f32 %v1729, %v1724
    %v1734 = vlaneseq
    %v1735 = vshrl.u32 %v1734, 7
    %v1736 = vsub.s32 0, %v1735
    %v1737 = vrot.slane %v1698, %v1736
    %v1739 = vadd.f32 %v1731, %v1737
    %v1740 = vadd.f32 %v1732, %v1737
    %v1741 = vld [vmem:[%s10] sm:$0xff]
    %v1742 = vld [vmem:[%s10 + $0x8] sm:$0xff]
    %v1743 = vld [vmem:[%s10 + $0x10] sm:$0xff]
    %v1744 = vld [vmem:[%s10 + $0x18] sm:$0xff]
    %v1745 = vld [vmem:[%s11] sm:$0x1]
    %v1747 = vlaneseq
    %v1748 = vshrl.u32 %v1747, 7
    %v1749 = vsub.s32 0, %v1748
    %v1750 = vrot.slane %v1745, %v1749
    %v1753 = vsel %vm76, %v1739, 0
    %v1756 = vsel %vm76, %v1740, 0
    %1758 = vmatprep.subr.mxu0 0.0
    %1759 = vmatpush1.msra.mxu0 %v1741
    %1760 = vmatprep.subr.mxu0 0.0
    %1761 = vmatpush1.msra.mxu0 %v1742
    %1762 = vmatprep.subr.mxu0 0.0
    %1763 = vmatpush1.msra.mxu0 %v1743
    %1764 = vmatprep.subr.mxu0 0.0
    %1765 = vmatpush1.msra.mxu0 %v1744
    %1766 = vmatprep.subr.mxu0 0.0
    %1767 = vmatpush1.msra.mxu0 0.0
    %1768 = vmatprep.subr.mxu0 0.0
    %1769 = vmatpush1.msra.mxu0 0.0
    %1770 = vmatprep.subr.mxu0 0.0
    %1771 = vmatpush1.msra.mxu0 0.0
    %1772 = vmatprep.subr.mxu0 0.0
    %1773 = vmatpush1.msra.mxu0 0.0
    %1774 = vmatprep.subr.mxu0 0.0
    %1775 = vmatpush1.msra.mxu0 0.0
    %1776 = vmatprep.subr.mxu0 0.0
    %1777 = vmatpush1.msra.mxu0 0.0
    %1778 = vmatprep.subr.mxu0 0.0
    %1779 = vmatpush1.msra.mxu0 0.0
    %1780 = vmatprep.subr.mxu0 0.0
    %1781 = vmatpush1.msra.mxu0 0.0
    %1782 = vmatprep.subr.mxu0 0.0
    %1783 = vmatpush1.msra.mxu0 0.0
    %1784 = vmatprep.subr.mxu0 0.0
    %1785 = vmatpush1.msra.mxu0 0.0
    %1786 = vmatprep.subr.mxu0 0.0
    %1787 = vmatpush1.msra.mxu0 0.0
    %1788 = vmatprep.subr.mxu0 0.0
    %1789 = vmatpush1.msra.mxu0 0.0
    %1790 = vmatprep.subr.mxu0 0.0
    %1791 = vmatpush1.msra.mxu0 0.0
    %1792 = vmatprep.subr.mxu0 0.0
    %1793 = vmatpush1.msra.mxu0 0.0
    %1794 = vmatprep.subr.mxu0 0.0
    %1795 = vmatpush1.msra.mxu0 0.0
    %1796 = vmatprep.subr.mxu0 0.0
    %1797 = vmatpush1.msra.mxu0 0.0
    %1798 = vmatprep.subr.mxu0 0.0
    %1799 = vmatpush1.msra.mxu0 0.0
    %1800 = vmatprep.subr.mxu0 0.0
    %1801 = vmatpush1.msra.mxu0 0.0
    %1802 = vmatprep.subr.mxu0 0.0
    %1803 = vmatpush1.msra.mxu0 0.0
    %1804 = vmatprep.subr.mxu0 0.0
    %1805 = vmatpush1.msra.mxu0 0.0
    %1806 = vmatprep.subr.mxu0 0.0
    %1807 = vmatpush1.msra.mxu0 0.0
    %1808 = vmatprep.subr.mxu0 0.0
    %1809 = vmatpush1.msra.mxu0 0.0
    %1810 = vmatprep.subr.mxu0 0.0
    %1811 = vmatpush1.msra.mxu0 0.0
    %1812 = vmatprep.subr.mxu0 0.0
    %1813 = vmatpush1.msra.mxu0 0.0
    %1814 = vmatprep.subr.mxu0 0.0
    %1815 = vmatpush1.msra.mxu0 0.0
    %1816 = vmatprep.subr.mxu0 0.0
    %1817 = vmatpush1.msra.mxu0 0.0
    %1818 = vmatprep.subr.mxu0 0.0
    %1819 = vmatpush1.msra.mxu0 0.0
    %1820 = vmatprep.subr.mxu0 0.0
    %1821 = vmatpush1.msra.mxu0 0.0
    %1822 = vmatprep.mubr.f32.mxu0 0.0
    %1823 = vmatmul.mubr.f32.gmra.mrb[0].mxu0 %v1753
    %v1824 = vpop.f32.mrb[0].mxu0
    %v1825 = vadd.f32 %v1750, %v1824
    %v1826 = vpop.f32.mrb[0].mxu0
    %1827 = vmatprep.mubr.f32.mxu0 0.0
    %1828 = vmatmul.mubr.f32.gmra.mrb[0].mxu0 %v1756
    %v1829 = vpop.f32.mrb[0].mxu0
    %v1830 = vadd.f32 %v1750, %v1829
    %v1831 = vpop.f32.mrb[0].mxu0
    %1832 = vdwg.mxu0
    %v1833 = vmax.f32 %v1825, 0.0
    %v1834 = vmax.f32 %v1830, 0.0
    %v1835 = vld [vmem:[%s12] sm:$0xff]
    %v1836 = vld [vmem:[%s12 + $0x8] sm:$0xff]
    %v1837 = vld [vmem:[%s12 + $0x10] sm:$0xff]
    %v1838 = vld [vmem:[%s12 + $0x18] sm:$0xff]
    %v1839 = vld [vmem:[%s12 + $0x20] sm:$0xff]
    %v1840 = vld [vmem:[%s12 + $0x28] sm:$0xff]
    %v1841 = vld [vmem:[%s12 + $0x30] sm:$0xff]
    %v1842 = vld [vmem:[%s12 + $0x38] sm:$0xff]
    %vm1843 = vcmask 523264
    %v1845 = vsel %vm1843, %v1833, 0
    %v1848 = vsel %vm1843, %v1834, 0
    %1850 = vmatprep.subr.mxu0 0.0
    %1851 = vmatpush1.msra.mxu0 %v1835
    %1852 = vmatprep.subr.mxu0 0.0
    %1853 = vmatpush1.msra.mxu0 %v1836
    %1854 = vmatprep.subr.mxu0 0.0
    %1855 = vmatpush1.msra.mxu0 %v1837
    %1856 = vmatprep.subr.mxu0 0.0
    %1857 = vmatpush1.msra.mxu0 %v1838
    %1858 = vmatprep.subr.mxu0 0.0
    %1859 = vmatpush1.msra.mxu0 %v1839
    %1860 = vmatprep.subr.mxu0 0.0
    %1861 = vmatpush1.msra.mxu0 %v1840
    %1862 = vmatprep.subr.mxu0 0.0
    %1863 = vmatpush1.msra.mxu0 %v1841
    %1864 = vmatprep.subr.mxu0 0.0
    %1865 = vmatpush1.msra.mxu0 %v1842
    %1866 = vmatprep.subr.mxu0 0.0
    %1867 = vmatpush1.msra.mxu0 0.0
    %1868 = vmatprep.subr.mxu0 0.0
    %1869 = vmatpush1.msra.mxu0 0.0
    %1870 = vmatprep.subr.mxu0 0.0
    %1871 = vmatpush1.msra.mxu0 0.0
    %1872 = vmatprep.subr.mxu0 0.0
    %1873 = vmatpush1.msra.mxu0 0.0
    %1874 = vmatprep.subr.mxu0 0.0
    %1875 = vmatpush1.msra.mxu0 0.0
    %1876 = vmatprep.subr.mxu0 0.0
    %1877 = vmatpush1.msra.mxu0 0.0
    %1878 = vmatprep.subr.mxu0 0.0
    %1879 = vmatpush1.msra.mxu0 0.0
    %1880 = vmatprep.subr.mxu0 0.0
    %1881 = vmatpush1.msra.mxu0 0.0
    %1882 = vmatprep.subr.mxu0 0.0
    %1883 = vmatpush1.msra.mxu0 0.0
    %1884 = vmatprep.subr.mxu0 0.0
    %1885 = vmatpush1.msra.mxu0 0.0
    %1886 = vmatprep.subr.mxu0 0.0
    %1887 = vmatpush1.msra.mxu0 0.0
    %1888 = vmatprep.subr.mxu0 0.0
    %1889 = vmatpush1.msra.mxu0 0.0
    %1890 = vmatprep.subr.mxu0 0.0
    %1891 = vmatpush1.msra.mxu0 0.0
    %1892 = vmatprep.subr.mxu0 0.0
    %1893 = vmatpush1.msra.mxu0 0.0
    %1894 = vmatprep.subr.mxu0 0.0
    %1895 = vmatpush1.msra.mxu0 0.0
    %1896 = vmatprep.subr.mxu0 0.0
    %1897 = vmatpush1.msra.mxu0 0.0
    %1898 = vmatprep.subr.mxu0 0.0
    %1899 = vmatpush1.msra.mxu0 0.0
    %1900 = vmatprep.subr.mxu0 0.0
    %1901 = vmatpush1.msra.mxu0 0.0
    %1902 = vmatprep.subr.mxu0 0.0
    %1903 = vmatpush1.msra.mxu0 0.0
    %1904 = vmatprep.subr.mxu0 0.0
    %1905 = vmatpush1.msra.mxu0 0.0
    %1906 = vmatprep.subr.mxu0 0.0
    %1907 = vmatpush1.msra.mxu0 0.0
    %1908 = vmatprep.subr.mxu0 0.0
    %1909 = vmatpush1.msra.mxu0 0.0
    %1910 = vmatprep.subr.mxu0 0.0
    %1911 = vmatpush1.msra.mxu0 0.0
    %1912 = vmatprep.subr.mxu0 0.0
    %1913 = vmatpush1.msra.mxu0 0.0
    %1914 = vmatprep.mubr.f32.mxu0 0.0
    %1915 = vmatmul.mubr.f32.gmra.mrb[0].mxu0 %v1845
    %v1916 = vpop.f32.mrb[0].mxu0
    %v1917 = vadd.f32 0.0, %v1916
    %v1918 = vpop.f32.mrb[0].mxu0
    %1919 = vmatprep.mubr.f32.mxu0 0.0
    %1920 = vmatmul.mubr.f32.gmra.mrb[0].mxu0 %v1848
    %v1921 = vpop.f32.mrb[0].mxu0
    %v1922 = vadd.f32 0.0, %v1921
    %v1923 = vpop.f32.mrb[0].mxu0
    %1924 = vdwg.mxu0
    %v1925 = vadd.f32 %v1695, %v1917
    %v1926 = vadd.f32 %v1696, %v1922
    %v1927 = vld [vmem:[%s13] sm:$0x1]
    %v1929 = vlaneseq
    %v1930 = vshrl.u32 %v1929, 7
    %v1931 = vsub.s32 0, %v1930
    %v1932 = vrot.slane %v1927, %v1931
    %v1934 = vadd.f32 %v1925, %v1932
    %v1935 = vadd.f32 %v1926, %v1932
    %s1936 = scalar_lea.vmem %s6, 1
    %v1937 = vld [vmem:[%s1936] sm:$0x1]
    %s1938 = scalar_lea.vmem %s7, 1
    %v1939 = vld [vmem:[%s1938] sm:$0x1]
    %v1940 = vsel %vm76, %v1934, 0.0
    %1941 = vadd.xlane.f32.xlu0 %v1940
    %v1942 = vpop.xlane.xlu0 %1941
    %v1943 = vsel %vm76, %v1935, 0.0
    %1944 = vadd.xlane.f32.xlu0 %v1943
    %v1945 = vpop.xlane.xlu0 %1944
    %v1946 = vmul.f32 %v1942, %v83
    %v1947 = vmul.f32 %v1945, %v83
    %v1948 = vsub.f32 %v1934, %v1946
    %v1949 = vsub.f32 %v1935, %v1947
    %v1950 = vmul.f32 %v1948, %v1948
    %v1951 = vmul.f32 %v1949, %v1949
    %v1952 = vsel %vm76, %v1950, 0.0
    %1953 = vadd.xlane.f32.xlu0 %v1952
    %v1954 = vpop.xlane.xlu0 %1953
    %v1955 = vsel %vm76, %v1951, 0.0
    %1956 = vadd.xlane.f32.xlu0 %v1955
    %v1957 = vpop.xlane.xlu0 %1956
    %v1958 = vmul.f32 %v1954, 0.032258064
    %v1959 = vmul.f32 %v1957, 0.032258064
    %v1960 = vadd.f32 %v1958, 1e-06
    %v1961 = vadd.f32 %v1959, 1e-06
    %v1962 = vrsqrt.pop %v1960
    %v1963 = vrsqrt.pop %v1961
    %v1964 = vmul.f32 %v1948, %v1962
    %v1965 = vmul.f32 %v1949, %v1963
    %v1967 = vlaneseq
    %v1968 = vshrl.u32 %v1967, 7
    %v1969 = vsub.s32 0, %v1968
    %v1970 = vrot.slane %v1937, %v1969
    %v1972 = vmul.f32 %v1970, %v1964
    %v1973 = vmul.f32 %v1970, %v1965
    %v1975 = vlaneseq
    %v1976 = vshrl.u32 %v1975, 7
    %v1977 = vsub.s32 0, %v1976
    %v1978 = vrot.slane %v1939, %v1977
    %v1980 = vadd.f32 %v1972, %v1978
    %v1981 = vadd.f32 %v1973, %v1978
    %s1982 = scalar_lea.vmem %s2, 32
    %v1983 = vld [vmem:[%s1982] sm:$0xff]
    %v1984 = vld [vmem:[%s1982 + $0x8] sm:$0xff]
    %v1985 = vld [vmem:[%s1982 + $0x10] sm:$0xff]
    %v1986 = vld [vmem:[%s1982 + $0x18] sm:$0xff]
    %s1987 = scalar_lea.vmem %s3, 1
    %v1988 = vld [vmem:[%s1987] sm:$0x1]
    %v1990 = vlaneseq
    %v1991 = vshrl.u32 %v1990, 7
    %v1992 = vsub.s32 0, %v1991
    %v1993 = vrot.slane %v1988, %v1992
    %v1996 = vsel %vm76, %v1980, 0
    %v1999 = vsel %vm76, %v1981, 0
    %2001 = vmatprep.subr.mxu0 0.0
    %2002 = vmatpush1.msra.mxu0 %v1983
    %2003 = vmatprep.subr.mxu0 0.0
    %2004 = vmatpush1.msra.mxu0 %v1984
    %2005 = vmatprep.subr.mxu0 0.0
    %2006 = vmatpush1.msra.mxu0 %v1985
    %2007 = vmatprep.subr.mxu0 0.0
    %2008 = vmatpush1.msra.mxu0 %v1986
    %2009 = vmatprep.subr.mxu0 0.0
    %2010 = vmatpush1.msra.mxu0 0.0
    %2011 = vmatprep.subr.mxu0 0.0
    %2012 = vmatpush1.msra.mxu0 0.0
    %2013 = vmatprep.subr.mxu0 0.0
    %2014 = vmatpush1.msra.mxu0 0.0
    %2015 = vmatprep.subr.mxu0 0.0
    %2016 = vmatpush1.msra.mxu0 0.0
    %2017 = vmatprep.subr.mxu0 0.0
    %2018 = vmatpush1.msra.mxu0 0.0
    %2019 = vmatprep.subr.mxu0 0.0
    %2020 = vmatpush1.msra.mxu0 0.0
    %2021 = vmatprep.subr.mxu0 0.0
    %2022 = vmatpush1.msra.mxu0 0.0
    %2023 = vmatprep.subr.mxu0 0.0
    %2024 = vmatpush1.msra.mxu0 0.0
    %2025 = vmatprep.subr.mxu0 0.0
    %2026 = vmatpush1.msra.mxu0 0.0
    %2027 = vmatprep.subr.mxu0 0.0
    %2028 = vmatpush1.msra.mxu0 0.0
    %2029 = vmatprep.subr.mxu0 0.0
    %2030 = vmatpush1.msra.mxu0 0.0
    %2031 = vmatprep.subr.mxu0 0.0
    %2032 = vmatpush1.msra.mxu0 0.0
    %2033 = vmatprep.subr.mxu0 0.0
    %2034 = vmatpush1.msra.mxu0 0.0
    %2035 = vmatprep.subr.mxu0 0.0
    %2036 = vmatpush1.msra.mxu0 0.0
    %2037 = vmatprep.subr.mxu0 0.0
    %2038 = vmatpush1.msra.mxu0 0.0
    %2039 = vmatprep.subr.mxu0 0.0
    %2040 = vmatpush1.msra.mxu0 0.0
    %2041 = vmatprep.subr.mxu0 0.0
    %2042 = vmatpush1.msra.mxu0 0.0
    %2043 = vmatprep.subr.mxu0 0.0
    %2044 = vmatpush1.msra.mxu0 0.0
    %2045 = vmatprep.subr.mxu0 0.0
    %2046 = vmatpush1.msra.mxu0 0.0
    %2047 = vmatprep.subr.mxu0 0.0
    %2048 = vmatpush1.msra.mxu0 0.0
    %2049 = vmatprep.subr.mxu0 0.0
    %2050 = vmatpush1.msra.mxu0 0.0
    %2051 = vmatprep.subr.mxu0 0.0
    %2052 = vmatpush1.msra.mxu0 0.0
    %2053 = vmatprep.subr.mxu0 0.0
    %2054 = vmatpush1.msra.mxu0 0.0
    %2055 = vmatprep.subr.mxu0 0.0
    %2056 = vmatpush1.msra.mxu0 0.0
    %2057 = vmatprep.subr.mxu0 0.0
    %2058 = vmatpush1.msra.mxu0 0.0
    %2059 = vmatprep.subr.mxu0 0.0
    %2060 = vmatpush1.msra.mxu0 0.0
    %2061 = vmatprep.subr.mxu0 0.0
    %2062 = vmatpush1.msra.mxu0 0.0
    %2063 = vmatprep.subr.mxu0 0.0
    %2064 = vmatpush1.msra.mxu0 0.0
    %2065 = vmatprep.mubr.f32.mxu0 0.0
    %2066 = vmatmul.mubr.f32.gmra.mrb[0].mxu0 %v1996
    %v2067 = vpop.f32.mrb[0].mxu0
    %v2068 = vadd.f32 %v1993, %v2067
    %v2069 = vpop.f32.mrb[0].mxu0
    %2070 = vmatprep.mubr.f32.mxu0 0.0
    %2071 = vmatmul.mubr.f32.gmra.mrb[0].mxu0 %v1999
    %v2072 = vpop.f32.mrb[0].mxu0
    %v2073 = vadd.f32 %v1993, %v2072
    %v2074 = vpop.f32.mrb[0].mxu0
    %2075 = vdwg.mxu0
    %2077 = vrot.lane.b32.xlu0 %v2068, 96
    %v2078 = vpop.permute.xlu0 %2077
    %v2079 = vsel %vm215, %v2068, 0
    %v2081 = vsel %vm215, %v2078, 0
    %2083 = vmatprep.subr.mxu0 0.0
    %2084 = vmatpush1.xpose.msra.mxu0 %v2081
    %2085 = vmatprep.subr.mxu0 0.0
    %2086 = vmatpush1.xpose.msra.mxu0 0.0
    %2087 = vmatprep.subr.mxu0 0.0
    %2088 = vmatpush1.xpose.msra.mxu0 0.0
    %2089 = vmatprep.subr.mxu0 0.0
    %2090 = vmatpush1.xpose.msra.mxu0 0.0
    %2091 = vmatprep.subr.mxu0 0.0
    %2092 = vmatpush1.xpose.msra.mxu0 0.0
    %2093 = vmatprep.subr.mxu0 0.0
    %2094 = vmatpush1.xpose.msra.mxu0 0.0
    %2095 = vmatprep.subr.mxu0 0.0
    %2096 = vmatpush1.xpose.msra.mxu0 0.0
    %2097 = vmatprep.subr.mxu0 0.0
    %2098 = vmatpush1.xpose.msra.mxu0 0.0
    %2099 = vmatprep.subr.mxu0 0.0
    %2100 = vmatpush1.xpose.msra.mxu0 0.0
    %2101 = vmatprep.subr.mxu0 0.0
    %2102 = vmatpush1.xpose.msra.mxu0 0.0
    %2103 = vmatprep.subr.mxu0 0.0
    %2104 = vmatpush1.xpose.msra.mxu0 0.0
    %2105 = vmatprep.subr.mxu0 0.0
    %2106 = vmatpush1.xpose.msra.mxu0 0.0
    %2107 = vmatprep.subr.mxu0 0.0
    %2108 = vmatpush1.xpose.msra.mxu0 0.0
    %2109 = vmatprep.subr.mxu0 0.0
    %2110 = vmatpush1.xpose.msra.mxu0 0.0
    %2111 = vmatprep.subr.mxu0 0.0
    %2112 = vmatpush1.xpose.msra.mxu0 0.0
    %2113 = vmatprep.subr.mxu0 0.0
    %2114 = vmatpush1.xpose.msra.mxu0 0.0
    %2115 = vmatprep.subr.mxu0 0.0
    %2116 = vmatpush1.xpose.msra.mxu0 0.0
    %2117 = vmatprep.subr.mxu0 0.0
    %2118 = vmatpush1.xpose.msra.mxu0 0.0
    %2119 = vmatprep.subr.mxu0 0.0
    %2120 = vmatpush1.xpose.msra.mxu0 0.0
    %2121 = vmatprep.subr.mxu0 0.0
    %2122 = vmatpush1.xpose.msra.mxu0 0.0
    %2123 = vmatprep.subr.mxu0 0.0
    %2124 = vmatpush1.xpose.msra.mxu0 0.0
    %2125 = vmatprep.subr.mxu0 0.0
    %2126 = vmatpush1.xpose.msra.mxu0 0.0
    %2127 = vmatprep.subr.mxu0 0.0
    %2128 = vmatpush1.xpose.msra.mxu0 0.0
    %2129 = vmatprep.subr.mxu0 0.0
    %2130 = vmatpush1.xpose.msra.mxu0 0.0
    %2131 = vmatprep.subr.mxu0 0.0
    %2132 = vmatpush1.xpose.msra.mxu0 0.0
    %2133 = vmatprep.subr.mxu0 0.0
    %2134 = vmatpush1.xpose.msra.mxu0 0.0
    %2135 = vmatprep.subr.mxu0 0.0
    %2136 = vmatpush1.xpose.msra.mxu0 0.0
    %2137 = vmatprep.subr.mxu0 0.0
    %2138 = vmatpush1.xpose.msra.mxu0 0.0
    %2139 = vmatprep.subr.mxu0 0.0
    %2140 = vmatpush1.xpose.msra.mxu0 0.0
    %2141 = vmatprep.subr.mxu0 0.0
    %2142 = vmatpush1.xpose.msra.mxu0 0.0
    %2143 = vmatprep.subr.mxu0 0.0
    %2144 = vmatpush1.xpose.msra.mxu0 0.0
    %2145 = vmatprep.subr.mxu0 0.0
    %2146 = vmatpush1.xpose.msra.mxu0 0.0
    %2147 = vmatprep.mubr.f32.mxu0 0.0
    %2148 = vmatmul.mubr.f32.gmra.mrb[0].mxu0 %v2079
    %v2149 = vpop.f32.mrb[0].mxu0
    %v2150 = vadd.f32 0.0, %v2149
    %v2151 = vpop.f32.mrb[0].mxu0
    %2152 = vdwg.mxu0
    %2154 = vrot.lane.b32.xlu0 %v2073, 96
    %v2155 = vpop.permute.xlu0 %2154
    %v2156 = vsel %vm215, %v2073, 0
    %v2158 = vsel %vm215, %v2155, 0
    %2160 = vmatprep.subr.mxu0 0.0
    %2161 = vmatpush1.xpose.msra.mxu0 %v2158
    %2162 = vmatprep.subr.mxu0 0.0
    %2163 = vmatpush1.xpose.msra.mxu0 0.0
    %2164 = vmatprep.subr.mxu0 0.0
    %2165 = vmatpush1.xpose.msra.mxu0 0.0
    %2166 = vmatprep.subr.mxu0 0.0
    %2167 = vmatpush1.xpose.msra.mxu0 0.0
    %2168 = vmatprep.subr.mxu0 0.0
    %2169 = vmatpush1.xpose.msra.mxu0 0.0
    %2170 = vmatprep.subr.mxu0 0.0
    %2171 = vmatpush1.xpose.msra.mxu0 0.0
    %2172 = vmatprep.subr.mxu0 0.0
    %2173 = vmatpush1.xpose.msra.mxu0 0.0
    %2174 = vmatprep.subr.mxu0 0.0
    %2175 = vmatpush1.xpose.msra.mxu0 0.0
    %2176 = vmatprep.subr.mxu0 0.0
    %2177 = vmatpush1.xpose.msra.mxu0 0.0
    %2178 = vmatprep.subr.mxu0 0.0
    %2179 = vmatpush1.xpose.msra.mxu0 0.0
    %2180 = vmatprep.subr.mxu0 0.0
    %2181 = vmatpush1.xpose.msra.mxu0 0.0
    %2182 = vmatprep.subr.mxu0 0.0
    %2183 = vmatpush1.xpose.msra.mxu0 0.0
    %2184 = vmatprep.subr.mxu0 0.0
    %2185 = vmatpush1.xpose.msra.mxu0 0.0
    %2186 = vmatprep.subr.mxu0 0.0
    %2187 = vmatpush1.xpose.msra.mxu0 0.0
    %2188 = vmatprep.subr.mxu0 0.0
    %2189 = vmatpush1.xpose.msra.mxu0 0.0
    %2190 = vmatprep.subr.mxu0 0.0
    %2191 = vmatpush1.xpose.msra.mxu0 0.0
    %2192 = vmatprep.subr.mxu0 0.0
    %2193 = vmatpush1.xpose.msra.mxu0 0.0
    %2194 = vmatprep.subr.mxu0 0.0
    %2195 = vmatpush1.xpose.msra.mxu0 0.0
    %2196 = vmatprep.subr.mxu0 0.0
    %2197 = vmatpush1.xpose.msra.mxu0 0.0
    %2198 = vmatprep.subr.mxu0 0.0
    %2199 = vmatpush1.xpose.msra.mxu0 0.0
    %2200 = vmatprep.subr.mxu0 0.0
    %2201 = vmatpush1.xpose.msra.mxu0 0.0
    %2202 = vmatprep.subr.mxu0 0.0
    %2203 = vmatpush1.xpose.msra.mxu0 0.0
    %2204 = vmatprep.subr.mxu0 0.0
    %2205 = vmatpush1.xpose.msra.mxu0 0.0
    %2206 = vmatprep.subr.mxu0 0.0
    %2207 = vmatpush1.xpose.msra.mxu0 0.0
    %2208 = vmatprep.subr.mxu0 0.0
    %2209 = vmatpush1.xpose.msra.mxu0 0.0
    %2210 = vmatprep.subr.mxu0 0.0
    %2211 = vmatpush1.xpose.msra.mxu0 0.0
    %2212 = vmatprep.subr.mxu0 0.0
    %2213 = vmatpush1.xpose.msra.mxu0 0.0
    %2214 = vmatprep.subr.mxu0 0.0
    %2215 = vmatpush1.xpose.msra.mxu0 0.0
    %2216 = vmatprep.subr.mxu0 0.0
    %2217 = vmatpush1.xpose.msra.mxu0 0.0
    %2218 = vmatprep.subr.mxu0 0.0
    %2219 = vmatpush1.xpose.msra.mxu0 0.0
    %2220 = vmatprep.subr.mxu0 0.0
    %2221 = vmatpush1.xpose.msra.mxu0 0.0
    %2222 = vmatprep.subr.mxu0 0.0
    %2223 = vmatpush1.xpose.msra.mxu0 0.0
    %2224 = vmatprep.mubr.f32.mxu0 0.0
    %2225 = vmatmul.mubr.f32.gmra.mrb[0].mxu0 %v2156
    %v2226 = vpop.f32.mrb[0].mxu0
    %v2227 = vadd.f32 0.0, %v2226
    %v2228 = vpop.f32.mrb[0].mxu0
    %2229 = vdwg.mxu0
    %v2230 = vmul.f32 %v2150, 0.35355338
    %v2231 = vmul.f32 %v2227, 0.35355338
    %v2232 = vadd.f32 %v2230, %v67
    %v2233 = vadd.f32 %v2231, %v71
    %v2234 = vsel %vm215, %v2232, -inf
    %2235 = vmax.xlane.f32.xlu0 %v2234
    %v2236 = vpop.xlane.xlu0 %2235
    %v2237 = vsel %vm215, %v2233, -inf
    %2238 = vmax.xlane.f32.xlu0 %v2237
    %v2239 = vpop.xlane.xlu0 %2238
    %v2240 = vsub.f32 %v2232, %v2236
    %v2241 = vsub.f32 %v2233, %v2239
    %v2242 = vmul.f32 %v2240, 1.442695
    %v2243 = vpow.pop %v2242
    %v2244 = vmul.f32 %v2241, 1.442695
    %v2245 = vpow.pop %v2244
    %v2246 = vsel %vm215, %v2243, 0.0
    %2247 = vadd.xlane.f32.xlu0 %v2246
    %v2248 = vpop.xlane.xlu0 %2247
    %v2249 = vsel %vm215, %v2245, 0.0
    %2250 = vadd.xlane.f32.xlu0 %v2249
    %v2251 = vpop.xlane.xlu0 %2250
    %v2252 = vrcp.pop %v2248
    %v2253 = vrcp.pop %v2251
    %v2254 = vmul.f32 %v2248, %v2252
    %v2255 = vmul.f32 %v2251, %v2253
    %v2256 = vsub.f32 2.0, %v2254
    %v2257 = vsub.f32 2.0, %v2255
    %v2258 = vmul.f32 %v2252, %v2256
    %v2259 = vmul.f32 %v2253, %v2257
    %v2260 = vmul.f32 %v2243, %v2258
    %v2261 = vmul.f32 %v2245, %v2259
    %2262 = vrot.lane.b32.xlu0 %v2068, 64
    %v2263 = vpop.permute.xlu0 %2262
    %v2266 = vsel %vm215, %v2260, 0
    %2268 = vmatprep.subr.mxu0 0.0
    %2269 = vmatpush1.msra.mxu0 %v2263
    %2270 = vmatprep.subr.mxu0 0.0
    %2271 = vmatpush1.msra.mxu0 0.0
    %2272 = vmatprep.subr.mxu0 0.0
    %2273 = vmatpush1.msra.mxu0 0.0
    %2274 = vmatprep.subr.mxu0 0.0
    %2275 = vmatpush1.msra.mxu0 0.0
    %2276 = vmatprep.subr.mxu0 0.0
    %2277 = vmatpush1.msra.mxu0 0.0
    %2278 = vmatprep.subr.mxu0 0.0
    %2279 = vmatpush1.msra.mxu0 0.0
    %2280 = vmatprep.subr.mxu0 0.0
    %2281 = vmatpush1.msra.mxu0 0.0
    %2282 = vmatprep.subr.mxu0 0.0
    %2283 = vmatpush1.msra.mxu0 0.0
    %2284 = vmatprep.subr.mxu0 0.0
    %2285 = vmatpush1.msra.mxu0 0.0
    %2286 = vmatprep.subr.mxu0 0.0
    %2287 = vmatpush1.msra.mxu0 0.0
    %2288 = vmatprep.subr.mxu0 0.0
    %2289 = vmatpush1.msra.mxu0 0.0
    %2290 = vmatprep.subr.mxu0 0.0
    %2291 = vmatpush1.msra.mxu0 0.0
    %2292 = vmatprep.subr.mxu0 0.0
    %2293 = vmatpush1.msra.mxu0 0.0
    %2294 = vmatprep.subr.mxu0 0.0
    %2295 = vmatpush1.msra.mxu0 0.0
    %2296 = vmatprep.subr.mxu0 0.0
    %2297 = vmatpush1.msra.mxu0 0.0
    %2298 = vmatprep.subr.mxu0 0.0
    %2299 = vmatpush1.msra.mxu0 0.0
    %2300 = vmatprep.subr.mxu0 0.0
    %2301 = vmatpush1.msra.mxu0 0.0
    %2302 = vmatprep.subr.mxu0 0.0
    %2303 = vmatpush1.msra.mxu0 0.0
    %2304 = vmatprep.subr.mxu0 0.0
    %2305 = vmatpush1.msra.mxu0 0.0
    %2306 = vmatprep.subr.mxu0 0.0
    %2307 = vmatpush1.msra.mxu0 0.0
    %2308 = vmatprep.subr.mxu0 0.0
    %2309 = vmatpush1.msra.mxu0 0.0
    %2310 = vmatprep.subr.mxu0 0.0
    %2311 = vmatpush1.msra.mxu0 0.0
    %2312 = vmatprep.subr.mxu0 0.0
    %2313 = vmatpush1.msra.mxu0 0.0
    %2314 = vmatprep.subr.mxu0 0.0
    %2315 = vmatpush1.msra.mxu0 0.0
    %2316 = vmatprep.subr.mxu0 0.0
    %2317 = vmatpush1.msra.mxu0 0.0
    %2318 = vmatprep.subr.mxu0 0.0
    %2319 = vmatpush1.msra.mxu0 0.0
    %2320 = vmatprep.subr.mxu0 0.0
    %2321 = vmatpush1.msra.mxu0 0.0
    %2322 = vmatprep.subr.mxu0 0.0
    %2323 = vmatpush1.msra.mxu0 0.0
    %2324 = vmatprep.subr.mxu0 0.0
    %2325 = vmatpush1.msra.mxu0 0.0
    %2326 = vmatprep.subr.mxu0 0.0
    %2327 = vmatpush1.msra.mxu0 0.0
    %2328 = vmatprep.subr.mxu0 0.0
    %2329 = vmatpush1.msra.mxu0 0.0
    %2330 = vmatprep.subr.mxu0 0.0
    %2331 = vmatpush1.msra.mxu0 0.0
    %2332 = vmatprep.mubr.f32.mxu0 0.0
    %2333 = vmatmul.mubr.f32.gmra.mrb[0].mxu0 %v2266
    %v2334 = vpop.f32.mrb[0].mxu0
    %v2335 = vadd.f32 0.0, %v2334
    %v2336 = vpop.f32.mrb[0].mxu0
    %2337 = vdwg.mxu0
    %2338 = vrot.lane.b32.xlu0 %v2073, 64
    %v2339 = vpop.permute.xlu0 %2338
    %v2342 = vsel %vm215, %v2261, 0
    %2344 = vmatprep.subr.mxu0 0.0
    %2345 = vmatpush1.msra.mxu0 %v2339
    %2346 = vmatprep.subr.mxu0 0.0
    %2347 = vmatpush1.msra.mxu0 0.0
    %2348 = vmatprep.subr.mxu0 0.0
    %2349 = vmatpush1.msra.mxu0 0.0
    %2350 = vmatprep.subr.mxu0 0.0
    %2351 = vmatpush1.msra.mxu0 0.0
    %2352 = vmatprep.subr.mxu0 0.0
    %2353 = vmatpush1.msra.mxu0 0.0
    %2354 = vmatprep.subr.mxu0 0.0
    %2355 = vmatpush1.msra.mxu0 0.0
    %2356 = vmatprep.subr.mxu0 0.0
    %2357 = vmatpush1.msra.mxu0 0.0
    %2358 = vmatprep.subr.mxu0 0.0
    %2359 = vmatpush1.msra.mxu0 0.0
    %2360 = vmatprep.subr.mxu0 0.0
    %2361 = vmatpush1.msra.mxu0 0.0
    %2362 = vmatprep.subr.mxu0 0.0
    %2363 = vmatpush1.msra.mxu0 0.0
    %2364 = vmatprep.subr.mxu0 0.0
    %2365 = vmatpush1.msra.mxu0 0.0
    %2366 = vmatprep.subr.mxu0 0.0
    %2367 = vmatpush1.msra.mxu0 0.0
    %2368 = vmatprep.subr.mxu0 0.0
    %2369 = vmatpush1.msra.mxu0 0.0
    %2370 = vmatprep.subr.mxu0 0.0
    %2371 = vmatpush1.msra.mxu0 0.0
    %2372 = vmatprep.subr.mxu0 0.0
    %2373 = vmatpush1.msra.mxu0 0.0
    %2374 = vmatprep.subr.mxu0 0.0
    %2375 = vmatpush1.msra.mxu0 0.0
    %2376 = vmatprep.subr.mxu0 0.0
    %2377 = vmatpush1.msra.mxu0 0.0
    %2378 = vmatprep.subr.mxu0 0.0
    %2379 = vmatpush1.msra.mxu0 0.0
    %2380 = vmatprep.subr.mxu0 0.0
    %2381 = vmatpush1.msra.mxu0 0.0
    %2382 = vmatprep.subr.mxu0 0.0
    %2383 = vmatpush1.msra.mxu0 0.0
    %2384 = vmatprep.subr.mxu0 0.0
    %2385 = vmatpush1.msra.mxu0 0.0
    %2386 = vmatprep.subr.mxu0 0.0
    %2387 = vmatpush1.msra.mxu0 0.0
    %2388 = vmatprep.subr.mxu0 0.0
    %2389 = vmatpush1.msra.mxu0 0.0
    %2390 = vmatprep.subr.mxu0 0.0
    %2391 = vmatpush1.msra.mxu0 0.0
    %2392 = vmatprep.subr.mxu0 0.0
    %2393 = vmatpush1.msra.mxu0 0.0
    %2394 = vmatprep.subr.mxu0 0.0
    %2395 = vmatpush1.msra.mxu0 0.0
    %2396 = vmatprep.subr.mxu0 0.0
    %2397 = vmatpush1.msra.mxu0 0.0
    %2398 = vmatprep.subr.mxu0 0.0
    %2399 = vmatpush1.msra.mxu0 0.0
    %2400 = vmatprep.subr.mxu0 0.0
    %2401 = vmatpush1.msra.mxu0 0.0
    %2402 = vmatprep.subr.mxu0 0.0
    %2403 = vmatpush1.msra.mxu0 0.0
    %2404 = vmatprep.subr.mxu0 0.0
    %2405 = vmatpush1.msra.mxu0 0.0
    %2406 = vmatprep.subr.mxu0 0.0
    %2407 = vmatpush1.msra.mxu0 0.0
    %2408 = vmatprep.mubr.f32.mxu0 0.0
    %2409 = vmatmul.mubr.f32.gmra.mrb[0].mxu0 %v2342
    %v2410 = vpop.f32.mrb[0].mxu0
    %v2411 = vadd.f32 0.0, %v2410
    %v2412 = vpop.f32.mrb[0].mxu0
    %2413 = vdwg.mxu0
    %2414 = vrot.lane.b32.xlu0 %v2068, 120
    %v2415 = vpop.permute.xlu0 %2414
    %2416 = vrot.lane.b32.xlu0 %v2068, 88
    %v2417 = vpop.permute.xlu0 %2416
    %v2418 = vsel %vm215, %v2415, 0
    %v2420 = vsel %vm215, %v2417, 0
    %2422 = vmatprep.subr.mxu0 0.0
    %2423 = vmatpush1.xpose.msra.mxu0 %v2420
    %2424 = vmatprep.subr.mxu0 0.0
    %2425 = vmatpush1.xpose.msra.mxu0 0.0
    %2426 = vmatprep.subr.mxu0 0.0
    %2427 = vmatpush1.xpose.msra.mxu0 0.0
    %2428 = vmatprep.subr.mxu0 0.0
    %2429 = vmatpush1.xpose.msra.mxu0 0.0
    %2430 = vmatprep.subr.mxu0 0.0
    %2431 = vmatpush1.xpose.msra.mxu0 0.0
    %2432 = vmatprep.subr.mxu0 0.0
    %2433 = vmatpush1.xpose.msra.mxu0 0.0
    %2434 = vmatprep.subr.mxu0 0.0
    %2435 = vmatpush1.xpose.msra.mxu0 0.0
    %2436 = vmatprep.subr.mxu0 0.0
    %2437 = vmatpush1.xpose.msra.mxu0 0.0
    %2438 = vmatprep.subr.mxu0 0.0
    %2439 = vmatpush1.xpose.msra.mxu0 0.0
    %2440 = vmatprep.subr.mxu0 0.0
    %2441 = vmatpush1.xpose.msra.mxu0 0.0
    %2442 = vmatprep.subr.mxu0 0.0
    %2443 = vmatpush1.xpose.msra.mxu0 0.0
    %2444 = vmatprep.subr.mxu0 0.0
    %2445 = vmatpush1.xpose.msra.mxu0 0.0
    %2446 = vmatprep.subr.mxu0 0.0
    %2447 = vmatpush1.xpose.msra.mxu0 0.0
    %2448 = vmatprep.subr.mxu0 0.0
    %2449 = vmatpush1.xpose.msra.mxu0 0.0
    %2450 = vmatprep.subr.mxu0 0.0
    %2451 = vmatpush1.xpose.msra.mxu0 0.0
    %2452 = vmatprep.subr.mxu0 0.0
    %2453 = vmatpush1.xpose.msra.mxu0 0.0
    %2454 = vmatprep.subr.mxu0 0.0
    %2455 = vmatpush1.xpose.msra.mxu0 0.0
    %2456 = vmatprep.subr.mxu0 0.0
    %2457 = vmatpush1.xpose.msra.mxu0 0.0
    %2458 = vmatprep.subr.mxu0 0.0
    %2459 = vmatpush1.xpose.msra.mxu0 0.0
    %2460 = vmatprep.subr.mxu0 0.0
    %2461 = vmatpush1.xpose.msra.mxu0 0.0
    %2462 = vmatprep.subr.mxu0 0.0
    %2463 = vmatpush1.xpose.msra.mxu0 0.0
    %2464 = vmatprep.subr.mxu0 0.0
    %2465 = vmatpush1.xpose.msra.mxu0 0.0
    %2466 = vmatprep.subr.mxu0 0.0
    %2467 = vmatpush1.xpose.msra.mxu0 0.0
    %2468 = vmatprep.subr.mxu0 0.0
    %2469 = vmatpush1.xpose.msra.mxu0 0.0
    %2470 = vmatprep.subr.mxu0 0.0
    %2471 = vmatpush1.xpose.msra.mxu0 0.0
    %2472 = vmatprep.subr.mxu0 0.0
    %2473 = vmatpush1.xpose.msra.mxu0 0.0
    %2474 = vmatprep.subr.mxu0 0.0
    %2475 = vmatpush1.xpose.msra.mxu0 0.0
    %2476 = vmatprep.subr.mxu0 0.0
    %2477 = vmatpush1.xpose.msra.mxu0 0.0
    %2478 = vmatprep.subr.mxu0 0.0
    %2479 = vmatpush1.xpose.msra.mxu0 0.0
    %2480 = vmatprep.subr.mxu0 0.0
    %2481 = vmatpush1.xpose.msra.mxu0 0.0
    %2482 = vmatprep.subr.mxu0 0.0
    %2483 = vmatpush1.xpose.msra.mxu0 0.0
    %2484 = vmatprep.subr.mxu0 0.0
    %2485 = vmatpush1.xpose.msra.mxu0 0.0
    %2486 = vmatprep.mubr.f32.mxu0 0.0
    %2487 = vmatmul.mubr.f32.gmra.mrb[0].mxu0 %v2418
    %v2488 = vpop.f32.mrb[0].mxu0
    %v2489 = vadd.f32 0.0, %v2488
    %v2490 = vpop.f32.mrb[0].mxu0
    %2491 = vdwg.mxu0
    %2492 = vrot.lane.b32.xlu0 %v2073, 120
    %v2493 = vpop.permute.xlu0 %2492
    %2494 = vrot.lane.b32.xlu0 %v2073, 88
    %v2495 = vpop.permute.xlu0 %2494
    %v2496 = vsel %vm215, %v2493, 0
    %v2498 = vsel %vm215, %v2495, 0
    %2500 = vmatprep.subr.mxu0 0.0
    %2501 = vmatpush1.xpose.msra.mxu0 %v2498
    %2502 = vmatprep.subr.mxu0 0.0
    %2503 = vmatpush1.xpose.msra.mxu0 0.0
    %2504 = vmatprep.subr.mxu0 0.0
    %2505 = vmatpush1.xpose.msra.mxu0 0.0
    %2506 = vmatprep.subr.mxu0 0.0
    %2507 = vmatpush1.xpose.msra.mxu0 0.0
    %2508 = vmatprep.subr.mxu0 0.0
    %2509 = vmatpush1.xpose.msra.mxu0 0.0
    %2510 = vmatprep.subr.mxu0 0.0
    %2511 = vmatpush1.xpose.msra.mxu0 0.0
    %2512 = vmatprep.subr.mxu0 0.0
    %2513 = vmatpush1.xpose.msra.mxu0 0.0
    %2514 = vmatprep.subr.mxu0 0.0
    %2515 = vmatpush1.xpose.msra.mxu0 0.0
    %2516 = vmatprep.subr.mxu0 0.0
    %2517 = vmatpush1.xpose.msra.mxu0 0.0
    %2518 = vmatprep.subr.mxu0 0.0
    %2519 = vmatpush1.xpose.msra.mxu0 0.0
    %2520 = vmatprep.subr.mxu0 0.0
    %2521 = vmatpush1.xpose.msra.mxu0 0.0
    %2522 = vmatprep.subr.mxu0 0.0
    %2523 = vmatpush1.xpose.msra.mxu0 0.0
    %2524 = vmatprep.subr.mxu0 0.0
    %2525 = vmatpush1.xpose.msra.mxu0 0.0
    %2526 = vmatprep.subr.mxu0 0.0
    %2527 = vmatpush1.xpose.msra.mxu0 0.0
    %2528 = vmatprep.subr.mxu0 0.0
    %2529 = vmatpush1.xpose.msra.mxu0 0.0
    %2530 = vmatprep.subr.mxu0 0.0
    %2531 = vmatpush1.xpose.msra.mxu0 0.0
    %2532 = vmatprep.subr.mxu0 0.0
    %2533 = vmatpush1.xpose.msra.mxu0 0.0
    %2534 = vmatprep.subr.mxu0 0.0
    %2535 = vmatpush1.xpose.msra.mxu0 0.0
    %2536 = vmatprep.subr.mxu0 0.0
    %2537 = vmatpush1.xpose.msra.mxu0 0.0
    %2538 = vmatprep.subr.mxu0 0.0
    %2539 = vmatpush1.xpose.msra.mxu0 0.0
    %2540 = vmatprep.subr.mxu0 0.0
    %2541 = vmatpush1.xpose.msra.mxu0 0.0
    %2542 = vmatprep.subr.mxu0 0.0
    %2543 = vmatpush1.xpose.msra.mxu0 0.0
    %2544 = vmatprep.subr.mxu0 0.0
    %2545 = vmatpush1.xpose.msra.mxu0 0.0
    %2546 = vmatprep.subr.mxu0 0.0
    %2547 = vmatpush1.xpose.msra.mxu0 0.0
    %2548 = vmatprep.subr.mxu0 0.0
    %2549 = vmatpush1.xpose.msra.mxu0 0.0
    %2550 = vmatprep.subr.mxu0 0.0
    %2551 = vmatpush1.xpose.msra.mxu0 0.0
    %2552 = vmatprep.subr.mxu0 0.0
    %2553 = vmatpush1.xpose.msra.mxu0 0.0
    %2554 = vmatprep.subr.mxu0 0.0
    %2555 = vmatpush1.xpose.msra.mxu0 0.0
    %2556 = vmatprep.subr.mxu0 0.0
    %2557 = vmatpush1.xpose.msra.mxu0 0.0
    %2558 = vmatprep.subr.mxu0 0.0
    %2559 = vmatpush1.xpose.msra.mxu0 0.0
    %2560 = vmatprep.subr.mxu0 0.0
    %2561 = vmatpush1.xpose.msra.mxu0 0.0
    %2562 = vmatprep.subr.mxu0 0.0
    %2563 = vmatpush1.xpose.msra.mxu0 0.0
    %2564 = vmatprep.mubr.f32.mxu0 0.0
    %2565 = vmatmul.mubr.f32.gmra.mrb[0].mxu0 %v2496
    %v2566 = vpop.f32.mrb[0].mxu0
    %v2567 = vadd.f32 0.0, %v2566
    %v2568 = vpop.f32.mrb[0].mxu0
    %2569 = vdwg.mxu0
    %v2570 = vmul.f32 %v2489, 0.35355338
    %v2571 = vmul.f32 %v2567, 0.35355338
    %v2572 = vadd.f32 %v2570, %v67
    %v2573 = vadd.f32 %v2571, %v71
    %v2574 = vsel %vm215, %v2572, -inf
    %2575 = vmax.xlane.f32.xlu0 %v2574
    %v2576 = vpop.xlane.xlu0 %2575
    %v2577 = vsel %vm215, %v2573, -inf
    %2578 = vmax.xlane.f32.xlu0 %v2577
    %v2579 = vpop.xlane.xlu0 %2578
    %v2580 = vsub.f32 %v2572, %v2576
    %v2581 = vsub.f32 %v2573, %v2579
    %v2582 = vmul.f32 %v2580, 1.442695
    %v2583 = vpow.pop %v2582
    %v2584 = vmul.f32 %v2581, 1.442695
    %v2585 = vpow.pop %v2584
    %v2586 = vsel %vm215, %v2583, 0.0
    %2587 = vadd.xlane.f32.xlu0 %v2586
    %v2588 = vpop.xlane.xlu0 %2587
    %v2589 = vsel %vm215, %v2585, 0.0
    %2590 = vadd.xlane.f32.xlu0 %v2589
    %v2591 = vpop.xlane.xlu0 %2590
    %v2592 = vrcp.pop %v2588
    %v2593 = vrcp.pop %v2591
    %v2594 = vmul.f32 %v2588, %v2592
    %v2595 = vmul.f32 %v2591, %v2593
    %v2596 = vsub.f32 2.0, %v2594
    %v2597 = vsub.f32 2.0, %v2595
    %v2598 = vmul.f32 %v2592, %v2596
    %v2599 = vmul.f32 %v2593, %v2597
    %v2600 = vmul.f32 %v2583, %v2598
    %v2601 = vmul.f32 %v2585, %v2599
    %2602 = vrot.lane.b32.xlu0 %v2068, 56
    %v2603 = vpop.permute.xlu0 %2602
    %v2606 = vsel %vm215, %v2600, 0
    %2608 = vmatprep.subr.mxu0 0.0
    %2609 = vmatpush1.msra.mxu0 %v2603
    %2610 = vmatprep.subr.mxu0 0.0
    %2611 = vmatpush1.msra.mxu0 0.0
    %2612 = vmatprep.subr.mxu0 0.0
    %2613 = vmatpush1.msra.mxu0 0.0
    %2614 = vmatprep.subr.mxu0 0.0
    %2615 = vmatpush1.msra.mxu0 0.0
    %2616 = vmatprep.subr.mxu0 0.0
    %2617 = vmatpush1.msra.mxu0 0.0
    %2618 = vmatprep.subr.mxu0 0.0
    %2619 = vmatpush1.msra.mxu0 0.0
    %2620 = vmatprep.subr.mxu0 0.0
    %2621 = vmatpush1.msra.mxu0 0.0
    %2622 = vmatprep.subr.mxu0 0.0
    %2623 = vmatpush1.msra.mxu0 0.0
    %2624 = vmatprep.subr.mxu0 0.0
    %2625 = vmatpush1.msra.mxu0 0.0
    %2626 = vmatprep.subr.mxu0 0.0
    %2627 = vmatpush1.msra.mxu0 0.0
    %2628 = vmatprep.subr.mxu0 0.0
    %2629 = vmatpush1.msra.mxu0 0.0
    %2630 = vmatprep.subr.mxu0 0.0
    %2631 = vmatpush1.msra.mxu0 0.0
    %2632 = vmatprep.subr.mxu0 0.0
    %2633 = vmatpush1.msra.mxu0 0.0
    %2634 = vmatprep.subr.mxu0 0.0
    %2635 = vmatpush1.msra.mxu0 0.0
    %2636 = vmatprep.subr.mxu0 0.0
    %2637 = vmatpush1.msra.mxu0 0.0
    %2638 = vmatprep.subr.mxu0 0.0
    %2639 = vmatpush1.msra.mxu0 0.0
    %2640 = vmatprep.subr.mxu0 0.0
    %2641 = vmatpush1.msra.mxu0 0.0
    %2642 = vmatprep.subr.mxu0 0.0
    %2643 = vmatpush1.msra.mxu0 0.0
    %2644 = vmatprep.subr.mxu0 0.0
    %2645 = vmatpush1.msra.mxu0 0.0
    %2646 = vmatprep.subr.mxu0 0.0
    %2647 = vmatpush1.msra.mxu0 0.0
    %2648 = vmatprep.subr.mxu0 0.0
    %2649 = vmatpush1.msra.mxu0 0.0
    %2650 = vmatprep.subr.mxu0 0.0
    %2651 = vmatpush1.msra.mxu0 0.0
    %2652 = vmatprep.subr.mxu0 0.0
    %2653 = vmatpush1.msra.mxu0 0.0
    %2654 = vmatprep.subr.mxu0 0.0
    %2655 = vmatpush1.msra.mxu0 0.0
    %2656 = vmatprep.subr.mxu0 0.0
    %2657 = vmatpush1.msra.mxu0 0.0
    %2658 = vmatprep.subr.mxu0 0.0
    %2659 = vmatpush1.msra.mxu0 0.0
    %2660 = vmatprep.subr.mxu0 0.0
    %2661 = vmatpush1.msra.mxu0 0.0
    %2662 = vmatprep.subr.mxu0 0.0
    %2663 = vmatpush1.msra.mxu0 0.0
    %2664 = vmatprep.subr.mxu0 0.0
    %2665 = vmatpush1.msra.mxu0 0.0
    %2666 = vmatprep.subr.mxu0 0.0
    %2667 = vmatpush1.msra.mxu0 0.0
    %2668 = vmatprep.subr.mxu0 0.0
    %2669 = vmatpush1.msra.mxu0 0.0
    %2670 = vmatprep.subr.mxu0 0.0
    %2671 = vmatpush1.msra.mxu0 0.0
    %2672 = vmatprep.mubr.f32.mxu0 0.0
    %2673 = vmatmul.mubr.f32.gmra.mrb[0].mxu0 %v2606
    %v2674 = vpop.f32.mrb[0].mxu0
    %v2675 = vadd.f32 0.0, %v2674
    %v2676 = vpop.f32.mrb[0].mxu0
    %2677 = vdwg.mxu0
    %2678 = vrot.lane.b32.xlu0 %v2073, 56
    %v2679 = vpop.permute.xlu0 %2678
    %v2682 = vsel %vm215, %v2601, 0
    %2684 = vmatprep.subr.mxu0 0.0
    %2685 = vmatpush1.msra.mxu0 %v2679
    %2686 = vmatprep.subr.mxu0 0.0
    %2687 = vmatpush1.msra.mxu0 0.0
    %2688 = vmatprep.subr.mxu0 0.0
    %2689 = vmatpush1.msra.mxu0 0.0
    %2690 = vmatprep.subr.mxu0 0.0
    %2691 = vmatpush1.msra.mxu0 0.0
    %2692 = vmatprep.subr.mxu0 0.0
    %2693 = vmatpush1.msra.mxu0 0.0
    %2694 = vmatprep.subr.mxu0 0.0
    %2695 = vmatpush1.msra.mxu0 0.0
    %2696 = vmatprep.subr.mxu0 0.0
    %2697 = vmatpush1.msra.mxu0 0.0
    %2698 = vmatprep.subr.mxu0 0.0
    %2699 = vmatpush1.msra.mxu0 0.0
    %2700 = vmatprep.subr.mxu0 0.0
    %2701 = vmatpush1.msra.mxu0 0.0
    %2702 = vmatprep.subr.mxu0 0.0
    %2703 = vmatpush1.msra.mxu0 0.0
    %2704 = vmatprep.subr.mxu0 0.0
    %2705 = vmatpush1.msra.mxu0 0.0
    %2706 = vmatprep.subr.mxu0 0.0
    %2707 = vmatpush1.msra.mxu0 0.0
    %2708 = vmatprep.subr.mxu0 0.0
    %2709 = vmatpush1.msra.mxu0 0.0
    %2710 = vmatprep.subr.mxu0 0.0
    %2711 = vmatpush1.msra.mxu0 0.0
    %2712 = vmatprep.subr.mxu0 0.0
    %2713 = vmatpush1.msra.mxu0 0.0
    %2714 = vmatprep.subr.mxu0 0.0
    %2715 = vmatpush1.msra.mxu0 0.0
    %2716 = vmatprep.subr.mxu0 0.0
    %2717 = vmatpush1.msra.mxu0 0.0
    %2718 = vmatprep.subr.mxu0 0.0
    %2719 = vmatpush1.msra.mxu0 0.0
    %2720 = vmatprep.subr.mxu0 0.0
    %2721 = vmatpush1.msra.mxu0 0.0
    %2722 = vmatprep.subr.mxu0 0.0
    %2723 = vmatpush1.msra.mxu0 0.0
    %2724 = vmatprep.subr.mxu0 0.0
    %2725 = vmatpush1.msra.mxu0 0.0
    %2726 = vmatprep.subr.mxu0 0.0
    %2727 = vmatpush1.msra.mxu0 0.0
    %2728 = vmatprep.subr.mxu0 0.0
    %2729 = vmatpush1.msra.mxu0 0.0
    %2730 = vmatprep.subr.mxu0 0.0
    %2731 = vmatpush1.msra.mxu0 0.0
    %2732 = vmatprep.subr.mxu0 0.0
    %2733 = vmatpush1.msra.mxu0 0.0
    %2734 = vmatprep.subr.mxu0 0.0
    %2735 = vmatpush1.msra.mxu0 0.0
    %2736 = vmatprep.subr.mxu0 0.0
    %2737 = vmatpush1.msra.mxu0 0.0
    %2738 = vmatprep.subr.mxu0 0.0
    %2739 = vmatpush1.msra.mxu0 0.0
    %2740 = vmatprep.subr.mxu0 0.0
    %2741 = vmatpush1.msra.mxu0 0.0
    %2742 = vmatprep.subr.mxu0 0.0
    %2743 = vmatpush1.msra.mxu0 0.0
    %2744 = vmatprep.subr.mxu0 0.0
    %2745 = vmatpush1.msra.mxu0 0.0
    %2746 = vmatprep.subr.mxu0 0.0
    %2747 = vmatpush1.msra.mxu0 0.0
    %2748 = vmatprep.mubr.f32.mxu0 0.0
    %2749 = vmatmul.mubr.f32.gmra.mrb[0].mxu0 %v2682
    %v2750 = vpop.f32.mrb[0].mxu0
    %v2751 = vadd.f32 0.0, %v2750
    %v2752 = vpop.f32.mrb[0].mxu0
    %2753 = vdwg.mxu0
    %2754 = vrot.lane.b32.xlu0 %v2068, 112
    %v2755 = vpop.permute.xlu0 %2754
    %2756 = vrot.lane.b32.xlu0 %v2068, 80
    %v2757 = vpop.permute.xlu0 %2756
    %v2758 = vsel %vm215, %v2755, 0
    %v2760 = vsel %vm215, %v2757, 0
    %2762 = vmatprep.subr.mxu0 0.0
    %2763 = vmatpush1.xpose.msra.mxu0 %v2760
    %2764 = vmatprep.subr.mxu0 0.0
    %2765 = vmatpush1.xpose.msra.mxu0 0.0
    %2766 = vmatprep.subr.mxu0 0.0
    %2767 = vmatpush1.xpose.msra.mxu0 0.0
    %2768 = vmatprep.subr.mxu0 0.0
    %2769 = vmatpush1.xpose.msra.mxu0 0.0
    %2770 = vmatprep.subr.mxu0 0.0
    %2771 = vmatpush1.xpose.msra.mxu0 0.0
    %2772 = vmatprep.subr.mxu0 0.0
    %2773 = vmatpush1.xpose.msra.mxu0 0.0
    %2774 = vmatprep.subr.mxu0 0.0
    %2775 = vmatpush1.xpose.msra.mxu0 0.0
    %2776 = vmatprep.subr.mxu0 0.0
    %2777 = vmatpush1.xpose.msra.mxu0 0.0
    %2778 = vmatprep.subr.mxu0 0.0
    %2779 = vmatpush1.xpose.msra.mxu0 0.0
    %2780 = vmatprep.subr.mxu0 0.0
    %2781 = vmatpush1.xpose.msra.mxu0 0.0
    %2782 = vmatprep.subr.mxu0 0.0
    %2783 = vmatpush1.xpose.msra.mxu0 0.0
    %2784 = vmatprep.subr.mxu0 0.0
    %2785 = vmatpush1.xpose.msra.mxu0 0.0
    %2786 = vmatprep.subr.mxu0 0.0
    %2787 = vmatpush1.xpose.msra.mxu0 0.0
    %2788 = vmatprep.subr.mxu0 0.0
    %2789 = vmatpush1.xpose.msra.mxu0 0.0
    %2790 = vmatprep.subr.mxu0 0.0
    %2791 = vmatpush1.xpose.msra.mxu0 0.0
    %2792 = vmatprep.subr.mxu0 0.0
    %2793 = vmatpush1.xpose.msra.mxu0 0.0
    %2794 = vmatprep.subr.mxu0 0.0
    %2795 = vmatpush1.xpose.msra.mxu0 0.0
    %2796 = vmatprep.subr.mxu0 0.0
    %2797 = vmatpush1.xpose.msra.mxu0 0.0
    %2798 = vmatprep.subr.mxu0 0.0
    %2799 = vmatpush1.xpose.msra.mxu0 0.0
    %2800 = vmatprep.subr.mxu0 0.0
    %2801 = vmatpush1.xpose.msra.mxu0 0.0
    %2802 = vmatprep.subr.mxu0 0.0
    %2803 = vmatpush1.xpose.msra.mxu0 0.0
    %2804 = vmatprep.subr.mxu0 0.0
    %2805 = vmatpush1.xpose.msra.mxu0 0.0
    %2806 = vmatprep.subr.mxu0 0.0
    %2807 = vmatpush1.xpose.msra.mxu0 0.0
    %2808 = vmatprep.subr.mxu0 0.0
    %2809 = vmatpush1.xpose.msra.mxu0 0.0
    %2810 = vmatprep.subr.mxu0 0.0
    %2811 = vmatpush1.xpose.msra.mxu0 0.0
    %2812 = vmatprep.subr.mxu0 0.0
    %2813 = vmatpush1.xpose.msra.mxu0 0.0
    %2814 = vmatprep.subr.mxu0 0.0
    %2815 = vmatpush1.xpose.msra.mxu0 0.0
    %2816 = vmatprep.subr.mxu0 0.0
    %2817 = vmatpush1.xpose.msra.mxu0 0.0
    %2818 = vmatprep.subr.mxu0 0.0
    %2819 = vmatpush1.xpose.msra.mxu0 0.0
    %2820 = vmatprep.subr.mxu0 0.0
    %2821 = vmatpush1.xpose.msra.mxu0 0.0
    %2822 = vmatprep.subr.mxu0 0.0
    %2823 = vmatpush1.xpose.msra.mxu0 0.0
    %2824 = vmatprep.subr.mxu0 0.0
    %2825 = vmatpush1.xpose.msra.mxu0 0.0
    %2826 = vmatprep.mubr.f32.mxu0 0.0
    %2827 = vmatmul.mubr.f32.gmra.mrb[0].mxu0 %v2758
    %v2828 = vpop.f32.mrb[0].mxu0
    %v2829 = vadd.f32 0.0, %v2828
    %v2830 = vpop.f32.mrb[0].mxu0
    %2831 = vdwg.mxu0
    %2832 = vrot.lane.b32.xlu0 %v2073, 112
    %v2833 = vpop.permute.xlu0 %2832
    %2834 = vrot.lane.b32.xlu0 %v2073, 80
    %v2835 = vpop.permute.xlu0 %2834
    %v2836 = vsel %vm215, %v2833, 0
    %v2838 = vsel %vm215, %v2835, 0
    %2840 = vmatprep.subr.mxu0 0.0
    %2841 = vmatpush1.xpose.msra.mxu0 %v2838
    %2842 = vmatprep.subr.mxu0 0.0
    %2843 = vmatpush1.xpose.msra.mxu0 0.0
    %2844 = vmatprep.subr.mxu0 0.0
    %2845 = vmatpush1.xpose.msra.mxu0 0.0
    %2846 = vmatprep.subr.mxu0 0.0
    %2847 = vmatpush1.xpose.msra.mxu0 0.0
    %2848 = vmatprep.subr.mxu0 0.0
    %2849 = vmatpush1.xpose.msra.mxu0 0.0
    %2850 = vmatprep.subr.mxu0 0.0
    %2851 = vmatpush1.xpose.msra.mxu0 0.0
    %2852 = vmatprep.subr.mxu0 0.0
    %2853 = vmatpush1.xpose.msra.mxu0 0.0
    %2854 = vmatprep.subr.mxu0 0.0
    %2855 = vmatpush1.xpose.msra.mxu0 0.0
    %2856 = vmatprep.subr.mxu0 0.0
    %2857 = vmatpush1.xpose.msra.mxu0 0.0
    %2858 = vmatprep.subr.mxu0 0.0
    %2859 = vmatpush1.xpose.msra.mxu0 0.0
    %2860 = vmatprep.subr.mxu0 0.0
    %2861 = vmatpush1.xpose.msra.mxu0 0.0
    %2862 = vmatprep.subr.mxu0 0.0
    %2863 = vmatpush1.xpose.msra.mxu0 0.0
    %2864 = vmatprep.subr.mxu0 0.0
    %2865 = vmatpush1.xpose.msra.mxu0 0.0
    %2866 = vmatprep.subr.mxu0 0.0
    %2867 = vmatpush1.xpose.msra.mxu0 0.0
    %2868 = vmatprep.subr.mxu0 0.0
    %2869 = vmatpush1.xpose.msra.mxu0 0.0
    %2870 = vmatprep.subr.mxu0 0.0
    %2871 = vmatpush1.xpose.msra.mxu0 0.0
    %2872 = vmatprep.subr.mxu0 0.0
    %2873 = vmatpush1.xpose.msra.mxu0 0.0
    %2874 = vmatprep.subr.mxu0 0.0
    %2875 = vmatpush1.xpose.msra.mxu0 0.0
    %2876 = vmatprep.subr.mxu0 0.0
    %2877 = vmatpush1.xpose.msra.mxu0 0.0
    %2878 = vmatprep.subr.mxu0 0.0
    %2879 = vmatpush1.xpose.msra.mxu0 0.0
    %2880 = vmatprep.subr.mxu0 0.0
    %2881 = vmatpush1.xpose.msra.mxu0 0.0
    %2882 = vmatprep.subr.mxu0 0.0
    %2883 = vmatpush1.xpose.msra.mxu0 0.0
    %2884 = vmatprep.subr.mxu0 0.0
    %2885 = vmatpush1.xpose.msra.mxu0 0.0
    %2886 = vmatprep.subr.mxu0 0.0
    %2887 = vmatpush1.xpose.msra.mxu0 0.0
    %2888 = vmatprep.subr.mxu0 0.0
    %2889 = vmatpush1.xpose.msra.mxu0 0.0
    %2890 = vmatprep.subr.mxu0 0.0
    %2891 = vmatpush1.xpose.msra.mxu0 0.0
    %2892 = vmatprep.subr.mxu0 0.0
    %2893 = vmatpush1.xpose.msra.mxu0 0.0
    %2894 = vmatprep.subr.mxu0 0.0
    %2895 = vmatpush1.xpose.msra.mxu0 0.0
    %2896 = vmatprep.subr.mxu0 0.0
    %2897 = vmatpush1.xpose.msra.mxu0 0.0
    %2898 = vmatprep.subr.mxu0 0.0
    %2899 = vmatpush1.xpose.msra.mxu0 0.0
    %2900 = vmatprep.subr.mxu0 0.0
    %2901 = vmatpush1.xpose.msra.mxu0 0.0
    %2902 = vmatprep.subr.mxu0 0.0
    %2903 = vmatpush1.xpose.msra.mxu0 0.0
    %2904 = vmatprep.mubr.f32.mxu0 0.0
    %2905 = vmatmul.mubr.f32.gmra.mrb[0].mxu0 %v2836
    %v2906 = vpop.f32.mrb[0].mxu0
    %v2907 = vadd.f32 0.0, %v2906
    %v2908 = vpop.f32.mrb[0].mxu0
    %2909 = vdwg.mxu0
    %v2910 = vmul.f32 %v2829, 0.35355338
    %v2911 = vmul.f32 %v2907, 0.35355338
    %v2912 = vadd.f32 %v2910, %v67
    %v2913 = vadd.f32 %v2911, %v71
    %v2914 = vsel %vm215, %v2912, -inf
    %2915 = vmax.xlane.f32.xlu0 %v2914
    %v2916 = vpop.xlane.xlu0 %2915
    %v2917 = vsel %vm215, %v2913, -inf
    %2918 = vmax.xlane.f32.xlu0 %v2917
    %v2919 = vpop.xlane.xlu0 %2918
    %v2920 = vsub.f32 %v2912, %v2916
    %v2921 = vsub.f32 %v2913, %v2919
    %v2922 = vmul.f32 %v2920, 1.442695
    %v2923 = vpow.pop %v2922
    %v2924 = vmul.f32 %v2921, 1.442695
    %v2925 = vpow.pop %v2924
    %v2926 = vsel %vm215, %v2923, 0.0
    %2927 = vadd.xlane.f32.xlu0 %v2926
    %v2928 = vpop.xlane.xlu0 %2927
    %v2929 = vsel %vm215, %v2925, 0.0
    %2930 = vadd.xlane.f32.xlu0 %v2929
    %v2931 = vpop.xlane.xlu0 %2930
    %v2932 = vrcp.pop %v2928
    %v2933 = vrcp.pop %v2931
    %v2934 = vmul.f32 %v2928, %v2932
    %v2935 = vmul.f32 %v2931, %v2933
    %v2936 = vsub.f32 2.0, %v2934
    %v2937 = vsub.f32 2.0, %v2935
    %v2938 = vmul.f32 %v2932, %v2936
    %v2939 = vmul.f32 %v2933, %v2937
    %v2940 = vmul.f32 %v2923, %v2938
    %v2941 = vmul.f32 %v2925, %v2939
    %2942 = vrot.lane.b32.xlu0 %v2068, 48
    %v2943 = vpop.permute.xlu0 %2942
    %v2946 = vsel %vm215, %v2940, 0
    %2948 = vmatprep.subr.mxu0 0.0
    %2949 = vmatpush1.msra.mxu0 %v2943
    %2950 = vmatprep.subr.mxu0 0.0
    %2951 = vmatpush1.msra.mxu0 0.0
    %2952 = vmatprep.subr.mxu0 0.0
    %2953 = vmatpush1.msra.mxu0 0.0
    %2954 = vmatprep.subr.mxu0 0.0
    %2955 = vmatpush1.msra.mxu0 0.0
    %2956 = vmatprep.subr.mxu0 0.0
    %2957 = vmatpush1.msra.mxu0 0.0
    %2958 = vmatprep.subr.mxu0 0.0
    %2959 = vmatpush1.msra.mxu0 0.0
    %2960 = vmatprep.subr.mxu0 0.0
    %2961 = vmatpush1.msra.mxu0 0.0
    %2962 = vmatprep.subr.mxu0 0.0
    %2963 = vmatpush1.msra.mxu0 0.0
    %2964 = vmatprep.subr.mxu0 0.0
    %2965 = vmatpush1.msra.mxu0 0.0
    %2966 = vmatprep.subr.mxu0 0.0
    %2967 = vmatpush1.msra.mxu0 0.0
    %2968 = vmatprep.subr.mxu0 0.0
    %2969 = vmatpush1.msra.mxu0 0.0
    %2970 = vmatprep.subr.mxu0 0.0
    %2971 = vmatpush1.msra.mxu0 0.0
    %2972 = vmatprep.subr.mxu0 0.0
    %2973 = vmatpush1.msra.mxu0 0.0
    %2974 = vmatprep.subr.mxu0 0.0
    %2975 = vmatpush1.msra.mxu0 0.0
    %2976 = vmatprep.subr.mxu0 0.0
    %2977 = vmatpush1.msra.mxu0 0.0
    %2978 = vmatprep.subr.mxu0 0.0
    %2979 = vmatpush1.msra.mxu0 0.0
    %2980 = vmatprep.subr.mxu0 0.0
    %2981 = vmatpush1.msra.mxu0 0.0
    %2982 = vmatprep.subr.mxu0 0.0
    %2983 = vmatpush1.msra.mxu0 0.0
    %2984 = vmatprep.subr.mxu0 0.0
    %2985 = vmatpush1.msra.mxu0 0.0
    %2986 = vmatprep.subr.mxu0 0.0
    %2987 = vmatpush1.msra.mxu0 0.0
    %2988 = vmatprep.subr.mxu0 0.0
    %2989 = vmatpush1.msra.mxu0 0.0
    %2990 = vmatprep.subr.mxu0 0.0
    %2991 = vmatpush1.msra.mxu0 0.0
    %2992 = vmatprep.subr.mxu0 0.0
    %2993 = vmatpush1.msra.mxu0 0.0
    %2994 = vmatprep.subr.mxu0 0.0
    %2995 = vmatpush1.msra.mxu0 0.0
    %2996 = vmatprep.subr.mxu0 0.0
    %2997 = vmatpush1.msra.mxu0 0.0
    %2998 = vmatprep.subr.mxu0 0.0
    %2999 = vmatpush1.msra.mxu0 0.0
    %3000 = vmatprep.subr.mxu0 0.0
    %3001 = vmatpush1.msra.mxu0 0.0
    %3002 = vmatprep.subr.mxu0 0.0
    %3003 = vmatpush1.msra.mxu0 0.0
    %3004 = vmatprep.subr.mxu0 0.0
    %3005 = vmatpush1.msra.mxu0 0.0
    %3006 = vmatprep.subr.mxu0 0.0
    %3007 = vmatpush1.msra.mxu0 0.0
    %3008 = vmatprep.subr.mxu0 0.0
    %3009 = vmatpush1.msra.mxu0 0.0
    %3010 = vmatprep.subr.mxu0 0.0
    %3011 = vmatpush1.msra.mxu0 0.0
    %3012 = vmatprep.mubr.f32.mxu0 0.0
    %3013 = vmatmul.mubr.f32.gmra.mrb[0].mxu0 %v2946
    %v3014 = vpop.f32.mrb[0].mxu0
    %v3015 = vadd.f32 0.0, %v3014
    %v3016 = vpop.f32.mrb[0].mxu0
    %3017 = vdwg.mxu0
    %3018 = vrot.lane.b32.xlu0 %v2073, 48
    %v3019 = vpop.permute.xlu0 %3018
    %v3022 = vsel %vm215, %v2941, 0
    %3024 = vmatprep.subr.mxu0 0.0
    %3025 = vmatpush1.msra.mxu0 %v3019
    %3026 = vmatprep.subr.mxu0 0.0
    %3027 = vmatpush1.msra.mxu0 0.0
    %3028 = vmatprep.subr.mxu0 0.0
    %3029 = vmatpush1.msra.mxu0 0.0
    %3030 = vmatprep.subr.mxu0 0.0
    %3031 = vmatpush1.msra.mxu0 0.0
    %3032 = vmatprep.subr.mxu0 0.0
    %3033 = vmatpush1.msra.mxu0 0.0
    %3034 = vmatprep.subr.mxu0 0.0
    %3035 = vmatpush1.msra.mxu0 0.0
    %3036 = vmatprep.subr.mxu0 0.0
    %3037 = vmatpush1.msra.mxu0 0.0
    %3038 = vmatprep.subr.mxu0 0.0
    %3039 = vmatpush1.msra.mxu0 0.0
    %3040 = vmatprep.subr.mxu0 0.0
    %3041 = vmatpush1.msra.mxu0 0.0
    %3042 = vmatprep.subr.mxu0 0.0
    %3043 = vmatpush1.msra.mxu0 0.0
    %3044 = vmatprep.subr.mxu0 0.0
    %3045 = vmatpush1.msra.mxu0 0.0
    %3046 = vmatprep.subr.mxu0 0.0
    %3047 = vmatpush1.msra.mxu0 0.0
    %3048 = vmatprep.subr.mxu0 0.0
    %3049 = vmatpush1.msra.mxu0 0.0
    %3050 = vmatprep.subr.mxu0 0.0
    %3051 = vmatpush1.msra.mxu0 0.0
    %3052 = vmatprep.subr.mxu0 0.0
    %3053 = vmatpush1.msra.mxu0 0.0
    %3054 = vmatprep.subr.mxu0 0.0
    %3055 = vmatpush1.msra.mxu0 0.0
    %3056 = vmatprep.subr.mxu0 0.0
    %3057 = vmatpush1.msra.mxu0 0.0
    %3058 = vmatprep.subr.mxu0 0.0
    %3059 = vmatpush1.msra.mxu0 0.0
    %3060 = vmatprep.subr.mxu0 0.0
    %3061 = vmatpush1.msra.mxu0 0.0
    %3062 = vmatprep.subr.mxu0 0.0
    %3063 = vmatpush1.msra.mxu0 0.0
    %3064 = vmatprep.subr.mxu0 0.0
    %3065 = vmatpush1.msra.mxu0 0.0
    %3066 = vmatprep.subr.mxu0 0.0
    %3067 = vmatpush1.msra.mxu0 0.0
    %3068 = vmatprep.subr.mxu0 0.0
    %3069 = vmatpush1.msra.mxu0 0.0
    %3070 = vmatprep.subr.mxu0 0.0
    %3071 = vmatpush1.msra.mxu0 0.0
    %3072 = vmatprep.subr.mxu0 0.0
    %3073 = vmatpush1.msra.mxu0 0.0
    %3074 = vmatprep.subr.mxu0 0.0
    %3075 = vmatpush1.msra.mxu0 0.0
    %3076 = vmatprep.subr.mxu0 0.0
    %3077 = vmatpush1.msra.mxu0 0.0
    %3078 = vmatprep.subr.mxu0 0.0
    %3079 = vmatpush1.msra.mxu0 0.0
    %3080 = vmatprep.subr.mxu0 0.0
    %3081 = vmatpush1.msra.mxu0 0.0
    %3082 = vmatprep.subr.mxu0 0.0
    %3083 = vmatpush1.msra.mxu0 0.0
    %3084 = vmatprep.subr.mxu0 0.0
    %3085 = vmatpush1.msra.mxu0 0.0
    %3086 = vmatprep.subr.mxu0 0.0
    %3087 = vmatpush1.msra.mxu0 0.0
    %3088 = vmatprep.mubr.f32.mxu0 0.0
    %3089 = vmatmul.mubr.f32.gmra.mrb[0].mxu0 %v3022
    %v3090 = vpop.f32.mrb[0].mxu0
    %v3091 = vadd.f32 0.0, %v3090
    %v3092 = vpop.f32.mrb[0].mxu0
    %3093 = vdwg.mxu0
    %3094 = vrot.lane.b32.xlu0 %v2068, 104
    %v3095 = vpop.permute.xlu0 %3094
    %3096 = vrot.lane.b32.xlu0 %v2068, 72
    %v3097 = vpop.permute.xlu0 %3096
    %v3098 = vsel %vm215, %v3095, 0
    %v3100 = vsel %vm215, %v3097, 0
    %3102 = vmatprep.subr.mxu0 0.0
    %3103 = vmatpush1.xpose.msra.mxu0 %v3100
    %3104 = vmatprep.subr.mxu0 0.0
    %3105 = vmatpush1.xpose.msra.mxu0 0.0
    %3106 = vmatprep.subr.mxu0 0.0
    %3107 = vmatpush1.xpose.msra.mxu0 0.0
    %3108 = vmatprep.subr.mxu0 0.0
    %3109 = vmatpush1.xpose.msra.mxu0 0.0
    %3110 = vmatprep.subr.mxu0 0.0
    %3111 = vmatpush1.xpose.msra.mxu0 0.0
    %3112 = vmatprep.subr.mxu0 0.0
    %3113 = vmatpush1.xpose.msra.mxu0 0.0
    %3114 = vmatprep.subr.mxu0 0.0
    %3115 = vmatpush1.xpose.msra.mxu0 0.0
    %3116 = vmatprep.subr.mxu0 0.0
    %3117 = vmatpush1.xpose.msra.mxu0 0.0
    %3118 = vmatprep.subr.mxu0 0.0
    %3119 = vmatpush1.xpose.msra.mxu0 0.0
    %3120 = vmatprep.subr.mxu0 0.0
    %3121 = vmatpush1.xpose.msra.mxu0 0.0
    %3122 = vmatprep.subr.mxu0 0.0
    %3123 = vmatpush1.xpose.msra.mxu0 0.0
    %3124 = vmatprep.subr.mxu0 0.0
    %3125 = vmatpush1.xpose.msra.mxu0 0.0
    %3126 = vmatprep.subr.mxu0 0.0
    %3127 = vmatpush1.xpose.msra.mxu0 0.0
    %3128 = vmatprep.subr.mxu0 0.0
    %3129 = vmatpush1.xpose.msra.mxu0 0.0
    %3130 = vmatprep.subr.mxu0 0.0
    %3131 = vmatpush1.xpose.msra.mxu0 0.0
    %3132 = vmatprep.subr.mxu0 0.0
    %3133 = vmatpush1.xpose.msra.mxu0 0.0
    %3134 = vmatprep.subr.mxu0 0.0
    %3135 = vmatpush1.xpose.msra.mxu0 0.0
    %3136 = vmatprep.subr.mxu0 0.0
    %3137 = vmatpush1.xpose.msra.mxu0 0.0
    %3138 = vmatprep.subr.mxu0 0.0
    %3139 = vmatpush1.xpose.msra.mxu0 0.0
    %3140 = vmatprep.subr.mxu0 0.0
    %3141 = vmatpush1.xpose.msra.mxu0 0.0
    %3142 = vmatprep.subr.mxu0 0.0
    %3143 = vmatpush1.xpose.msra.mxu0 0.0
    %3144 = vmatprep.subr.mxu0 0.0
    %3145 = vmatpush1.xpose.msra.mxu0 0.0
    %3146 = vmatprep.subr.mxu0 0.0
    %3147 = vmatpush1.xpose.msra.mxu0 0.0
    %3148 = vmatprep.subr.mxu0 0.0
    %3149 = vmatpush1.xpose.msra.mxu0 0.0
    %3150 = vmatprep.subr.mxu0 0.0
    %3151 = vmatpush1.xpose.msra.mxu0 0.0
    %3152 = vmatprep.subr.mxu0 0.0
    %3153 = vmatpush1.xpose.msra.mxu0 0.0
    %3154 = vmatprep.subr.mxu0 0.0
    %3155 = vmatpush1.xpose.msra.mxu0 0.0
    %3156 = vmatprep.subr.mxu0 0.0
    %3157 = vmatpush1.xpose.msra.mxu0 0.0
    %3158 = vmatprep.subr.mxu0 0.0
    %3159 = vmatpush1.xpose.msra.mxu0 0.0
    %3160 = vmatprep.subr.mxu0 0.0
    %3161 = vmatpush1.xpose.msra.mxu0 0.0
    %3162 = vmatprep.subr.mxu0 0.0
    %3163 = vmatpush1.xpose.msra.mxu0 0.0
    %3164 = vmatprep.subr.mxu0 0.0
    %3165 = vmatpush1.xpose.msra.mxu0 0.0
    %3166 = vmatprep.mubr.f32.mxu0 0.0
    %3167 = vmatmul.mubr.f32.gmra.mrb[0].mxu0 %v3098
    %v3168 = vpop.f32.mrb[0].mxu0
    %v3169 = vadd.f32 0.0, %v3168
    %v3170 = vpop.f32.mrb[0].mxu0
    %3171 = vdwg.mxu0
    %3172 = vrot.lane.b32.xlu0 %v2073, 104
    %v3173 = vpop.permute.xlu0 %3172
    %3174 = vrot.lane.b32.xlu0 %v2073, 72
    %v3175 = vpop.permute.xlu0 %3174
    %v3176 = vsel %vm215, %v3173, 0
    %v3178 = vsel %vm215, %v3175, 0
    %3180 = vmatprep.subr.mxu0 0.0
    %3181 = vmatpush1.xpose.msra.mxu0 %v3178
    %3182 = vmatprep.subr.mxu0 0.0
    %3183 = vmatpush1.xpose.msra.mxu0 0.0
    %3184 = vmatprep.subr.mxu0 0.0
    %3185 = vmatpush1.xpose.msra.mxu0 0.0
    %3186 = vmatprep.subr.mxu0 0.0
    %3187 = vmatpush1.xpose.msra.mxu0 0.0
    %3188 = vmatprep.subr.mxu0 0.0
    %3189 = vmatpush1.xpose.msra.mxu0 0.0
    %3190 = vmatprep.subr.mxu0 0.0
    %3191 = vmatpush1.xpose.msra.mxu0 0.0
    %3192 = vmatprep.subr.mxu0 0.0
    %3193 = vmatpush1.xpose.msra.mxu0 0.0
    %3194 = vmatprep.subr.mxu0 0.0
    %3195 = vmatpush1.xpose.msra.mxu0 0.0
    %3196 = vmatprep.subr.mxu0 0.0
    %3197 = vmatpush1.xpose.msra.mxu0 0.0
    %3198 = vmatprep.subr.mxu0 0.0
    %3199 = vmatpush1.xpose.msra.mxu0 0.0
    %3200 = vmatprep.subr.mxu0 0.0
    %3201 = vmatpush1.xpose.msra.mxu0 0.0
    %3202 = vmatprep.subr.mxu0 0.0
    %3203 = vmatpush1.xpose.msra.mxu0 0.0
    %3204 = vmatprep.subr.mxu0 0.0
    %3205 = vmatpush1.xpose.msra.mxu0 0.0
    %3206 = vmatprep.subr.mxu0 0.0
    %3207 = vmatpush1.xpose.msra.mxu0 0.0
    %3208 = vmatprep.subr.mxu0 0.0
    %3209 = vmatpush1.xpose.msra.mxu0 0.0
    %3210 = vmatprep.subr.mxu0 0.0
    %3211 = vmatpush1.xpose.msra.mxu0 0.0
    %3212 = vmatprep.subr.mxu0 0.0
    %3213 = vmatpush1.xpose.msra.mxu0 0.0
    %3214 = vmatprep.subr.mxu0 0.0
    %3215 = vmatpush1.xpose.msra.mxu0 0.0
    %3216 = vmatprep.subr.mxu0 0.0
    %3217 = vmatpush1.xpose.msra.mxu0 0.0
    %3218 = vmatprep.subr.mxu0 0.0
    %3219 = vmatpush1.xpose.msra.mxu0 0.0
    %3220 = vmatprep.subr.mxu0 0.0
    %3221 = vmatpush1.xpose.msra.mxu0 0.0
    %3222 = vmatprep.subr.mxu0 0.0
    %3223 = vmatpush1.xpose.msra.mxu0 0.0
    %3224 = vmatprep.subr.mxu0 0.0
    %3225 = vmatpush1.xpose.msra.mxu0 0.0
    %3226 = vmatprep.subr.mxu0 0.0
    %3227 = vmatpush1.xpose.msra.mxu0 0.0
    %3228 = vmatprep.subr.mxu0 0.0
    %3229 = vmatpush1.xpose.msra.mxu0 0.0
    %3230 = vmatprep.subr.mxu0 0.0
    %3231 = vmatpush1.xpose.msra.mxu0 0.0
    %3232 = vmatprep.subr.mxu0 0.0
    %3233 = vmatpush1.xpose.msra.mxu0 0.0
    %3234 = vmatprep.subr.mxu0 0.0
    %3235 = vmatpush1.xpose.msra.mxu0 0.0
    %3236 = vmatprep.subr.mxu0 0.0
    %3237 = vmatpush1.xpose.msra.mxu0 0.0
    %3238 = vmatprep.subr.mxu0 0.0
    %3239 = vmatpush1.xpose.msra.mxu0 0.0
    %3240 = vmatprep.subr.mxu0 0.0
    %3241 = vmatpush1.xpose.msra.mxu0 0.0
    %3242 = vmatprep.subr.mxu0 0.0
    %3243 = vmatpush1.xpose.msra.mxu0 0.0
    %3244 = vmatprep.mubr.f32.mxu0 0.0
    %3245 = vmatmul.mubr.f32.gmra.mrb[0].mxu0 %v3176
    %v3246 = vpop.f32.mrb[0].mxu0
    %v3247 = vadd.f32 0.0, %v3246
    %v3248 = vpop.f32.mrb[0].mxu0
    %3249 = vdwg.mxu0
    %v3250 = vmul.f32 %v3169, 0.35355338
    %v3251 = vmul.f32 %v3247, 0.35355338
    %v3252 = vadd.f32 %v3250, %v67
    %v3253 = vadd.f32 %v3251, %v71
    %v3254 = vsel %vm215, %v3252, -inf
    %3255 = vmax.xlane.f32.xlu0 %v3254
    %v3256 = vpop.xlane.xlu0 %3255
    %v3257 = vsel %vm215, %v3253, -inf
    %3258 = vmax.xlane.f32.xlu0 %v3257
    %v3259 = vpop.xlane.xlu0 %3258
    %v3260 = vsub.f32 %v3252, %v3256
    %v3261 = vsub.f32 %v3253, %v3259
    %v3262 = vmul.f32 %v3260, 1.442695
    %v3263 = vpow.pop %v3262
    %v3264 = vmul.f32 %v3261, 1.442695
    %v3265 = vpow.pop %v3264
    %v3266 = vsel %vm215, %v3263, 0.0
    %3267 = vadd.xlane.f32.xlu0 %v3266
    %v3268 = vpop.xlane.xlu0 %3267
    %v3269 = vsel %vm215, %v3265, 0.0
    %3270 = vadd.xlane.f32.xlu0 %v3269
    %v3271 = vpop.xlane.xlu0 %3270
    %v3272 = vrcp.pop %v3268
    %v3273 = vrcp.pop %v3271
    %v3274 = vmul.f32 %v3268, %v3272
    %v3275 = vmul.f32 %v3271, %v3273
    %v3276 = vsub.f32 2.0, %v3274
    %v3277 = vsub.f32 2.0, %v3275
    %v3278 = vmul.f32 %v3272, %v3276
    %v3279 = vmul.f32 %v3273, %v3277
    %v3280 = vmul.f32 %v3263, %v3278
    %v3281 = vmul.f32 %v3265, %v3279
    %3282 = vrot.lane.b32.xlu0 %v2068, 40
    %v3283 = vpop.permute.xlu0 %3282
    %v3286 = vsel %vm215, %v3280, 0
    %3288 = vmatprep.subr.mxu0 0.0
    %3289 = vmatpush1.msra.mxu0 %v3283
    %3290 = vmatprep.subr.mxu0 0.0
    %3291 = vmatpush1.msra.mxu0 0.0
    %3292 = vmatprep.subr.mxu0 0.0
    %3293 = vmatpush1.msra.mxu0 0.0
    %3294 = vmatprep.subr.mxu0 0.0
    %3295 = vmatpush1.msra.mxu0 0.0
    %3296 = vmatprep.subr.mxu0 0.0
    %3297 = vmatpush1.msra.mxu0 0.0
    %3298 = vmatprep.subr.mxu0 0.0
    %3299 = vmatpush1.msra.mxu0 0.0
    %3300 = vmatprep.subr.mxu0 0.0
    %3301 = vmatpush1.msra.mxu0 0.0
    %3302 = vmatprep.subr.mxu0 0.0
    %3303 = vmatpush1.msra.mxu0 0.0
    %3304 = vmatprep.subr.mxu0 0.0
    %3305 = vmatpush1.msra.mxu0 0.0
    %3306 = vmatprep.subr.mxu0 0.0
    %3307 = vmatpush1.msra.mxu0 0.0
    %3308 = vmatprep.subr.mxu0 0.0
    %3309 = vmatpush1.msra.mxu0 0.0
    %3310 = vmatprep.subr.mxu0 0.0
    %3311 = vmatpush1.msra.mxu0 0.0
    %3312 = vmatprep.subr.mxu0 0.0
    %3313 = vmatpush1.msra.mxu0 0.0
    %3314 = vmatprep.subr.mxu0 0.0
    %3315 = vmatpush1.msra.mxu0 0.0
    %3316 = vmatprep.subr.mxu0 0.0
    %3317 = vmatpush1.msra.mxu0 0.0
    %3318 = vmatprep.subr.mxu0 0.0
    %3319 = vmatpush1.msra.mxu0 0.0
    %3320 = vmatprep.subr.mxu0 0.0
    %3321 = vmatpush1.msra.mxu0 0.0
    %3322 = vmatprep.subr.mxu0 0.0
    %3323 = vmatpush1.msra.mxu0 0.0
    %3324 = vmatprep.subr.mxu0 0.0
    %3325 = vmatpush1.msra.mxu0 0.0
    %3326 = vmatprep.subr.mxu0 0.0
    %3327 = vmatpush1.msra.mxu0 0.0
    %3328 = vmatprep.subr.mxu0 0.0
    %3329 = vmatpush1.msra.mxu0 0.0
    %3330 = vmatprep.subr.mxu0 0.0
    %3331 = vmatpush1.msra.mxu0 0.0
    %3332 = vmatprep.subr.mxu0 0.0
    %3333 = vmatpush1.msra.mxu0 0.0
    %3334 = vmatprep.subr.mxu0 0.0
    %3335 = vmatpush1.msra.mxu0 0.0
    %3336 = vmatprep.subr.mxu0 0.0
    %3337 = vmatpush1.msra.mxu0 0.0
    %3338 = vmatprep.subr.mxu0 0.0
    %3339 = vmatpush1.msra.mxu0 0.0
    %3340 = vmatprep.subr.mxu0 0.0
    %3341 = vmatpush1.msra.mxu0 0.0
    %3342 = vmatprep.subr.mxu0 0.0
    %3343 = vmatpush1.msra.mxu0 0.0
    %3344 = vmatprep.subr.mxu0 0.0
    %3345 = vmatpush1.msra.mxu0 0.0
    %3346 = vmatprep.subr.mxu0 0.0
    %3347 = vmatpush1.msra.mxu0 0.0
    %3348 = vmatprep.subr.mxu0 0.0
    %3349 = vmatpush1.msra.mxu0 0.0
    %3350 = vmatprep.subr.mxu0 0.0
    %3351 = vmatpush1.msra.mxu0 0.0
    %3352 = vmatprep.mubr.f32.mxu0 0.0
    %3353 = vmatmul.mubr.f32.gmra.mrb[0].mxu0 %v3286
    %v3354 = vpop.f32.mrb[0].mxu0
    %v3355 = vadd.f32 0.0, %v3354
    %v3356 = vpop.f32.mrb[0].mxu0
    %3357 = vdwg.mxu0
    %3358 = vrot.lane.b32.xlu0 %v2073, 40
    %v3359 = vpop.permute.xlu0 %3358
    %v3362 = vsel %vm215, %v3281, 0
    %3364 = vmatprep.subr.mxu0 0.0
    %3365 = vmatpush1.msra.mxu0 %v3359
    %3366 = vmatprep.subr.mxu0 0.0
    %3367 = vmatpush1.msra.mxu0 0.0
    %3368 = vmatprep.subr.mxu0 0.0
    %3369 = vmatpush1.msra.mxu0 0.0
    %3370 = vmatprep.subr.mxu0 0.0
    %3371 = vmatpush1.msra.mxu0 0.0
    %3372 = vmatprep.subr.mxu0 0.0
    %3373 = vmatpush1.msra.mxu0 0.0
    %3374 = vmatprep.subr.mxu0 0.0
    %3375 = vmatpush1.msra.mxu0 0.0
    %3376 = vmatprep.subr.mxu0 0.0
    %3377 = vmatpush1.msra.mxu0 0.0
    %3378 = vmatprep.subr.mxu0 0.0
    %3379 = vmatpush1.msra.mxu0 0.0
    %3380 = vmatprep.subr.mxu0 0.0
    %3381 = vmatpush1.msra.mxu0 0.0
    %3382 = vmatprep.subr.mxu0 0.0
    %3383 = vmatpush1.msra.mxu0 0.0
    %3384 = vmatprep.subr.mxu0 0.0
    %3385 = vmatpush1.msra.mxu0 0.0
    %3386 = vmatprep.subr.mxu0 0.0
    %3387 = vmatpush1.msra.mxu0 0.0
    %3388 = vmatprep.subr.mxu0 0.0
    %3389 = vmatpush1.msra.mxu0 0.0
    %3390 = vmatprep.subr.mxu0 0.0
    %3391 = vmatpush1.msra.mxu0 0.0
    %3392 = vmatprep.subr.mxu0 0.0
    %3393 = vmatpush1.msra.mxu0 0.0
    %3394 = vmatprep.subr.mxu0 0.0
    %3395 = vmatpush1.msra.mxu0 0.0
    %3396 = vmatprep.subr.mxu0 0.0
    %3397 = vmatpush1.msra.mxu0 0.0
    %3398 = vmatprep.subr.mxu0 0.0
    %3399 = vmatpush1.msra.mxu0 0.0
    %3400 = vmatprep.subr.mxu0 0.0
    %3401 = vmatpush1.msra.mxu0 0.0
    %3402 = vmatprep.subr.mxu0 0.0
    %3403 = vmatpush1.msra.mxu0 0.0
    %3404 = vmatprep.subr.mxu0 0.0
    %3405 = vmatpush1.msra.mxu0 0.0
    %3406 = vmatprep.subr.mxu0 0.0
    %3407 = vmatpush1.msra.mxu0 0.0
    %3408 = vmatprep.subr.mxu0 0.0
    %3409 = vmatpush1.msra.mxu0 0.0
    %3410 = vmatprep.subr.mxu0 0.0
    %3411 = vmatpush1.msra.mxu0 0.0
    %3412 = vmatprep.subr.mxu0 0.0
    %3413 = vmatpush1.msra.mxu0 0.0
    %3414 = vmatprep.subr.mxu0 0.0
    %3415 = vmatpush1.msra.mxu0 0.0
    %3416 = vmatprep.subr.mxu0 0.0
    %3417 = vmatpush1.msra.mxu0 0.0
    %3418 = vmatprep.subr.mxu0 0.0
    %3419 = vmatpush1.msra.mxu0 0.0
    %3420 = vmatprep.subr.mxu0 0.0
    %3421 = vmatpush1.msra.mxu0 0.0
    %3422 = vmatprep.subr.mxu0 0.0
    %3423 = vmatpush1.msra.mxu0 0.0
    %3424 = vmatprep.subr.mxu0 0.0
    %3425 = vmatpush1.msra.mxu0 0.0
    %3426 = vmatprep.subr.mxu0 0.0
    %3427 = vmatpush1.msra.mxu0 0.0
    %3428 = vmatprep.mubr.f32.mxu0 0.0
    %3429 = vmatmul.mubr.f32.gmra.mrb[0].mxu0 %v3362
    %v3430 = vpop.f32.mrb[0].mxu0
    %v3431 = vadd.f32 0.0, %v3430
    %v3432 = vpop.f32.mrb[0].mxu0
    %3433 = vdwg.mxu0
    %3436 = vrot.lane.b32.xlu0 %v2675, 8
    %v3437 = vpop.permute.xlu0 %3436
    %3438 = vrot.lane.b32.xlu0 %v2751, 8
    %v3439 = vpop.permute.xlu0 %3438
    %3444 = vrot.lane.b32.xlu0 %v3015, 16
    %v3445 = vpop.permute.xlu0 %3444
    %3446 = vrot.lane.b32.xlu0 %v3091, 16
    %v3447 = vpop.permute.xlu0 %3446
    %3452 = vrot.lane.b32.xlu0 %v3355, 24
    %v3453 = vpop.permute.xlu0 %3452
    %3454 = vrot.lane.b32.xlu0 %v3431, 24
    %v3455 = vpop.permute.xlu0 %3454
    %v3458 = vsel %vm215, %v2335, %v3437
    %v3459 = vsel %vm215, %v2411, %v3439
    %v3460 = vsel %vm1597, %v3458, %v3445
    %v3461 = vsel %vm1597, %v3459, %v3447
    %v3462 = vsel %vm1600, %v3460, %v3453
    %v3463 = vsel %vm1600, %v3461, %v3455
    %s3464 = scalar_lea.vmem %s4, 32
    %v3465 = vld [vmem:[%s3464] sm:$0xff]
    %v3466 = vld [vmem:[%s3464 + $0x8] sm:$0xff]
    %v3467 = vld [vmem:[%s3464 + $0x10] sm:$0xff]
    %v3468 = vld [vmem:[%s3464 + $0x18] sm:$0xff]
    %s3469 = scalar_lea.vmem %s5, 1
    %v3470 = vld [vmem:[%s3469] sm:$0x1]
    %v3472 = vlaneseq
    %v3473 = vshrl.u32 %v3472, 7
    %v3474 = vsub.s32 0, %v3473
    %v3475 = vrot.slane %v3470, %v3474
    %v3478 = vsel %vm76, %v3462, 0
    %v3481 = vsel %vm76, %v3463, 0
    %3483 = vmatprep.subr.mxu0 0.0
    %3484 = vmatpush1.msra.mxu0 %v3465
    %3485 = vmatprep.subr.mxu0 0.0
    %3486 = vmatpush1.msra.mxu0 %v3466
    %3487 = vmatprep.subr.mxu0 0.0
    %3488 = vmatpush1.msra.mxu0 %v3467
    %3489 = vmatprep.subr.mxu0 0.0
    %3490 = vmatpush1.msra.mxu0 %v3468
    %3491 = vmatprep.subr.mxu0 0.0
    %3492 = vmatpush1.msra.mxu0 0.0
    %3493 = vmatprep.subr.mxu0 0.0
    %3494 = vmatpush1.msra.mxu0 0.0
    %3495 = vmatprep.subr.mxu0 0.0
    %3496 = vmatpush1.msra.mxu0 0.0
    %3497 = vmatprep.subr.mxu0 0.0
    %3498 = vmatpush1.msra.mxu0 0.0
    %3499 = vmatprep.subr.mxu0 0.0
    %3500 = vmatpush1.msra.mxu0 0.0
    %3501 = vmatprep.subr.mxu0 0.0
    %3502 = vmatpush1.msra.mxu0 0.0
    %3503 = vmatprep.subr.mxu0 0.0
    %3504 = vmatpush1.msra.mxu0 0.0
    %3505 = vmatprep.subr.mxu0 0.0
    %3506 = vmatpush1.msra.mxu0 0.0
    %3507 = vmatprep.subr.mxu0 0.0
    %3508 = vmatpush1.msra.mxu0 0.0
    %3509 = vmatprep.subr.mxu0 0.0
    %3510 = vmatpush1.msra.mxu0 0.0
    %3511 = vmatprep.subr.mxu0 0.0
    %3512 = vmatpush1.msra.mxu0 0.0
    %3513 = vmatprep.subr.mxu0 0.0
    %3514 = vmatpush1.msra.mxu0 0.0
    %3515 = vmatprep.subr.mxu0 0.0
    %3516 = vmatpush1.msra.mxu0 0.0
    %3517 = vmatprep.subr.mxu0 0.0
    %3518 = vmatpush1.msra.mxu0 0.0
    %3519 = vmatprep.subr.mxu0 0.0
    %3520 = vmatpush1.msra.mxu0 0.0
    %3521 = vmatprep.subr.mxu0 0.0
    %3522 = vmatpush1.msra.mxu0 0.0
    %3523 = vmatprep.subr.mxu0 0.0
    %3524 = vmatpush1.msra.mxu0 0.0
    %3525 = vmatprep.subr.mxu0 0.0
    %3526 = vmatpush1.msra.mxu0 0.0
    %3527 = vmatprep.subr.mxu0 0.0
    %3528 = vmatpush1.msra.mxu0 0.0
    %3529 = vmatprep.subr.mxu0 0.0
    %3530 = vmatpush1.msra.mxu0 0.0
    %3531 = vmatprep.subr.mxu0 0.0
    %3532 = vmatpush1.msra.mxu0 0.0
    %3533 = vmatprep.subr.mxu0 0.0
    %3534 = vmatpush1.msra.mxu0 0.0
    %3535 = vmatprep.subr.mxu0 0.0
    %3536 = vmatpush1.msra.mxu0 0.0
    %3537 = vmatprep.subr.mxu0 0.0
    %3538 = vmatpush1.msra.mxu0 0.0
    %3539 = vmatprep.subr.mxu0 0.0
    %3540 = vmatpush1.msra.mxu0 0.0
    %3541 = vmatprep.subr.mxu0 0.0
    %3542 = vmatpush1.msra.mxu0 0.0
    %3543 = vmatprep.subr.mxu0 0.0
    %3544 = vmatpush1.msra.mxu0 0.0
    %3545 = vmatprep.subr.mxu0 0.0
    %3546 = vmatpush1.msra.mxu0 0.0
    %3547 = vmatprep.mubr.f32.mxu0 0.0
    %3548 = vmatmul.mubr.f32.gmra.mrb[0].mxu0 %v3478
    %v3549 = vpop.f32.mrb[0].mxu0
    %v3550 = vadd.f32 %v3475, %v3549
    %v3551 = vpop.f32.mrb[0].mxu0
    %3552 = vmatprep.mubr.f32.mxu0 0.0
    %3553 = vmatmul.mubr.f32.gmra.mrb[0].mxu0 %v3481
    %v3554 = vpop.f32.mrb[0].mxu0
    %v3555 = vadd.f32 %v3475, %v3554
    %v3556 = vpop.f32.mrb[0].mxu0
    %3557 = vdwg.mxu0
    %v3558 = vadd.f32 %v1934, %v3550
    %v3559 = vadd.f32 %v1935, %v3555
    %s3560 = scalar_lea.vmem %s8, 1
    %v3561 = vld [vmem:[%s3560] sm:$0x1]
    %s3562 = scalar_lea.vmem %s9, 1
    %v3563 = vld [vmem:[%s3562] sm:$0x1]
    %v3564 = vsel %vm76, %v3558, 0.0
    %3565 = vadd.xlane.f32.xlu0 %v3564
    %v3566 = vpop.xlane.xlu0 %3565
    %v3567 = vsel %vm76, %v3559, 0.0
    %3568 = vadd.xlane.f32.xlu0 %v3567
    %v3569 = vpop.xlane.xlu0 %3568
    %v3570 = vmul.f32 %v3566, %v83
    %v3571 = vmul.f32 %v3569, %v83
    %v3572 = vsub.f32 %v3558, %v3570
    %v3573 = vsub.f32 %v3559, %v3571
    %v3574 = vmul.f32 %v3572, %v3572
    %v3575 = vmul.f32 %v3573, %v3573
    %v3576 = vsel %vm76, %v3574, 0.0
    %3577 = vadd.xlane.f32.xlu0 %v3576
    %v3578 = vpop.xlane.xlu0 %3577
    %v3579 = vsel %vm76, %v3575, 0.0
    %3580 = vadd.xlane.f32.xlu0 %v3579
    %v3581 = vpop.xlane.xlu0 %3580
    %v3582 = vmul.f32 %v3578, 0.032258064
    %v3583 = vmul.f32 %v3581, 0.032258064
    %v3584 = vadd.f32 %v3582, 1e-06
    %v3585 = vadd.f32 %v3583, 1e-06
    %v3586 = vrsqrt.pop %v3584
    %v3587 = vrsqrt.pop %v3585
    %v3588 = vmul.f32 %v3572, %v3586
    %v3589 = vmul.f32 %v3573, %v3587
    %v3591 = vlaneseq
    %v3592 = vshrl.u32 %v3591, 7
    %v3593 = vsub.s32 0, %v3592
    %v3594 = vrot.slane %v3561, %v3593
    %v3596 = vmul.f32 %v3594, %v3588
    %v3597 = vmul.f32 %v3594, %v3589
    %v3599 = vlaneseq
    %v3600 = vshrl.u32 %v3599, 7
    %v3601 = vsub.s32 0, %v3600
    %v3602 = vrot.slane %v3563, %v3601
    %v3604 = vadd.f32 %v3596, %v3602
    %v3605 = vadd.f32 %v3597, %v3602
    %s3606 = scalar_lea.vmem %s10, 32
    %v3607 = vld [vmem:[%s3606] sm:$0xff]
    %v3608 = vld [vmem:[%s3606 + $0x8] sm:$0xff]
    %v3609 = vld [vmem:[%s3606 + $0x10] sm:$0xff]
    %v3610 = vld [vmem:[%s3606 + $0x18] sm:$0xff]
    %s3611 = scalar_lea.vmem %s11, 1
    %v3612 = vld [vmem:[%s3611] sm:$0x1]
    %v3614 = vlaneseq
    %v3615 = vshrl.u32 %v3614, 7
    %v3616 = vsub.s32 0, %v3615
    %v3617 = vrot.slane %v3612, %v3616
    %v3620 = vsel %vm76, %v3604, 0
    %v3623 = vsel %vm76, %v3605, 0
    %3625 = vmatprep.subr.mxu0 0.0
    %3626 = vmatpush1.msra.mxu0 %v3607
    %3627 = vmatprep.subr.mxu0 0.0
    %3628 = vmatpush1.msra.mxu0 %v3608
    %3629 = vmatprep.subr.mxu0 0.0
    %3630 = vmatpush1.msra.mxu0 %v3609
    %3631 = vmatprep.subr.mxu0 0.0
    %3632 = vmatpush1.msra.mxu0 %v3610
    %3633 = vmatprep.subr.mxu0 0.0
    %3634 = vmatpush1.msra.mxu0 0.0
    %3635 = vmatprep.subr.mxu0 0.0
    %3636 = vmatpush1.msra.mxu0 0.0
    %3637 = vmatprep.subr.mxu0 0.0
    %3638 = vmatpush1.msra.mxu0 0.0
    %3639 = vmatprep.subr.mxu0 0.0
    %3640 = vmatpush1.msra.mxu0 0.0
    %3641 = vmatprep.subr.mxu0 0.0
    %3642 = vmatpush1.msra.mxu0 0.0
    %3643 = vmatprep.subr.mxu0 0.0
    %3644 = vmatpush1.msra.mxu0 0.0
    %3645 = vmatprep.subr.mxu0 0.0
    %3646 = vmatpush1.msra.mxu0 0.0
    %3647 = vmatprep.subr.mxu0 0.0
    %3648 = vmatpush1.msra.mxu0 0.0
    %3649 = vmatprep.subr.mxu0 0.0
    %3650 = vmatpush1.msra.mxu0 0.0
    %3651 = vmatprep.subr.mxu0 0.0
    %3652 = vmatpush1.msra.mxu0 0.0
    %3653 = vmatprep.subr.mxu0 0.0
    %3654 = vmatpush1.msra.mxu0 0.0
    %3655 = vmatprep.subr.mxu0 0.0
    %3656 = vmatpush1.msra.mxu0 0.0
    %3657 = vmatprep.subr.mxu0 0.0
    %3658 = vmatpush1.msra.mxu0 0.0
    %3659 = vmatprep.subr.mxu0 0.0
    %3660 = vmatpush1.msra.mxu0 0.0
    %3661 = vmatprep.subr.mxu0 0.0
    %3662 = vmatpush1.msra.mxu0 0.0
    %3663 = vmatprep.subr.mxu0 0.0
    %3664 = vmatpush1.msra.mxu0 0.0
    %3665 = vmatprep.subr.mxu0 0.0
    %3666 = vmatpush1.msra.mxu0 0.0
    %3667 = vmatprep.subr.mxu0 0.0
    %3668 = vmatpush1.msra.mxu0 0.0
    %3669 = vmatprep.subr.mxu0 0.0
    %3670 = vmatpush1.msra.mxu0 0.0
    %3671 = vmatprep.subr.mxu0 0.0
    %3672 = vmatpush1.msra.mxu0 0.0
    %3673 = vmatprep.subr.mxu0 0.0
    %3674 = vmatpush1.msra.mxu0 0.0
    %3675 = vmatprep.subr.mxu0 0.0
    %3676 = vmatpush1.msra.mxu0 0.0
    %3677 = vmatprep.subr.mxu0 0.0
    %3678 = vmatpush1.msra.mxu0 0.0
    %3679 = vmatprep.subr.mxu0 0.0
    %3680 = vmatpush1.msra.mxu0 0.0
    %3681 = vmatprep.subr.mxu0 0.0
    %3682 = vmatpush1.msra.mxu0 0.0
    %3683 = vmatprep.subr.mxu0 0.0
    %3684 = vmatpush1.msra.mxu0 0.0
    %3685 = vmatprep.subr.mxu0 0.0
    %3686 = vmatpush1.msra.mxu0 0.0
    %3687 = vmatprep.subr.mxu0 0.0
    %3688 = vmatpush1.msra.mxu0 0.0
    %3689 = vmatprep.mubr.f32.mxu0 0.0
    %3690 = vmatmul.mubr.f32.gmra.mrb[0].mxu0 %v3620
    %v3691 = vpop.f32.mrb[0].mxu0
    %v3692 = vadd.f32 %v3617, %v3691
    %v3693 = vpop.f32.mrb[0].mxu0
    %3694 = vmatprep.mubr.f32.mxu0 0.0
    %3695 = vmatmul.mubr.f32.gmra.mrb[0].mxu0 %v3623
    %v3696 = vpop.f32.mrb[0].mxu0
    %v3697 = vadd.f32 %v3617, %v3696
    %v3698 = vpop.f32.mrb[0].mxu0
    %3699 = vdwg.mxu0
    %v3700 = vmax.f32 %v3692, 0.0
    %v3701 = vmax.f32 %v3697, 0.0
    %s3702 = scalar_lea.vmem %s12, 64
    %v3703 = vld [vmem:[%s3702] sm:$0xff]
    %v3704 = vld [vmem:[%s3702 + $0x8] sm:$0xff]
    %v3705 = vld [vmem:[%s3702 + $0x10] sm:$0xff]
    %v3706 = vld [vmem:[%s3702 + $0x18] sm:$0xff]
    %v3707 = vld [vmem:[%s3702 + $0x20] sm:$0xff]
    %v3708 = vld [vmem:[%s3702 + $0x28] sm:$0xff]
    %v3709 = vld [vmem:[%s3702 + $0x30] sm:$0xff]
    %v3710 = vld [vmem:[%s3702 + $0x38] sm:$0xff]
    %v3712 = vsel %vm1843, %v3700, 0
    %v3715 = vsel %vm1843, %v3701, 0
    %3717 = vmatprep.subr.mxu0 0.0
    %3718 = vmatpush1.msra.mxu0 %v3703
    %3719 = vmatprep.subr.mxu0 0.0
    %3720 = vmatpush1.msra.mxu0 %v3704
    %3721 = vmatprep.subr.mxu0 0.0
    %3722 = vmatpush1.msra.mxu0 %v3705
    %3723 = vmatprep.subr.mxu0 0.0
    %3724 = vmatpush1.msra.mxu0 %v3706
    %3725 = vmatprep.subr.mxu0 0.0
    %3726 = vmatpush1.msra.mxu0 %v3707
    %3727 = vmatprep.subr.mxu0 0.0
    %3728 = vmatpush1.msra.mxu0 %v3708
    %3729 = vmatprep.subr.mxu0 0.0
    %3730 = vmatpush1.msra.mxu0 %v3709
    %3731 = vmatprep.subr.mxu0 0.0
    %3732 = vmatpush1.msra.mxu0 %v3710
    %3733 = vmatprep.subr.mxu0 0.0
    %3734 = vmatpush1.msra.mxu0 0.0
    %3735 = vmatprep.subr.mxu0 0.0
    %3736 = vmatpush1.msra.mxu0 0.0
    %3737 = vmatprep.subr.mxu0 0.0
    %3738 = vmatpush1.msra.mxu0 0.0
    %3739 = vmatprep.subr.mxu0 0.0
    %3740 = vmatpush1.msra.mxu0 0.0
    %3741 = vmatprep.subr.mxu0 0.0
    %3742 = vmatpush1.msra.mxu0 0.0
    %3743 = vmatprep.subr.mxu0 0.0
    %3744 = vmatpush1.msra.mxu0 0.0
    %3745 = vmatprep.subr.mxu0 0.0
    %3746 = vmatpush1.msra.mxu0 0.0
    %3747 = vmatprep.subr.mxu0 0.0
    %3748 = vmatpush1.msra.mxu0 0.0
    %3749 = vmatprep.subr.mxu0 0.0
    %3750 = vmatpush1.msra.mxu0 0.0
    %3751 = vmatprep.subr.mxu0 0.0
    %3752 = vmatpush1.msra.mxu0 0.0
    %3753 = vmatprep.subr.mxu0 0.0
    %3754 = vmatpush1.msra.mxu0 0.0
    %3755 = vmatprep.subr.mxu0 0.0
    %3756 = vmatpush1.msra.mxu0 0.0
    %3757 = vmatprep.subr.mxu0 0.0
    %3758 = vmatpush1.msra.mxu0 0.0
    %3759 = vmatprep.subr.mxu0 0.0
    %3760 = vmatpush1.msra.mxu0 0.0
    %3761 = vmatprep.subr.mxu0 0.0
    %3762 = vmatpush1.msra.mxu0 0.0
    %3763 = vmatprep.subr.mxu0 0.0
    %3764 = vmatpush1.msra.mxu0 0.0
    %3765 = vmatprep.subr.mxu0 0.0
    %3766 = vmatpush1.msra.mxu0 0.0
    %3767 = vmatprep.subr.mxu0 0.0
    %3768 = vmatpush1.msra.mxu0 0.0
    %3769 = vmatprep.subr.mxu0 0.0
    %3770 = vmatpush1.msra.mxu0 0.0
    %3771 = vmatprep.subr.mxu0 0.0
    %3772 = vmatpush1.msra.mxu0 0.0
    %3773 = vmatprep.subr.mxu0 0.0
    %3774 = vmatpush1.msra.mxu0 0.0
    %3775 = vmatprep.subr.mxu0 0.0
    %3776 = vmatpush1.msra.mxu0 0.0
    %3777 = vmatprep.subr.mxu0 0.0
    %3778 = vmatpush1.msra.mxu0 0.0
    %3779 = vmatprep.subr.mxu0 0.0
    %3780 = vmatpush1.msra.mxu0 0.0
    %3781 = vmatprep.mubr.f32.mxu0 0.0
    %3782 = vmatmul.mubr.f32.gmra.mrb[0].mxu0 %v3712
    %v3783 = vpop.f32.mrb[0].mxu0
    %v3784 = vadd.f32 0.0, %v3783
    %v3785 = vpop.f32.mrb[0].mxu0
    %3786 = vmatprep.mubr.f32.mxu0 0.0
    %3787 = vmatmul.mubr.f32.gmra.mrb[0].mxu0 %v3715
    %v3788 = vpop.f32.mrb[0].mxu0
    %v3789 = vadd.f32 0.0, %v3788
    %v3790 = vpop.f32.mrb[0].mxu0
    %3791 = vdwg.mxu0
    %v3792 = vadd.f32 %v3558, %v3784
    %v3793 = vadd.f32 %v3559, %v3789
    %s3794 = scalar_lea.vmem %s13, 1
    %v3795 = vld [vmem:[%s3794] sm:$0x1]
    %v3797 = vlaneseq
    %v3798 = vshrl.u32 %v3797, 7
    %v3799 = vsub.s32 0, %v3798
    %v3800 = vrot.slane %v3795, %v3799
    %v3802 = vadd.f32 %v3792, %v3800
    %v3803 = vadd.f32 %v3793, %v3800
    %v3804 = vld [vmem:[%s14] sm:$0x1]
    %v3805 = vld [vmem:[%s15] sm:$0x1]
    %v3806 = vsel %vm76, %v3802, 0.0
    %3807 = vadd.xlane.f32.xlu0 %v3806
    %v3808 = vpop.xlane.xlu0 %3807
    %v3809 = vsel %vm76, %v3803, 0.0
    %3810 = vadd.xlane.f32.xlu0 %v3809
    %v3811 = vpop.xlane.xlu0 %3810
    %v3812 = vmul.f32 %v3808, %v83
    %v3813 = vmul.f32 %v3811, %v83
    %v3814 = vsub.f32 %v3802, %v3812
    %v3815 = vsub.f32 %v3803, %v3813
    %v3816 = vmul.f32 %v3814, %v3814
    %v3817 = vmul.f32 %v3815, %v3815
    %v3818 = vsel %vm76, %v3816, 0.0
    %3819 = vadd.xlane.f32.xlu0 %v3818
    %v3820 = vpop.xlane.xlu0 %3819
    %v3821 = vsel %vm76, %v3817, 0.0
    %3822 = vadd.xlane.f32.xlu0 %v3821
    %v3823 = vpop.xlane.xlu0 %3822
    %v3824 = vmul.f32 %v3820, 0.032258064
    %v3825 = vmul.f32 %v3823, 0.032258064
    %v3826 = vadd.f32 %v3824, 1e-06
    %v3827 = vadd.f32 %v3825, 1e-06
    %v3828 = vrsqrt.pop %v3826
    %v3829 = vrsqrt.pop %v3827
    %v3830 = vmul.f32 %v3814, %v3828
    %v3831 = vmul.f32 %v3815, %v3829
    %v3833 = vlaneseq
    %v3834 = vshrl.u32 %v3833, 7
    %v3835 = vsub.s32 0, %v3834
    %v3836 = vrot.slane %v3804, %v3835
    %v3838 = vmul.f32 %v3836, %v3830
    %v3839 = vmul.f32 %v3836, %v3831
    %v3841 = vlaneseq
    %v3842 = vshrl.u32 %v3841, 7
    %v3843 = vsub.s32 0, %v3842
    %v3844 = vrot.slane %v3805, %v3843
    %v3846 = vadd.f32 %v3838, %v3844
    %v3847 = vadd.f32 %v3839, %v3844
    %3848 = vst.msk [vmem:[#allocation2] sm:$0xff] %vm76, %v3846
    %3849 = vst.msk [vmem:[#allocation2 + $0x8] sm:$0xff] %vm76, %v3847
    // Predicated region
    $region66: #{encoder_forward.1} parent=1 // pred_check
      _
    $region67: #{encoder_forward.1} parent=1 // pred_check_branch
      %3851 = sbr.rel (0) target = $region69
    $region68: #{encoder_forward.1} parent=1 // pred_region
      %s3853 = ssub.s32 256, 256
      %3854 = vsyncadd [#allocation3], %s3853
      %s3855 = sshll.u32 [#allocation2], 4
      %s3856 = int_to_ptr.vmem [resolvable:$true] %s3855
      %3861 = dma.vmem_to_hbm [thread:$0]  %s3856, 256, %s16, [#allocation3], 128, 128, 8
    $region69: #{encoder_forward.1} parent=1 // pred_fallthru
      _
    // Predicated region
    $region70: #{encoder_forward.1} parent=1 // pred_check
      _
    $region71: #{encoder_forward.1} parent=1 // pred_check_branch
      %3863 = sbr.rel (0) target = $region73
    $region72: #{encoder_forward.1} parent=1 // pred_region
      %3864 = dma.done [#allocation3], 256
    $region73: #{encoder_forward.1} parent=1 // pred_fallthru
      _
    %3865 = vsyncpa [#allocation3], 1

</llo_original>
